<compile_context>
chip_gen: v7x
topology: tpu7x:2x2x1
jax: 0.10.0
libtpu: 0.0.40
codegen_flags: <defaults>
</compile_context>

<pallas_src>
import functools

import jax
import jax.numpy as jnp
from jax import lax
from jax.experimental import pallas as pl
from jax.experimental.pallas import tpu as pltpu


def make_divisible(v, divisor, min_val=None):
    if min_val is None:
        min_val = divisor
    new_v = max(min_val, int(v + divisor / 2) // divisor * divisor)
    if new_v < 0.9 * v:
        new_v += divisor
    return new_v


# ---------------- fused Pallas kernel ----------------

def _slice_hw(a, h0, w0, Ho, Wo, stride, C):
    """Spatial window [h0::stride, w0::stride][:Ho, :Wo] of an (H', W', C) array."""
    if stride == 1:
        return lax.slice(a, (h0, w0, 0), (h0 + Ho, w0 + Wo, C))
    # TODO(synk): strided VMEM slice path is untested on HW (test configs use stride=1).
    return lax.slice(a, (h0, w0, 0),
                     (h0 + (Ho - 1) * stride + 1, w0 + (Wo - 1) * stride + 1, C),
                     (stride, stride, 1))


def _fused_block_kernel(x_ref, w1_ref, s1_ref, b1_ref,
                        wg_ref, sg_ref, bg_ref,
                        w2_ref, s2_ref, b2_ref,
                        *rest,
                        K, stride, H, W, Ho, Wo, use_se, has_sc_conv):
    i = 0
    if use_se:
        wr_ref, br_ref, we_ref, be_ref = rest[i:i + 4]
        i += 4
    if has_sc_conv:
        ws_ref, ss_ref, bs_ref = rest[i:i + 3]
        i += 3
    o_ref = rest[i]

    f32, bf16 = jnp.float32, jnp.bfloat16
    p = K // 2
    _, Hp, Wp, Cin = x_ref.shape
    Cmid = w1_ref.shape[-1]
    Cout = w2_ref.shape[-1]

    # ---------- stage 1: 1x1 conv + folded BN + ReLU (bf16 MXU, f32 epilogue) ----------
    xb = x_ref[0]                               # [Hp, Wp, Cin]  bf16 (pre-padded halo)
    xf = xb.astype(f32)                         # spatial slicing/reshaping kept in f32
    x2 = xf.reshape(Hp * Wp, Cin)
    h2 = jnp.dot(x2.astype(bf16), w1_ref[...], preferred_element_type=f32)
    h2 = jnp.maximum(h2 * s1_ref[...] + b1_ref[...], 0.0)      # [Hp*Wp, Cmid] f32
    h3 = h2.reshape(Hp, Wp, Cmid)

    # Zero the halo ring in-kernel so the grouped conv sees true zero padding
    # (padded input pixels are zero, but BN's folded bias would otherwise
    #  leak relu(b1) into the halo).
    ri = lax.broadcasted_iota(jnp.int32, (Hp, Wp, Cmid), 0)
    ci = lax.broadcasted_iota(jnp.int32, (Hp, Wp, Cmid), 1)
    interior = (ri >= p) & (ri < p + H) & (ci >= p) & (ci < p + W)
    h3 = jnp.where(interior, h3, 0.0)

    # ---------- stage 2: grouped KxK conv (dense block-diagonal weight) + BN + ReLU ----------
    # K*K shifted bf16 matmuls accumulated in f32; BN scale/bias applied once after the loop.
    acc = jnp.zeros((Ho * Wo, Cmid), f32)
    for kh in range(K):
        for kw in range(K):
            patch = _slice_hw(h3, kh, kw, Ho, Wo, stride, Cmid)     # [Ho, Wo, Cmid]
            acc = acc + jnp.dot(patch.reshape(Ho * Wo, Cmid).astype(bf16),
                                wg_ref[kh * K + kw],
                                preferred_element_type=f32)
    g = jnp.maximum(acc * sg_ref[...] + bg_ref[...], 0.0)       # [Ho*Wo, Cmid] f32

    # ---------- optional SE: global avg pool -> FC reduce -> ReLU -> FC expand -> sigmoid ----------
    if use_se:
        pooled = jnp.mean(g, axis=0, keepdims=True)             # [1, Cmid] f32
        z = jnp.dot(pooled.astype(bf16), wr_ref[...],
                    preferred_element_type=f32) + br_ref[...]
        z = jnp.maximum(z, 0.0)
        z = jnp.dot(z.astype(bf16), we_ref[...],
                    preferred_element_type=f32) + be_ref[...]
        g = g * jax.nn.sigmoid(z)                               # broadcast gate

    # ---------- stage 3: 1x1 conv + BN, shortcut, add, ReLU ----------
    y = jnp.dot(g.astype(bf16), w2_ref[...], preferred_element_type=f32)
    y = y * s2_ref[...] + b2_ref[...]                           # [Ho*Wo, Cout] f32

    idn = _slice_hw(xf, p, p, Ho, Wo, stride, Cin)              # [Ho, Wo, Cin] f32
    idn2 = idn.reshape(Ho * Wo, Cin)
    if has_sc_conv:
        sc = jnp.dot(idn2.astype(bf16), ws_ref[...], preferred_element_type=f32)
        sc = sc * ss_ref[...] + bs_ref[...]
    else:
        sc = idn2

    out = jnp.maximum(y + sc, 0.0)
    o_ref[0] = out.reshape(Ho, Wo, Cout).astype(o_ref.dtype)


# ---------------- wrapper (glue) ----------------

def reg_bottleneck_block_forward(x_nchw, P, cfg):
    N, Cin, H, W = x_nchw.shape
    K, stride = cfg['kernel_size'], cfg['stride']
    Cmid, Cout = cfg['middle_channel'], cfg['out_channel']
    use_se, has_sc = cfg['use_se'], cfg['has_sc_conv']
    p = K // 2
    Ho = (H + 2 * p - K) // stride + 1
    Wo = (W + 2 * p - K) // stride + 1
    Hp = H + 2 * p
    Wp = ((W + 2 * p + 7) // 8) * 8     # round halo'd W up to a sublane multiple

    # Single fused XLA relayout of the input: NCHW->NHWC transpose + bf16 downcast
    # + halo pad (no separate pad round-trip of the mid activation).
    x_nhwc = jnp.transpose(x_nchw, (0, 2, 3, 1)).astype(jnp.bfloat16)
    x_pad = jnp.pad(x_nhwc, ((0, 0), (p, p), (p, Wp - W - p), (0, 0)))

    wg_flat = P['wg_dense'].reshape(K * K, Cmid, Cmid)          # bf16 [K*K, Cmid, Cmid]

    def inv2(shape):        # grid-invariant 2-D operand (weights / folded BN)
        return pl.BlockSpec(shape, lambda n: (0, 0))

    in_specs = [
        pl.BlockSpec((1, Hp, Wp, Cin), lambda n: (n, 0, 0, 0)),
        inv2((Cin, Cmid)), inv2((1, Cmid)), inv2((1, Cmid)),
        pl.BlockSpec((K * K, Cmid, Cmid), lambda n: (0, 0, 0)),
        inv2((1, Cmid)), inv2((1, Cmid)),
        inv2((Cmid, Cout)), inv2((1, Cout)), inv2((1, Cout)),
    ]
    args = [x_pad, P['w1'], P['s1'], P['b1'], wg_flat, P['sg'], P['bg'],
            P['w2'], P['s2'], P['b2']]
    if use_se:
        w_red, b_red, w_exp, b_exp = P['se']
        nm = w_red.shape[1]
        in_specs += [inv2((Cmid, nm)), inv2((1, nm)), inv2((nm, Cmid)), inv2((1, Cmid))]
        args += [w_red, b_red, w_exp, b_exp]
    if has_sc:
        ws, ss, bs = P['sc']
        in_specs += [inv2((Cin, Cout)), inv2((1, Cout)), inv2((1, Cout))]
        args += [ws, ss, bs]

    out = pl.pallas_call(
        functools.partial(_fused_block_kernel, K=K, stride=stride, H=H, W=W,
                          Ho=Ho, Wo=Wo, use_se=use_se, has_sc_conv=has_sc),
        out_shape=jax.ShapeDtypeStruct((N, Ho, Wo, Cout), jnp.float32),
        grid_spec=pltpu.PrefetchScalarGridSpec(
            num_scalar_prefetch=0,
            grid=(N,),
            in_specs=in_specs,
            out_specs=pl.BlockSpec((1, Ho, Wo, Cout), lambda n: (n, 0, 0, 0)),
        ),
        # For large-C configs also set vmem_limit_bytes and single-buffer the
        # grid-invariant weight specs (pipeline_mode=pl.Buffered(1)); at these
        # widths the default scoped VMEM is ample.
        compiler_params=pltpu.CompilerParams(dimension_semantics=("parallel",)),
    )(*args)
    return jnp.transpose(out, (0, 3, 1, 2))     # back to NCHW


# ---------------- deterministic parameter construction ----------------

def _fold_bn(gamma, beta, mean, var, eps=1e-5):
    scale = gamma / jnp.sqrt(var + eps)
    bias = beta - mean * scale
    return scale[None, :].astype(jnp.float32), bias[None, :].astype(jnp.float32)


def _make_bn(key, C):
    k = jax.random.split(key, 4)
    gamma = jax.random.uniform(k[0], (C,), minval=0.5, maxval=1.5)
    beta = jax.random.normal(k[1], (C,)) * 0.1
    mean = jax.random.normal(k[2], (C,)) * 0.1
    var = jax.random.uniform(k[3], (C,), minval=0.5, maxval=1.5)
    return _fold_bn(gamma, beta, mean, var)


def make_config(in_channel, out_channel, kernel_size=3, expand_ratio=0.25,
                group_width=1, stride=1, use_se=False, expand_input=False, divisor=8):
    if expand_input:
        middle = make_divisible(in_channel * expand_ratio, divisor)
    else:
        middle = make_divisible(out_channel * expand_ratio, divisor)
    return dict(in_channel=in_channel, out_channel=out_channel,
                kernel_size=kernel_size, group_width=group_width, stride=stride,
                use_se=use_se, middle_channel=middle, groups=middle // group_width,
                has_sc_conv=not (in_channel == out_channel and stride == 1))


def make_params(key, cfg):
    bf16 = jnp.bfloat16
    Cin, Cout, Cmid = cfg['in_channel'], cfg['out_channel'], cfg['middle_channel']
    K, gw = cfg['kernel_size'], cfg['group_width']
    groups = cfg['groups']
    ks = jax.random.split(key, 12)
    P = {}
    P['w1'] = (jax.random.normal(ks[0], (Cin, Cmid)) * 0.2).astype(bf16)
    P['s1'], P['b1'] = _make_bn(ks[1], Cmid)
    # grouped conv weight in PyTorch layout [Cmid, gw, K, K] (kept f32 for the reference)
    wg = jax.random.normal(ks[2], (Cmid, gw, K, K)) * 0.2
    P['wg_torch'] = wg
    # dense block-diagonal equivalent in HWIO [K, K, Cmid, Cmid], stored bf16
    wd = jnp.zeros((K, K, Cmid, Cmid), jnp.float32)
    for g in range(groups):
        blk = wg[g * gw:(g + 1) * gw]                        # [gw(out), gw(in), K, K]
        wd = wd.at[:, :, g * gw:(g + 1) * gw, g * gw:(g + 1) * gw].set(
            jnp.transpose(blk, (2, 3, 1, 0)))
    P['wg_dense'] = wd.astype(bf16)
    P['sg'], P['bg'] = _make_bn(ks[3], Cmid)
    if cfg['use_se']:
        nm = make_divisible(Cmid // 4, 8)
        P['se'] = ((jax.random.normal(ks[4], (Cmid, nm)) * 0.2).astype(bf16),
                   (jax.random.normal(ks[5], (nm,)) * 0.1)[None, :].astype(jnp.float32),
                   (jax.random.normal(ks[6], (nm, Cmid)) * 0.2).astype(bf16),
                   (jax.random.normal(ks[7], (Cmid,)) * 0.1)[None, :].astype(jnp.float32))
    P['w2'] = (jax.random.normal(ks[8], (Cmid, Cout)) * 0.2).astype(bf16)
    P['s2'], P['b2'] = _make_bn(ks[9], Cout)
    if cfg['has_sc_conv']:
        ws = (jax.random.normal(ks[10], (Cin, Cout)) * 0.2).astype(bf16)
        ss, bs = _make_bn(ks[11], Cout)
        P['sc'] = (ws, ss, bs)
    return P


# ---------------- pure-JAX reference (same bf16-at-the-matmul precision) ----------------

def reference_forward(x_nchw, P, cfg):
    f32, bf16 = jnp.float32, jnp.bfloat16
    stride, K = cfg['stride'], cfg['kernel_size']
    p = K // 2
    x = jnp.transpose(x_nchw, (0, 2, 3, 1)).astype(bf16).astype(f32)
    h = jax.nn.relu(jnp.einsum('nhwc,cd->nhwd', x, P['w1'].astype(f32))
                    * P['s1'][0] + P['b1'][0])
    wg_hwio = jnp.transpose(P['wg_torch'], (2, 3, 1, 0)).astype(bf16).astype(f32)
    hq = h.astype(bf16).astype(f32)
    g = lax.conv_general_dilated(hq, wg_hwio, (stride, stride), [(p, p), (p, p)],
                                 dimension_numbers=('NHWC', 'HWIO', 'NHWC'),
                                 feature_group_count=cfg['groups'])
    g = jax.nn.relu(g * P['sg'][0] + P['bg'][0])
    if cfg['use_se']:
        w_red, b_red, w_exp, b_exp = P['se']
        pooled = jnp.mean(g, axis=(1, 2), keepdims=True)
        pq = pooled.astype(bf16).astype(f32)
        z = jax.nn.relu(jnp.einsum('nhwc,cm->nhwm', pq, w_red.astype(f32)) + b_red[0])
        zq = z.astype(bf16).astype(f32)
        z = jax.nn.sigmoid(jnp.einsum('nhwm,mc->nhwc', zq, w_exp.astype(f32)) + b_exp[0])
        g = g * z
    gq = g.astype(bf16).astype(f32)
    y = jnp.einsum('nhwc,cd->nhwd', gq, P['w2'].astype(f32)) * P['s2'][0] + P['b2'][0]
    if cfg['has_sc_conv']:
        ws, ss, bs = P['sc']
        idn = x[:, ::stride, ::stride, :]
        sc = jnp.einsum('nhwc,cd->nhwd', idn, ws.astype(f32)) * ss[0] + bs[0]
    else:
        sc = x
    return jnp.transpose(jax.nn.relu(y + sc), (0, 3, 1, 2))


if __name__ == "__main__":
    key = jax.random.PRNGKey(0)
    kx, kp1, kp2 = jax.random.split(key, 3)
    x = jax.random.normal(kx, (2, 8, 16, 16), jnp.float32)   # NCHW, like the PyTorch module

    # Tolerance sized for bf16 matmul inputs: one bf16 ulp of an O(1) activation
    # (~8e-3) propagated through the three matmul stages.
    TOL = 3e-2

    # Config 1: in == out, stride 1 -> identity shortcut, no SE
    cfg1 = make_config(8, 8, kernel_size=3, expand_ratio=0.25, group_width=4,
                       stride=1, use_se=False)
    P1 = make_params(kp1, cfg1)
    out1 = jax.block_until_ready(reg_bottleneck_block_forward(x, P1, cfg1))
    ref1 = reference_forward(x, P1, cfg1)
    assert out1.shape == (2, 8, 16, 16)
    assert jnp.allclose(out1, ref1, atol=TOL, rtol=TOL), \
        float(jnp.max(jnp.abs(out1 - ref1)))

    # Config 2: in != out -> 1x1 conv+BN shortcut, with SE (relu / sigmoid)
    cfg2 = make_config(8, 16, kernel_size=3, expand_ratio=0.5, group_width=4,
                       stride=1, use_se=True)
    P2 = make_params(kp2, cfg2)
    out2 = jax.block_until_ready(reg_bottleneck_block_forward(x, P2, cfg2))
    ref2 = reference_forward(x, P2, cfg2)
    assert out2.shape == (2, 16, 16, 16)
    assert jnp.allclose(out2, ref2, atol=TOL, rtol=TOL), \
        float(jnp.max(jnp.abs(out2 - ref2)))

    print("KERNEL_OK")
</pallas_src>

<mosaic_0001>
module attributes {stable_mosaic.version = 11 : i64} {
  func.func @_fused_block_kernel(%arg0: i32, %arg1: memref<1x18x24x8xbf16, #tpu.memory_space<vmem>>, %arg2: memref<8x8xbf16, #tpu.memory_space<vmem>>, %arg3: memref<1x8xf32, #tpu.memory_space<vmem>>, %arg4: memref<1x8xf32, #tpu.memory_space<vmem>>, %arg5: memref<9x8x8xbf16, #tpu.memory_space<vmem>>, %arg6: memref<1x8xf32, #tpu.memory_space<vmem>>, %arg7: memref<1x8xf32, #tpu.memory_space<vmem>>, %arg8: memref<8x8xbf16, #tpu.memory_space<vmem>>, %arg9: memref<1x8xf32, #tpu.memory_space<vmem>>, %arg10: memref<1x8xf32, #tpu.memory_space<vmem>>, %arg11: memref<1x16x16x8xf32, #tpu.memory_space<vmem>>) attributes {dimension_semantics = [#tpu.dimension_semantics<parallel>], iteration_bounds = array<i64: 2>, scalar_prefetch = 0 : i64, scratch_operands = 0 : i64, tpu.core_type = #tpu.core_type<tc>, window_params = [{transform_indices = @transform_0, window_bounds = array<i64: 1, 18, 24, 8>}, {pipeline_mode = #tpu.pipeline_mode<synchronous>, transform_indices = @transform_1, window_bounds = array<i64: 8, 8>}, {pipeline_mode = #tpu.pipeline_mode<synchronous>, transform_indices = @transform_2, window_bounds = array<i64: 1, 8>}, {pipeline_mode = #tpu.pipeline_mode<synchronous>, transform_indices = @transform_3, window_bounds = array<i64: 1, 8>}, {pipeline_mode = #tpu.pipeline_mode<synchronous>, transform_indices = @transform_4, window_bounds = array<i64: 9, 8, 8>}, {pipeline_mode = #tpu.pipeline_mode<synchronous>, transform_indices = @transform_5, window_bounds = array<i64: 1, 8>}, {pipeline_mode = #tpu.pipeline_mode<synchronous>, transform_indices = @transform_6, window_bounds = array<i64: 1, 8>}, {pipeline_mode = #tpu.pipeline_mode<synchronous>, transform_indices = @transform_7, window_bounds = array<i64: 8, 8>}, {pipeline_mode = #tpu.pipeline_mode<synchronous>, transform_indices = @transform_8, window_bounds = array<i64: 1, 8>}, {pipeline_mode = #tpu.pipeline_mode<synchronous>, transform_indices = @transform_9, window_bounds = array<i64: 1, 8>}, {transform_indices = @transform_10, window_bounds = array<i64: 1, 16, 16, 8>}]} {
    %c0 = arith.constant 0 : index
    %c0_0 = arith.constant 0 : index
    %c0_1 = arith.constant 0 : index
    %c0_2 = arith.constant 0 : index
    %0 = vector.load %arg1[%c0, %c0_0, %c0_1, %c0_2] : memref<1x18x24x8xbf16, #tpu.memory_space<vmem>>, vector<1x18x24x8xbf16>
    %1 = vector.shape_cast %0 : vector<1x18x24x8xbf16> to vector<18x24x8xbf16>
    %2 = arith.extf %1 : vector<18x24x8xbf16> to vector<18x24x8xf32>
    %3 = vector.shape_cast %2 : vector<18x24x8xf32> to vector<432x8xf32>
    %4 = arith.truncf %3 : vector<432x8xf32> to vector<432x8xbf16>
    %c0_3 = arith.constant 0 : index
    %c0_4 = arith.constant 0 : index
    %5 = vector.load %arg2[%c0_3, %c0_4] : memref<8x8xbf16, #tpu.memory_space<vmem>>, vector<8x8xbf16>
    %cst = arith.constant dense<0.000000e+00> : vector<432x8xf32>
    %6 = tpu.matmul %4, %5, %cst {dimension_numbers = #tpu.dot_dimension_numbers<[1], [0], [0], [1], [0, 0, 1, 1], [], []>} : vector<432x8xbf16>, vector<8x8xbf16>, vector<432x8xf32> -> vector<432x8xf32>
    %c0_5 = arith.constant 0 : index
    %c0_6 = arith.constant 0 : index
    %7 = vector.load %arg3[%c0_5, %c0_6] : memref<1x8xf32, #tpu.memory_space<vmem>>, vector<1x8xf32>
    %8 = vector.broadcast %7 : vector<1x8xf32> to vector<432x8xf32>
    %9 = arith.mulf %6, %8 : vector<432x8xf32>
    %c0_7 = arith.constant 0 : index
    %c0_8 = arith.constant 0 : index
    %10 = vector.load %arg4[%c0_7, %c0_8] : memref<1x8xf32, #tpu.memory_space<vmem>>, vector<1x8xf32>
    %11 = vector.broadcast %10 : vector<1x8xf32> to vector<432x8xf32>
    %12 = arith.addf %9, %11 : vector<432x8xf32>
    %cst_9 = arith.constant 0.000000e+00 : f32
    %13 = vector.broadcast %cst_9 : f32 to vector<432x8xf32>
    %14 = arith.maximumf %12, %13 : vector<432x8xf32>
    %15 = vector.shape_cast %14 : vector<432x8xf32> to vector<18x24x8xf32>
    %16 = tpu.iota {dimensions = array<i32: 0>} : vector<18x24x8xi32>
    %17 = tpu.iota {dimensions = array<i32: 1>} : vector<18x24x8xi32>
    %c1_i32 = arith.constant 1 : i32
    %18 = vector.broadcast %c1_i32 : i32 to vector<18x24x8xi32>
    %19 = arith.cmpi sge, %16, %18 : vector<18x24x8xi32>
    %c17_i32 = arith.constant 17 : i32
    %20 = vector.broadcast %c17_i32 : i32 to vector<18x24x8xi32>
    %21 = arith.cmpi slt, %16, %20 : vector<18x24x8xi32>
    %22 = arith.andi %19, %21 : vector<18x24x8xi1>
    %c1_i32_10 = arith.constant 1 : i32
    %23 = vector.broadcast %c1_i32_10 : i32 to vector<18x24x8xi32>
    %24 = arith.cmpi sge, %17, %23 : vector<18x24x8xi32>
    %25 = arith.andi %22, %24 : vector<18x24x8xi1>
    %c17_i32_11 = arith.constant 17 : i32
    %26 = vector.broadcast %c17_i32_11 : i32 to vector<18x24x8xi32>
    %27 = arith.cmpi slt, %17, %26 : vector<18x24x8xi32>
    %28 = arith.andi %25, %27 : vector<18x24x8xi1>
    %cst_12 = arith.constant 0.000000e+00 : f32
    %29 = vector.broadcast %cst_12 : f32 to vector<18x24x8xf32>
    %30 = arith.select %28, %15, %29 : vector<18x24x8xi1>, vector<18x24x8xf32>
    %cst_13 = arith.constant 0.000000e+00 : f32
    %31 = vector.broadcast %cst_13 : f32 to vector<256x8xf32>
    %32 = vector.extract_strided_slice %30 {offsets = [0, 0, 0], sizes = [16, 16, 8], strides = [1, 1, 1]} : vector<18x24x8xf32> to vector<16x16x8xf32>
    %33 = vector.shape_cast %32 : vector<16x16x8xf32> to vector<256x8xf32>
    %34 = arith.truncf %33 : vector<256x8xf32> to vector<256x8xbf16>
    %c0_14 = arith.constant 0 : index
    %c0_15 = arith.constant 0 : index
    %c0_16 = arith.constant 0 : index
    %35 = vector.load %arg5[%c0_14, %c0_15, %c0_16] : memref<9x8x8xbf16, #tpu.memory_space<vmem>>, vector<1x8x8xbf16>
    %36 = vector.shape_cast %35 : vector<1x8x8xbf16> to vector<8x8xbf16>
    %cst_17 = arith.constant dense<0.000000e+00> : vector<256x8xf32>
    %37 = tpu.matmul %34, %36, %cst_17 {dimension_numbers = #tpu.dot_dimension_numbers<[1], [0], [0], [1], [0, 0, 1, 1], [], []>} : vector<256x8xbf16>, vector<8x8xbf16>, vector<256x8xf32> -> vector<256x8xf32>
    %38 = arith.addf %31, %37 : vector<256x8xf32>
    %39 = vector.extract_strided_slice %30 {offsets = [0, 1, 0], sizes = [16, 16, 8], strides = [1, 1, 1]} : vector<18x24x8xf32> to vector<16x16x8xf32>
    %40 = vector.shape_cast %39 : vector<16x16x8xf32> to vector<256x8xf32>
    %41 = arith.truncf %40 : vector<256x8xf32> to vector<256x8xbf16>
    %c1 = arith.constant 1 : index
    %c0_18 = arith.constant 0 : index
    %c0_19 = arith.constant 0 : index
    %42 = vector.load %arg5[%c1, %c0_18, %c0_19] : memref<9x8x8xbf16, #tpu.memory_space<vmem>>, vector<1x8x8xbf16>
    %43 = vector.shape_cast %42 : vector<1x8x8xbf16> to vector<8x8xbf16>
    %cst_20 = arith.constant dense<0.000000e+00> : vector<256x8xf32>
    %44 = tpu.matmul %41, %43, %cst_20 {dimension_numbers = #tpu.dot_dimension_numbers<[1], [0], [0], [1], [0, 0, 1, 1], [], []>} : vector<256x8xbf16>, vector<8x8xbf16>, vector<256x8xf32> -> vector<256x8xf32>
    %45 = arith.addf %38, %44 : vector<256x8xf32>
    %46 = vector.extract_strided_slice %30 {offsets = [0, 2, 0], sizes = [16, 16, 8], strides = [1, 1, 1]} : vector<18x24x8xf32> to vector<16x16x8xf32>
    %47 = vector.shape_cast %46 : vector<16x16x8xf32> to vector<256x8xf32>
    %48 = arith.truncf %47 : vector<256x8xf32> to vector<256x8xbf16>
    %c2 = arith.constant 2 : index
    %c0_21 = arith.constant 0 : index
    %c0_22 = arith.constant 0 : index
    %49 = vector.load %arg5[%c2, %c0_21, %c0_22] : memref<9x8x8xbf16, #tpu.memory_space<vmem>>, vector<1x8x8xbf16>
    %50 = vector.shape_cast %49 : vector<1x8x8xbf16> to vector<8x8xbf16>
    %cst_23 = arith.constant dense<0.000000e+00> : vector<256x8xf32>
    %51 = tpu.matmul %48, %50, %cst_23 {dimension_numbers = #tpu.dot_dimension_numbers<[1], [0], [0], [1], [0, 0, 1, 1], [], []>} : vector<256x8xbf16>, vector<8x8xbf16>, vector<256x8xf32> -> vector<256x8xf32>
    %52 = arith.addf %45, %51 : vector<256x8xf32>
    %53 = vector.extract_strided_slice %30 {offsets = [1, 0, 0], sizes = [16, 16, 8], strides = [1, 1, 1]} : vector<18x24x8xf32> to vector<16x16x8xf32>
    %54 = vector.shape_cast %53 : vector<16x16x8xf32> to vector<256x8xf32>
    %55 = arith.truncf %54 : vector<256x8xf32> to vector<256x8xbf16>
    %c3 = arith.constant 3 : index
    %c0_24 = arith.constant 0 : index
    %c0_25 = arith.constant 0 : index
    %56 = vector.load %arg5[%c3, %c0_24, %c0_25] : memref<9x8x8xbf16, #tpu.memory_space<vmem>>, vector<1x8x8xbf16>
    %57 = vector.shape_cast %56 : vector<1x8x8xbf16> to vector<8x8xbf16>
    %cst_26 = arith.constant dense<0.000000e+00> : vector<256x8xf32>
    %58 = tpu.matmul %55, %57, %cst_26 {dimension_numbers = #tpu.dot_dimension_numbers<[1], [0], [0], [1], [0, 0, 1, 1], [], []>} : vector<256x8xbf16>, vector<8x8xbf16>, vector<256x8xf32> -> vector<256x8xf32>
    %59 = arith.addf %52, %58 : vector<256x8xf32>
    %60 = vector.extract_strided_slice %30 {offsets = [1, 1, 0], sizes = [16, 16, 8], strides = [1, 1, 1]} : vector<18x24x8xf32> to vector<16x16x8xf32>
    %61 = vector.shape_cast %60 : vector<16x16x8xf32> to vector<256x8xf32>
    %62 = arith.truncf %61 : vector<256x8xf32> to vector<256x8xbf16>
    %c4 = arith.constant 4 : index
    %c0_27 = arith.constant 0 : index
    %c0_28 = arith.constant 0 : index
    %63 = vector.load %arg5[%c4, %c0_27, %c0_28] : memref<9x8x8xbf16, #tpu.memory_space<vmem>>, vector<1x8x8xbf16>
    %64 = vector.shape_cast %63 : vector<1x8x8xbf16> to vector<8x8xbf16>
    %cst_29 = arith.constant dense<0.000000e+00> : vector<256x8xf32>
    %65 = tpu.matmul %62, %64, %cst_29 {dimension_numbers = #tpu.dot_dimension_numbers<[1], [0], [0], [1], [0, 0, 1, 1], [], []>} : vector<256x8xbf16>, vector<8x8xbf16>, vector<256x8xf32> -> vector<256x8xf32>
    %66 = arith.addf %59, %65 : vector<256x8xf32>
    %67 = vector.extract_strided_slice %30 {offsets = [1, 2, 0], sizes = [16, 16, 8], strides = [1, 1, 1]} : vector<18x24x8xf32> to vector<16x16x8xf32>
    %68 = vector.shape_cast %67 : vector<16x16x8xf32> to vector<256x8xf32>
    %69 = arith.truncf %68 : vector<256x8xf32> to vector<256x8xbf16>
    %c5 = arith.constant 5 : index
    %c0_30 = arith.constant 0 : index
    %c0_31 = arith.constant 0 : index
    %70 = vector.load %arg5[%c5, %c0_30, %c0_31] : memref<9x8x8xbf16, #tpu.memory_space<vmem>>, vector<1x8x8xbf16>
    %71 = vector.shape_cast %70 : vector<1x8x8xbf16> to vector<8x8xbf16>
    %cst_32 = arith.constant dense<0.000000e+00> : vector<256x8xf32>
    %72 = tpu.matmul %69, %71, %cst_32 {dimension_numbers = #tpu.dot_dimension_numbers<[1], [0], [0], [1], [0, 0, 1, 1], [], []>} : vector<256x8xbf16>, vector<8x8xbf16>, vector<256x8xf32> -> vector<256x8xf32>
    %73 = arith.addf %66, %72 : vector<256x8xf32>
    %74 = vector.extract_strided_slice %30 {offsets = [2, 0, 0], sizes = [16, 16, 8], strides = [1, 1, 1]} : vector<18x24x8xf32> to vector<16x16x8xf32>
    %75 = vector.shape_cast %74 : vector<16x16x8xf32> to vector<256x8xf32>
    %76 = arith.truncf %75 : vector<256x8xf32> to vector<256x8xbf16>
    %c6 = arith.constant 6 : index
    %c0_33 = arith.constant 0 : index
    %c0_34 = arith.constant 0 : index
    %77 = vector.load %arg5[%c6, %c0_33, %c0_34] : memref<9x8x8xbf16, #tpu.memory_space<vmem>>, vector<1x8x8xbf16>
    %78 = vector.shape_cast %77 : vector<1x8x8xbf16> to vector<8x8xbf16>
    %cst_35 = arith.constant dense<0.000000e+00> : vector<256x8xf32>
    %79 = tpu.matmul %76, %78, %cst_35 {dimension_numbers = #tpu.dot_dimension_numbers<[1], [0], [0], [1], [0, 0, 1, 1], [], []>} : vector<256x8xbf16>, vector<8x8xbf16>, vector<256x8xf32> -> vector<256x8xf32>
    %80 = arith.addf %73, %79 : vector<256x8xf32>
    %81 = vector.extract_strided_slice %30 {offsets = [2, 1, 0], sizes = [16, 16, 8], strides = [1, 1, 1]} : vector<18x24x8xf32> to vector<16x16x8xf32>
    %82 = vector.shape_cast %81 : vector<16x16x8xf32> to vector<256x8xf32>
    %83 = arith.truncf %82 : vector<256x8xf32> to vector<256x8xbf16>
    %c7 = arith.constant 7 : index
    %c0_36 = arith.constant 0 : index
    %c0_37 = arith.constant 0 : index
    %84 = vector.load %arg5[%c7, %c0_36, %c0_37] : memref<9x8x8xbf16, #tpu.memory_space<vmem>>, vector<1x8x8xbf16>
    %85 = vector.shape_cast %84 : vector<1x8x8xbf16> to vector<8x8xbf16>
    %cst_38 = arith.constant dense<0.000000e+00> : vector<256x8xf32>
    %86 = tpu.matmul %83, %85, %cst_38 {dimension_numbers = #tpu.dot_dimension_numbers<[1], [0], [0], [1], [0, 0, 1, 1], [], []>} : vector<256x8xbf16>, vector<8x8xbf16>, vector<256x8xf32> -> vector<256x8xf32>
    %87 = arith.addf %80, %86 : vector<256x8xf32>
    %88 = vector.extract_strided_slice %30 {offsets = [2, 2, 0], sizes = [16, 16, 8], strides = [1, 1, 1]} : vector<18x24x8xf32> to vector<16x16x8xf32>
    %89 = vector.shape_cast %88 : vector<16x16x8xf32> to vector<256x8xf32>
    %90 = arith.truncf %89 : vector<256x8xf32> to vector<256x8xbf16>
    %c8 = arith.constant 8 : index
    %c0_39 = arith.constant 0 : index
    %c0_40 = arith.constant 0 : index
    %91 = vector.load %arg5[%c8, %c0_39, %c0_40] : memref<9x8x8xbf16, #tpu.memory_space<vmem>>, vector<1x8x8xbf16>
    %92 = vector.shape_cast %91 : vector<1x8x8xbf16> to vector<8x8xbf16>
    %cst_41 = arith.constant dense<0.000000e+00> : vector<256x8xf32>
    %93 = tpu.matmul %90, %92, %cst_41 {dimension_numbers = #tpu.dot_dimension_numbers<[1], [0], [0], [1], [0, 0, 1, 1], [], []>} : vector<256x8xbf16>, vector<8x8xbf16>, vector<256x8xf32> -> vector<256x8xf32>
    %94 = arith.addf %87, %93 : vector<256x8xf32>
    %c0_42 = arith.constant 0 : index
    %c0_43 = arith.constant 0 : index
    %95 = vector.load %arg6[%c0_42, %c0_43] : memref<1x8xf32, #tpu.memory_space<vmem>>, vector<1x8xf32>
    %96 = vector.broadcast %95 : vector<1x8xf32> to vector<256x8xf32>
    %97 = arith.mulf %94, %96 : vector<256x8xf32>
    %c0_44 = arith.constant 0 : index
    %c0_45 = arith.constant 0 : index
    %98 = vector.load %arg7[%c0_44, %c0_45] : memref<1x8xf32, #tpu.memory_space<vmem>>, vector<1x8xf32>
    %99 = vector.broadcast %98 : vector<1x8xf32> to vector<256x8xf32>
    %100 = arith.addf %97, %99 : vector<256x8xf32>
    %cst_46 = arith.constant 0.000000e+00 : f32
    %101 = vector.broadcast %cst_46 : f32 to vector<256x8xf32>
    %102 = arith.maximumf %100, %101 : vector<256x8xf32>
    %103 = arith.truncf %102 : vector<256x8xf32> to vector<256x8xbf16>
    %c0_47 = arith.constant 0 : index
    %c0_48 = arith.constant 0 : index
    %104 = vector.load %arg8[%c0_47, %c0_48] : memref<8x8xbf16, #tpu.memory_space<vmem>>, vector<8x8xbf16>
    %cst_49 = arith.constant dense<0.000000e+00> : vector<256x8xf32>
    %105 = tpu.matmul %103, %104, %cst_49 {dimension_numbers = #tpu.dot_dimension_numbers<[1], [0], [0], [1], [0, 0, 1, 1], [], []>} : vector<256x8xbf16>, vector<8x8xbf16>, vector<256x8xf32> -> vector<256x8xf32>
    %c0_50 = arith.constant 0 : index
    %c0_51 = arith.constant 0 : index
    %106 = vector.load %arg9[%c0_50, %c0_51] : memref<1x8xf32, #tpu.memory_space<vmem>>, vector<1x8xf32>
    %107 = vector.broadcast %106 : vector<1x8xf32> to vector<256x8xf32>
    %108 = arith.mulf %105, %107 : vector<256x8xf32>
    %c0_52 = arith.constant 0 : index
    %c0_53 = arith.constant 0 : index
    %109 = vector.load %arg10[%c0_52, %c0_53] : memref<1x8xf32, #tpu.memory_space<vmem>>, vector<1x8xf32>
    %110 = vector.broadcast %109 : vector<1x8xf32> to vector<256x8xf32>
    %111 = arith.addf %108, %110 : vector<256x8xf32>
    %112 = vector.extract_strided_slice %2 {offsets = [1, 1, 0], sizes = [16, 16, 8], strides = [1, 1, 1]} : vector<18x24x8xf32> to vector<16x16x8xf32>
    %113 = vector.shape_cast %112 : vector<16x16x8xf32> to vector<256x8xf32>
    %114 = arith.addf %111, %113 : vector<256x8xf32>
    %cst_54 = arith.constant 0.000000e+00 : f32
    %115 = vector.broadcast %cst_54 : f32 to vector<256x8xf32>
    %116 = arith.maximumf %114, %115 : vector<256x8xf32>
    %117 = vector.shape_cast %116 : vector<256x8xf32> to vector<16x16x8xf32>
    %c0_55 = arith.constant 0 : index
    %c0_56 = arith.constant 0 : index
    %c0_57 = arith.constant 0 : index
    %c0_58 = arith.constant 0 : index
    %118 = vector.load %arg11[%c0_55, %c0_56, %c0_57, %c0_58] : memref<1x16x16x8xf32, #tpu.memory_space<vmem>>, vector<1x16x16x8xf32>
    %119 = vector.shape_cast %118 : vector<1x16x16x8xf32> to vector<16x16x8xf32>
    %120 = vector.shape_cast %117 : vector<16x16x8xf32> to vector<1x16x16x8xf32>
    tpu.vector_store %arg11[%c0_55, %c0_56, %c0_57, %c0_58], %120 {strides = array<i32>} : memref<1x16x16x8xf32, #tpu.memory_space<vmem>>, vector<1x16x16x8xf32>,
    return
  }
  func.func @transform_0(%arg0: i32) -> (i32, i32, i32, i32) {
    %c0_i32 = arith.constant 0 : i32
    %c0_i32_0 = arith.constant 0 : i32
    %c0_i32_1 = arith.constant 0 : i32
    %c0_i32_2 = arith.constant 0 : i32
    return %arg0, %c0_i32, %c0_i32_0, %c0_i32_1 : i32, i32, i32, i32
  }
  func.func @transform_1(%arg0: i32) -> (i32, i32) {
    %c0_i32 = arith.constant 0 : i32
    %c0_i32_0 = arith.constant 0 : i32
    %c0_i32_1 = arith.constant 0 : i32
    return %c0_i32, %c0_i32_0 : i32, i32
  }
  func.func @transform_2(%arg0: i32) -> (i32, i32) {
    %c0_i32 = arith.constant 0 : i32
    %c0_i32_0 = arith.constant 0 : i32
    %c0_i32_1 = arith.constant 0 : i32
    return %c0_i32, %c0_i32_0 : i32, i32
  }
  func.func @transform_3(%arg0: i32) -> (i32, i32) {
    %c0_i32 = arith.constant 0 : i32
    %c0_i32_0 = arith.constant 0 : i32
    %c0_i32_1 = arith.constant 0 : i32
    return %c0_i32, %c0_i32_0 : i32, i32
  }
  func.func @transform_4(%arg0: i32) -> (i32, i32, i32) {
    %c0_i32 = arith.constant 0 : i32
    %c0_i32_0 = arith.constant 0 : i32
    %c0_i32_1 = arith.constant 0 : i32
    %c0_i32_2 = arith.constant 0 : i32
    return %c0_i32, %c0_i32_0, %c0_i32_1 : i32, i32, i32
  }
  func.func @transform_5(%arg0: i32) -> (i32, i32) {
    %c0_i32 = arith.constant 0 : i32
    %c0_i32_0 = arith.constant 0 : i32
    %c0_i32_1 = arith.constant 0 : i32
    return %c0_i32, %c0_i32_0 : i32, i32
  }
  func.func @transform_6(%arg0: i32) -> (i32, i32) {
    %c0_i32 = arith.constant 0 : i32
    %c0_i32_0 = arith.constant 0 : i32
    %c0_i32_1 = arith.constant 0 : i32
    return %c0_i32, %c0_i32_0 : i32, i32
  }
  func.func @transform_7(%arg0: i32) -> (i32, i32) {
    %c0_i32 = arith.constant 0 : i32
    %c0_i32_0 = arith.constant 0 : i32
    %c0_i32_1 = arith.constant 0 : i32
    return %c0_i32, %c0_i32_0 : i32, i32
  }
  func.func @transform_8(%arg0: i32) -> (i32, i32) {
    %c0_i32 = arith.constant 0 : i32
    %c0_i32_0 = arith.constant 0 : i32
    %c0_i32_1 = arith.constant 0 : i32
    return %c0_i32, %c0_i32_0 : i32, i32
  }
  func.func @transform_9(%arg0: i32) -> (i32, i32) {
    %c0_i32 = arith.constant 0 : i32
    %c0_i32_0 = arith.constant 0 : i32
    %c0_i32_1 = arith.constant 0 : i32
    return %c0_i32, %c0_i32_0 : i32, i32
  }
  func.func @transform_10(%arg0: i32) -> (i32, i32, i32, i32) {
    %c0_i32 = arith.constant 0 : i32
    %c0_i32_0 = arith.constant 0 : i32
    %c0_i32_1 = arith.constant 0 : i32
    %c0_i32_2 = arith.constant 0 : i32
    return %arg0, %c0_i32, %c0_i32_0, %c0_i32_1 : i32, i32, i32, i32
  }
}

</mosaic_0001>

<llo_original>
// kernel: tpu_custom_call.1
$region0: #{tpu_custom_call.1}
  #allocation0 [shape = 'u32[]', space=smem, size = 0x4, offset = 0x4, fixed_abs, tag = 'smem constant byte address 0x4 - core index']
  #allocation1 [shape = 'u32[144,128]{1,0:T(1,128)}', space=vmem, size = 0x12000, scoped, tag = 'internal scratch']
  %s0 = inlined_call_operand.vmem [shape: bf16[2,18,24,8], index: 0, kind: input, shape index: {}]
  %s1 = inlined_call_operand.vmem [shape: bf16[8,8], index: 1, kind: input, shape index: {}]
  %s2 = inlined_call_operand.vmem [shape: f32[1,8], index: 2, kind: input, shape index: {}]
  %s3 = inlined_call_operand.vmem [shape: f32[1,8], index: 3, kind: input, shape index: {}]
  %s4 = inlined_call_operand.vmem [shape: bf16[9,8,8], index: 4, kind: input, shape index: {}]
  %s5 = inlined_call_operand.vmem [shape: f32[1,8], index: 5, kind: input, shape index: {}]
  %s6 = inlined_call_operand.vmem [shape: f32[1,8], index: 6, kind: input, shape index: {}]
  %s7 = inlined_call_operand.vmem [shape: bf16[8,8], index: 7, kind: input, shape index: {}]
  %s8 = inlined_call_operand.vmem [shape: f32[1,8], index: 8, kind: input, shape index: {}]
  %s9 = inlined_call_operand.vmem [shape: f32[1,8], index: 9, kind: input, shape index: {}]
  %s10 = inlined_call_operand.vmem [shape: f32[2,16,16,8], index: 10, kind: output, shape index: {}]
  %s11 = sld [smem:[#allocation0]]
  $region73: #{tpu_custom_call.1} parent=0
    _
  %s13 = ssub.s32 1, %s11
  %s14 = scalar_select 0, %s13, %s11
  loop: start=0, step=1, limit=4
  $region2: #{tpu_custom_call.1} parent=0 // loop_pre_header
    _
  $region3: #{tpu_custom_call.1} parent=0 // loop_header
    %s16 = sphi 0, %s20
    %p17 = scmp.ge.s32.totalorder %s16, 4
    %s26 = sphi 0, %s28
    %s29 = sphi 0, %s26
    %s30 = sphi 0, %s29
    %s46 = sphi 0, %s30
    %s50 = sphi 0, %s50
    %s52 = sphi 0, %s50
    %s53 = sphi 0, %s52
    %s67 = sphi 0, %s53
    %s71 = sphi 0, %s71
    %s73 = sphi 0, %s71
    %s74 = sphi 0, %s73
    %s88 = sphi 0, %s74
    %s92 = sphi 0, %s92
    %s94 = sphi 0, %s92
    %s95 = sphi 0, %s94
    %s109 = sphi 0, %s95
    %s113 = sphi 0, %s113
    %s115 = sphi 0, %s113
    %s116 = sphi 0, %s115
    %s130 = sphi 0, %s116
    %s134 = sphi 0, %s134
    %s136 = sphi 0, %s134
    %s137 = sphi 0, %s136
    %s151 = sphi 0, %s137
    %s155 = sphi 0, %s155
    %s157 = sphi 0, %s155
    %s158 = sphi 0, %s157
    %s172 = sphi 0, %s158
    %s176 = sphi 0, %s176
    %s178 = sphi 0, %s176
    %s179 = sphi 0, %s178
    %s193 = sphi 0, %s179
    %s197 = sphi 0, %s197
    %s199 = sphi 0, %s197
    %s200 = sphi 0, %s199
    %s214 = sphi 0, %s200
    %s218 = sphi 0, %s218
    %s220 = sphi 0, %s218
    %s221 = sphi 0, %s220
    %s235 = sphi 0, %s221
    %s241 = sphi 0, %s243
    %s244 = sphi 0, %s241
    %s245 = sphi 0, %s244
    %s261 = sphi 0, %s245
  $region4: #{tpu_custom_call.1} parent=0 // loop_header_branch
    %19 = sbr.rel (%p17) target = $region8
  $region5: #{tpu_custom_call.1} parent=0 // loop_body
    %s21 = ssub.s32 %s16, 1
    %s22 = ssub.s32 %s16, 2
    %s23 = sadd.s32 %s16, 1
    %s24 = ssub.s32 %s16, %s23
    %p25 = scmp.eq.s32.totalorder %s24, 0
    %s27 = sadd.s32 %s26, 1
    %s28 = scalar_select %p25, %s26, %s27
    %p31 = pneg %p25
    %p32 = scmp.eq.s32.totalorder %s16, 1
    %p33 = por %p31, %p32
    %p34 = scmp.ne.s32.totalorder %s26, %s29
    %p35 = scmp.eq.s32.totalorder %s16, 0
    %p36 = por %p34, %p35
    %p37 = scmp.ne.s32.totalorder %s26, %s29
    %p38 = scmp.eq.s32.totalorder %s21, 1
    %p39 = por %p37, %p38
    %p40 = scmp.ne.s32.totalorder %s29, %s30
    %p41 = scmp.eq.s32.totalorder %s21, 0
    %p42 = por %p40, %p41
    %p43 = scmp.ne.s32.totalorder %s29, %s30
    %p44 = scmp.eq.s32.totalorder %s22, 1
    %p45 = por %p43, %p44
    %p47 = scmp.ne.s32.totalorder %s30, %s46
    %p48 = scmp.eq.s32.totalorder %s22, 0
    %p49 = por %p47, %p48
    %s51 = sadd.s32 %s50, 1
    %p54 = scmp.eq.s32.totalorder %s16, 1
    %p55 = scmp.ne.s32.totalorder %s50, %s52
    %p56 = scmp.eq.s32.totalorder %s16, 0
    %p57 = por %p55, %p56
    %p58 = scmp.ne.s32.totalorder %s50, %s52
    %p59 = scmp.eq.s32.totalorder %s21, 1
    %p60 = por %p58, %p59
    %p61 = scmp.ne.s32.totalorder %s52, %s53
    %p62 = scmp.eq.s32.totalorder %s21, 0
    %p63 = por %p61, %p62
    %p64 = scmp.ne.s32.totalorder %s52, %s53
    %p65 = scmp.eq.s32.totalorder %s22, 1
    %p66 = por %p64, %p65
    %p68 = scmp.ne.s32.totalorder %s53, %s67
    %p69 = scmp.eq.s32.totalorder %s22, 0
    %p70 = por %p68, %p69
    %s72 = sadd.s32 %s71, 1
    %p75 = scmp.eq.s32.totalorder %s16, 1
    %p76 = scmp.ne.s32.totalorder %s71, %s73
    %p77 = scmp.eq.s32.totalorder %s16, 0
    %p78 = por %p76, %p77
    %p79 = scmp.ne.s32.totalorder %s71, %s73
    %p80 = scmp.eq.s32.totalorder %s21, 1
    %p81 = por %p79, %p80
    %p82 = scmp.ne.s32.totalorder %s73, %s74
    %p83 = scmp.eq.s32.totalorder %s21, 0
    %p84 = por %p82, %p83
    %p85 = scmp.ne.s32.totalorder %s73, %s74
    %p86 = scmp.eq.s32.totalorder %s22, 1
    %p87 = por %p85, %p86
    %p89 = scmp.ne.s32.totalorder %s74, %s88
    %p90 = scmp.eq.s32.totalorder %s22, 0
    %p91 = por %p89, %p90
    %s93 = sadd.s32 %s92, 1
    %p96 = scmp.eq.s32.totalorder %s16, 1
    %p97 = scmp.ne.s32.totalorder %s92, %s94
    %p98 = scmp.eq.s32.totalorder %s16, 0
    %p99 = por %p97, %p98
    %p100 = scmp.ne.s32.totalorder %s92, %s94
    %p101 = scmp.eq.s32.totalorder %s21, 1
    %p102 = por %p100, %p101
    %p103 = scmp.ne.s32.totalorder %s94, %s95
    %p104 = scmp.eq.s32.totalorder %s21, 0
    %p105 = por %p103, %p104
    %p106 = scmp.ne.s32.totalorder %s94, %s95
    %p107 = scmp.eq.s32.totalorder %s22, 1
    %p108 = por %p106, %p107
    %p110 = scmp.ne.s32.totalorder %s95, %s109
    %p111 = scmp.eq.s32.totalorder %s22, 0
    %p112 = por %p110, %p111
    %s114 = sadd.s32 %s113, 1
    %p117 = scmp.eq.s32.totalorder %s16, 1
    %p118 = scmp.ne.s32.totalorder %s113, %s115
    %p119 = scmp.eq.s32.totalorder %s16, 0
    %p120 = por %p118, %p119
    %p121 = scmp.ne.s32.totalorder %s113, %s115
    %p122 = scmp.eq.s32.totalorder %s21, 1
    %p123 = por %p121, %p122
    %p124 = scmp.ne.s32.totalorder %s115, %s116
    %p125 = scmp.eq.s32.totalorder %s21, 0
    %p126 = por %p124, %p125
    %p127 = scmp.ne.s32.totalorder %s115, %s116
    %p128 = scmp.eq.s32.totalorder %s22, 1
    %p129 = por %p127, %p128
    %p131 = scmp.ne.s32.totalorder %s116, %s130
    %p132 = scmp.eq.s32.totalorder %s22, 0
    %p133 = por %p131, %p132
    %s135 = sadd.s32 %s134, 1
    %p138 = scmp.eq.s32.totalorder %s16, 1
    %p139 = scmp.ne.s32.totalorder %s134, %s136
    %p140 = scmp.eq.s32.totalorder %s16, 0
    %p141 = por %p139, %p140
    %p142 = scmp.ne.s32.totalorder %s134, %s136
    %p143 = scmp.eq.s32.totalorder %s21, 1
    %p144 = por %p142, %p143
    %p145 = scmp.ne.s32.totalorder %s136, %s137
    %p146 = scmp.eq.s32.totalorder %s21, 0
    %p147 = por %p145, %p146
    %p148 = scmp.ne.s32.totalorder %s136, %s137
    %p149 = scmp.eq.s32.totalorder %s22, 1
    %p150 = por %p148, %p149
    %p152 = scmp.ne.s32.totalorder %s137, %s151
    %p153 = scmp.eq.s32.totalorder %s22, 0
    %p154 = por %p152, %p153
    %s156 = sadd.s32 %s155, 1
    %p159 = scmp.eq.s32.totalorder %s16, 1
    %p160 = scmp.ne.s32.totalorder %s155, %s157
    %p161 = scmp.eq.s32.totalorder %s16, 0
    %p162 = por %p160, %p161
    %p163 = scmp.ne.s32.totalorder %s155, %s157
    %p164 = scmp.eq.s32.totalorder %s21, 1
    %p165 = por %p163, %p164
    %p166 = scmp.ne.s32.totalorder %s157, %s158
    %p167 = scmp.eq.s32.totalorder %s21, 0
    %p168 = por %p166, %p167
    %p169 = scmp.ne.s32.totalorder %s157, %s158
    %p170 = scmp.eq.s32.totalorder %s22, 1
    %p171 = por %p169, %p170
    %p173 = scmp.ne.s32.totalorder %s158, %s172
    %p174 = scmp.eq.s32.totalorder %s22, 0
    %p175 = por %p173, %p174
    %s177 = sadd.s32 %s176, 1
    %p180 = scmp.eq.s32.totalorder %s16, 1
    %p181 = scmp.ne.s32.totalorder %s176, %s178
    %p182 = scmp.eq.s32.totalorder %s16, 0
    %p183 = por %p181, %p182
    %p184 = scmp.ne.s32.totalorder %s176, %s178
    %p185 = scmp.eq.s32.totalorder %s21, 1
    %p186 = por %p184, %p185
    %p187 = scmp.ne.s32.totalorder %s178, %s179
    %p188 = scmp.eq.s32.totalorder %s21, 0
    %p189 = por %p187, %p188
    %p190 = scmp.ne.s32.totalorder %s178, %s179
    %p191 = scmp.eq.s32.totalorder %s22, 1
    %p192 = por %p190, %p191
    %p194 = scmp.ne.s32.totalorder %s179, %s193
    %p195 = scmp.eq.s32.totalorder %s22, 0
    %p196 = por %p194, %p195
    %s198 = sadd.s32 %s197, 1
    %p201 = scmp.eq.s32.totalorder %s16, 1
    %p202 = scmp.ne.s32.totalorder %s197, %s199
    %p203 = scmp.eq.s32.totalorder %s16, 0
    %p204 = por %p202, %p203
    %p205 = scmp.ne.s32.totalorder %s197, %s199
    %p206 = scmp.eq.s32.totalorder %s21, 1
    %p207 = por %p205, %p206
    %p208 = scmp.ne.s32.totalorder %s199, %s200
    %p209 = scmp.eq.s32.totalorder %s21, 0
    %p210 = por %p208, %p209
    %p211 = scmp.ne.s32.totalorder %s199, %s200
    %p212 = scmp.eq.s32.totalorder %s22, 1
    %p213 = por %p211, %p212
    %p215 = scmp.ne.s32.totalorder %s200, %s214
    %p216 = scmp.eq.s32.totalorder %s22, 0
    %p217 = por %p215, %p216
    %s219 = sadd.s32 %s218, 1
    %p222 = scmp.eq.s32.totalorder %s16, 1
    %p223 = scmp.ne.s32.totalorder %s218, %s220
    %p224 = scmp.eq.s32.totalorder %s16, 0
    %p225 = por %p223, %p224
    %p226 = scmp.ne.s32.totalorder %s218, %s220
    %p227 = scmp.eq.s32.totalorder %s21, 1
    %p228 = por %p226, %p227
    %p229 = scmp.ne.s32.totalorder %s220, %s221
    %p230 = scmp.eq.s32.totalorder %s21, 0
    %p231 = por %p229, %p230
    %p232 = scmp.ne.s32.totalorder %s220, %s221
    %p233 = scmp.eq.s32.totalorder %s22, 1
    %p234 = por %p232, %p233
    %p236 = scmp.ne.s32.totalorder %s221, %s235
    %p237 = scmp.eq.s32.totalorder %s22, 0
    %p238 = por %p236, %p237
    %s239 = ssub.s32 %s16, %s23
    %p240 = scmp.eq.s32.totalorder %s239, 0
    %s242 = sadd.s32 %s241, 1
    %s243 = scalar_select %p240, %s241, %s242
    %p246 = pneg %p240
    %p247 = scmp.eq.s32.totalorder %s16, 1
    %p248 = por %p246, %p247
    %p249 = scmp.ne.s32.totalorder %s241, %s244
    %p250 = scmp.eq.s32.totalorder %s16, 0
    %p251 = por %p249, %p250
    %p252 = scmp.ne.s32.totalorder %s241, %s244
    %p253 = scmp.eq.s32.totalorder %s21, 1
    %p254 = por %p252, %p253
    %p255 = scmp.ne.s32.totalorder %s244, %s245
    %p256 = scmp.eq.s32.totalorder %s21, 0
    %p257 = por %p255, %p256
    %p258 = scmp.ne.s32.totalorder %s244, %s245
    %p259 = scmp.eq.s32.totalorder %s22, 1
    %p260 = por %p258, %p259
    %p262 = scmp.ne.s32.totalorder %s245, %s261
    %p263 = scmp.eq.s32.totalorder %s22, 0
    %p264 = por %p262, %p263
    %p265 = scmp.le.s32.totalorder 1, %s16
    %p266 = scmp.lt.s32.totalorder %s16, 3
    %p267 = pnand %p265, %p266
    %p268 = pneg %p267
    // Predicated region
    $region9: #{tpu_custom_call.1} parent=5 // pred_check
      _
    $region10: #{tpu_custom_call.1} parent=5 // pred_check_branch
      %270 = sbr.rel (%p267) target = $region12
    $region11: #{tpu_custom_call.1} parent=5 // pred_region
      %s271 = ssub.s32 %s16, 1
      // Predicated region
      $region13: #{tpu_custom_call.1} parent=11 // pred_check
        %p272 = pneg %p63
      $region14: #{tpu_custom_call.1} parent=11 // pred_check_branch
        %274 = sbr.rel (%p272) target = $region16
      $region15: #{tpu_custom_call.1} parent=11 // pred_region
        _
      $region16: #{tpu_custom_call.1} parent=11 // pred_fallthru
        _
      // Predicated region
      $region17: #{tpu_custom_call.1} parent=11 // pred_check
        %p275 = pneg %p84
      $region18: #{tpu_custom_call.1} parent=11 // pred_check_branch
        %277 = sbr.rel (%p275) target = $region20
      $region19: #{tpu_custom_call.1} parent=11 // pred_region
        _
      $region20: #{tpu_custom_call.1} parent=11 // pred_fallthru
        _
      // Predicated region
      $region21: #{tpu_custom_call.1} parent=11 // pred_check
        %p278 = pneg %p105
      $region22: #{tpu_custom_call.1} parent=11 // pred_check_branch
        %280 = sbr.rel (%p278) target = $region24
      $region23: #{tpu_custom_call.1} parent=11 // pred_region
        _
      $region24: #{tpu_custom_call.1} parent=11 // pred_fallthru
        _
      // Predicated region
      $region25: #{tpu_custom_call.1} parent=11 // pred_check
        %p281 = pneg %p126
      $region26: #{tpu_custom_call.1} parent=11 // pred_check_branch
        %283 = sbr.rel (%p281) target = $region28
      $region27: #{tpu_custom_call.1} parent=11 // pred_region
        _
      $region28: #{tpu_custom_call.1} parent=11 // pred_fallthru
        _
      // Predicated region
      $region29: #{tpu_custom_call.1} parent=11 // pred_check
        %p284 = pneg %p147
      $region30: #{tpu_custom_call.1} parent=11 // pred_check_branch
        %286 = sbr.rel (%p284) target = $region32
      $region31: #{tpu_custom_call.1} parent=11 // pred_region
        _
      $region32: #{tpu_custom_call.1} parent=11 // pred_fallthru
        _
      // Predicated region
      $region33: #{tpu_custom_call.1} parent=11 // pred_check
        %p287 = pneg %p168
      $region34: #{tpu_custom_call.1} parent=11 // pred_check_branch
        %289 = sbr.rel (%p287) target = $region36
      $region35: #{tpu_custom_call.1} parent=11 // pred_region
        _
      $region36: #{tpu_custom_call.1} parent=11 // pred_fallthru
        _
      // Predicated region
      $region37: #{tpu_custom_call.1} parent=11 // pred_check
        %p290 = pneg %p189
      $region38: #{tpu_custom_call.1} parent=11 // pred_check_branch
        %292 = sbr.rel (%p290) target = $region40
      $region39: #{tpu_custom_call.1} parent=11 // pred_region
        _
      $region40: #{tpu_custom_call.1} parent=11 // pred_fallthru
        _
      // Predicated region
      $region41: #{tpu_custom_call.1} parent=11 // pred_check
        %p293 = pneg %p210
      $region42: #{tpu_custom_call.1} parent=11 // pred_check_branch
        %295 = sbr.rel (%p293) target = $region44
      $region43: #{tpu_custom_call.1} parent=11 // pred_region
        _
      $region44: #{tpu_custom_call.1} parent=11 // pred_fallthru
        _
      // Predicated region
      $region45: #{tpu_custom_call.1} parent=11 // pred_check
        %p296 = pneg %p231
      $region46: #{tpu_custom_call.1} parent=11 // pred_check_branch
        %298 = sbr.rel (%p296) target = $region48
      $region47: #{tpu_custom_call.1} parent=11 // pred_region
        _
      $region48: #{tpu_custom_call.1} parent=11 // pred_fallthru
        _
    $region12: #{tpu_custom_call.1} parent=5 // pred_fallthru
      _
    %p299 = scmp.lt.s32.totalorder %s16, 2
    // Predicated region
    $region49: #{tpu_custom_call.1} parent=5 // pred_check
      %p300 = pneg %p299
    $region50: #{tpu_custom_call.1} parent=5 // pred_check_branch
      %302 = sbr.rel (%p300) target = $region52
    $region51: #{tpu_custom_call.1} parent=5 // pred_region
      // Predicated region
      $region53: #{tpu_custom_call.1} parent=51 // pred_check
        %p303 = pneg %p36
      $region54: #{tpu_custom_call.1} parent=51 // pred_check_branch
        %305 = sbr.rel (%p303) target = $region56
      $region55: #{tpu_custom_call.1} parent=51 // pred_region
        %p306 = scmp.lt.s32.totalorder %s16, 1
        %s307 = scalar_select %p306, %s16, 1
        %s308 = smul.addr %s307, 54
        %s309 = smul.addr %s308, 4
        %s310 = scalar_lea.vmem %s0, %s309
      $region56: #{tpu_custom_call.1} parent=51 // pred_fallthru
        _
    $region52: #{tpu_custom_call.1} parent=5 // pred_fallthru
      _
    %p311 = scmp.le.s32.totalorder 1, %s16
    %p312 = scmp.lt.s32.totalorder %s16, 3
    %p313 = pnand %p311, %p312
    %p314 = pneg %p313
    // Predicated region
    $region57: #{tpu_custom_call.1} parent=5 // pred_check
      _
    $region58: #{tpu_custom_call.1} parent=5 // pred_check_branch
      %316 = sbr.rel (%p313) target = $region60
    $region59: #{tpu_custom_call.1} parent=5 // pred_region
      %s317 = ssub.s32 %s16, 1
      %p318 = scmp.lt.s32.totalorder %s21, 1
      %s319 = scalar_select %p318, %s21, 1
      %s320 = smul.addr %s319, 54
      %s321 = smul.addr %s320, 4
      %s322 = scalar_lea.vmem %s0, %s321
      %p323 = pneg %p42
      %p324 = pneg %p39
      %p325 = pneg %p63
      %p326 = pneg %p60
      %p327 = pneg %p84
      %p328 = pneg %p81
      %p329 = pneg %p105
      %p330 = pneg %p102
      %p331 = pneg %p126
      %p332 = pneg %p123
      %p333 = pneg %p147
      %p334 = pneg %p144
      %p335 = pneg %p168
      %p336 = pneg %p165
      %p337 = pneg %p189
      %p338 = pneg %p186
      %p339 = pneg %p210
      %p340 = pneg %p207
      %p341 = pneg %p231
      %p342 = pneg %p228
      %p343 = pneg %p257
      %p344 = pneg %p254
      %p345 = scmp.lt.s32.totalorder %s21, 1
      %s346 = scalar_select %p345, %s21, 1
      %s347 = smul.addr %s346, 32
      %s348 = smul.addr %s347, 8
      %s349 = scalar_lea.vmem %s10, %s348
      %p350 = scmp.lt.s32.totalorder %s21, 1
      %s351 = scalar_select %p350, %s21, 1
      %s352 = smul.addr %s351, 54
      %s353 = smul.addr %s352, 4
      %s354 = scalar_lea.vmem %s0, %s353
      %p355 = scmp.lt.s32.totalorder %s21, 1
      %s356 = scalar_select %p355, %s21, 1
      %s357 = smul.addr %s356, 32
      %s358 = smul.addr %s357, 8
      %s359 = scalar_lea.vmem %s10, %s358
      %v361 = vld [vmem:[%s354] sm:$0xf]
      %v362 = vld [vmem:[%s354 + $0x4] sm:$0xf]
      %v363 = vld [vmem:[%s354 + $0x8] sm:$0xf]
      %v364 = vld [vmem:[%s354 + $0xc] sm:$0xf]
      %v365 = vld [vmem:[%s354 + $0x10] sm:$0xf]
      %v366 = vld [vmem:[%s354 + $0x14] sm:$0xf]
      %v367 = vld [vmem:[%s354 + $0x18] sm:$0xf]
      %v368 = vld [vmem:[%s354 + $0x1c] sm:$0xf]
      %v369 = vld [vmem:[%s354 + $0x20] sm:$0xf]
      %v370 = vld [vmem:[%s354 + $0x24] sm:$0xf]
      %v371 = vld [vmem:[%s354 + $0x28] sm:$0xf]
      %v372 = vld [vmem:[%s354 + $0x2c] sm:$0xf]
      %v373 = vld [vmem:[%s354 + $0x30] sm:$0xf]
      %v374 = vld [vmem:[%s354 + $0x34] sm:$0xf]
      %v375 = vld [vmem:[%s354 + $0x38] sm:$0xf]
      %v376 = vld [vmem:[%s354 + $0x3c] sm:$0xf]
      %v377 = vld [vmem:[%s354 + $0x40] sm:$0xf]
      %v378 = vld [vmem:[%s354 + $0x44] sm:$0xf]
      %v379 = vld [vmem:[%s354 + $0x48] sm:$0xf]
      %v380 = vld [vmem:[%s354 + $0x4c] sm:$0xf]
      %v381 = vld [vmem:[%s354 + $0x50] sm:$0xf]
      %v382 = vld [vmem:[%s354 + $0x54] sm:$0xf]
      %v383 = vld [vmem:[%s354 + $0x58] sm:$0xf]
      %v384 = vld [vmem:[%s354 + $0x5c] sm:$0xf]
      %v385 = vld [vmem:[%s354 + $0x60] sm:$0xf]
      %v386 = vld [vmem:[%s354 + $0x64] sm:$0xf]
      %v387 = vld [vmem:[%s354 + $0x68] sm:$0xf]
      %v388 = vld [vmem:[%s354 + $0x6c] sm:$0xf]
      %v389 = vld [vmem:[%s354 + $0x70] sm:$0xf]
      %v390 = vld [vmem:[%s354 + $0x74] sm:$0xf]
      %v391 = vld [vmem:[%s354 + $0x78] sm:$0xf]
      %v392 = vld [vmem:[%s354 + $0x7c] sm:$0xf]
      %v393 = vld [vmem:[%s354 + $0x80] sm:$0xf]
      %v394 = vld [vmem:[%s354 + $0x84] sm:$0xf]
      %v395 = vld [vmem:[%s354 + $0x88] sm:$0xf]
      %v396 = vld [vmem:[%s354 + $0x8c] sm:$0xf]
      %v397 = vld [vmem:[%s354 + $0x90] sm:$0xf]
      %v398 = vld [vmem:[%s354 + $0x94] sm:$0xf]
      %v399 = vld [vmem:[%s354 + $0x98] sm:$0xf]
      %v400 = vld [vmem:[%s354 + $0x9c] sm:$0xf]
      %v401 = vld [vmem:[%s354 + $0xa0] sm:$0xf]
      %v402 = vld [vmem:[%s354 + $0xa4] sm:$0xf]
      %v403 = vld [vmem:[%s354 + $0xa8] sm:$0xf]
      %v404 = vld [vmem:[%s354 + $0xac] sm:$0xf]
      %v405 = vld [vmem:[%s354 + $0xb0] sm:$0xf]
      %v406 = vld [vmem:[%s354 + $0xb4] sm:$0xf]
      %v407 = vld [vmem:[%s354 + $0xb8] sm:$0xf]
      %v408 = vld [vmem:[%s354 + $0xbc] sm:$0xf]
      %v409 = vld [vmem:[%s354 + $0xc0] sm:$0xf]
      %v410 = vld [vmem:[%s354 + $0xc4] sm:$0xf]
      %v411 = vld [vmem:[%s354 + $0xc8] sm:$0xf]
      %v412 = vld [vmem:[%s354 + $0xcc] sm:$0xf]
      %v413 = vld [vmem:[%s354 + $0xd0] sm:$0xf]
      %v414 = vld [vmem:[%s354 + $0xd4] sm:$0xf]
      %v415 = vunpack.c.l.bf16 %v361
      %v416 = vunpack.c.l.bf16 %v362
      %v417 = vunpack.c.l.bf16 %v363
      %v418 = vunpack.c.l.bf16 %v364
      %v419 = vunpack.c.l.bf16 %v365
      %v420 = vunpack.c.l.bf16 %v366
      %v421 = vunpack.c.l.bf16 %v367
      %v422 = vunpack.c.l.bf16 %v368
      %v423 = vunpack.c.l.bf16 %v369
      %v424 = vunpack.c.l.bf16 %v370
      %v425 = vunpack.c.l.bf16 %v371
      %v426 = vunpack.c.l.bf16 %v372
      %v427 = vunpack.c.l.bf16 %v373
      %v428 = vunpack.c.l.bf16 %v374
      %v429 = vunpack.c.l.bf16 %v375
      %v430 = vunpack.c.l.bf16 %v376
      %v431 = vunpack.c.l.bf16 %v377
      %v432 = vunpack.c.l.bf16 %v378
      %v433 = vunpack.c.l.bf16 %v379
      %v434 = vunpack.c.l.bf16 %v380
      %v435 = vunpack.c.l.bf16 %v381
      %v436 = vunpack.c.l.bf16 %v382
      %v437 = vunpack.c.l.bf16 %v383
      %v438 = vunpack.c.l.bf16 %v384
      %v439 = vunpack.c.l.bf16 %v385
      %v440 = vunpack.c.l.bf16 %v386
      %v441 = vunpack.c.l.bf16 %v387
      %v442 = vunpack.c.l.bf16 %v388
      %v443 = vunpack.c.l.bf16 %v389
      %v444 = vunpack.c.l.bf16 %v390
      %v445 = vunpack.c.l.bf16 %v391
      %v446 = vunpack.c.l.bf16 %v392
      %v447 = vunpack.c.l.bf16 %v393
      %v448 = vunpack.c.l.bf16 %v394
      %v449 = vunpack.c.l.bf16 %v395
      %v450 = vunpack.c.l.bf16 %v396
      %v451 = vunpack.c.l.bf16 %v397
      %v452 = vunpack.c.l.bf16 %v398
      %v453 = vunpack.c.l.bf16 %v399
      %v454 = vunpack.c.l.bf16 %v400
      %v455 = vunpack.c.l.bf16 %v401
      %v456 = vunpack.c.l.bf16 %v402
      %v457 = vunpack.c.l.bf16 %v403
      %v458 = vunpack.c.l.bf16 %v404
      %v459 = vunpack.c.l.bf16 %v405
      %v460 = vunpack.c.l.bf16 %v406
      %v461 = vunpack.c.l.bf16 %v407
      %v462 = vunpack.c.l.bf16 %v408
      %v463 = vunpack.c.l.bf16 %v409
      %v464 = vunpack.c.l.bf16 %v410
      %v465 = vunpack.c.l.bf16 %v411
      %v466 = vunpack.c.l.bf16 %v412
      %v467 = vunpack.c.l.bf16 %v413
      %v468 = vunpack.c.l.bf16 %v414
      %v469 = vpack.c.bf16 %v416, %v415
      %v470 = vpack.c.bf16 %v418, %v417
      %v471 = vpack.c.bf16 %v420, %v419
      %v472 = vpack.c.bf16 %v422, %v421
      %v473 = vpack.c.bf16 %v424, %v423
      %v474 = vpack.c.bf16 %v426, %v425
      %v475 = vpack.c.bf16 %v428, %v427
      %v476 = vpack.c.bf16 %v430, %v429
      %v477 = vpack.c.bf16 %v432, %v431
      %v478 = vpack.c.bf16 %v434, %v433
      %v479 = vpack.c.bf16 %v436, %v435
      %v480 = vpack.c.bf16 %v438, %v437
      %v481 = vpack.c.bf16 %v440, %v439
      %v482 = vpack.c.bf16 %v442, %v441
      %v483 = vpack.c.bf16 %v444, %v443
      %v484 = vpack.c.bf16 %v446, %v445
      %v485 = vpack.c.bf16 %v448, %v447
      %v486 = vpack.c.bf16 %v450, %v449
      %v487 = vpack.c.bf16 %v452, %v451
      %v488 = vpack.c.bf16 %v454, %v453
      %v489 = vpack.c.bf16 %v456, %v455
      %v490 = vpack.c.bf16 %v458, %v457
      %v491 = vpack.c.bf16 %v460, %v459
      %v492 = vpack.c.bf16 %v462, %v461
      %v493 = vpack.c.bf16 %v464, %v463
      %v494 = vpack.c.bf16 %v466, %v465
      %v495 = vpack.c.bf16 %v468, %v467
      %v496 = vld [vmem:[%s1] sm:$0xf]
      %vm497 = vcmask 64512
      %v499 = vsel %vm497, %v469, 0
      %v502 = vsel %vm497, %v470, 0
      %v505 = vsel %vm497, %v471, 0
      %v508 = vsel %vm497, %v472, 0
      %v511 = vsel %vm497, %v473, 0
      %v514 = vsel %vm497, %v474, 0
      %v517 = vsel %vm497, %v475, 0
      %v520 = vsel %vm497, %v476, 0
      %v523 = vsel %vm497, %v477, 0
      %v526 = vsel %vm497, %v478, 0
      %v529 = vsel %vm497, %v479, 0
      %v532 = vsel %vm497, %v480, 0
      %v535 = vsel %vm497, %v481, 0
      %v538 = vsel %vm497, %v482, 0
      %v541 = vsel %vm497, %v483, 0
      %v544 = vsel %vm497, %v484, 0
      %v547 = vsel %vm497, %v485, 0
      %v550 = vsel %vm497, %v486, 0
      %v553 = vsel %vm497, %v487, 0
      %v556 = vsel %vm497, %v488, 0
      %v559 = vsel %vm497, %v489, 0
      %v562 = vsel %vm497, %v490, 0
      %v565 = vsel %vm497, %v491, 0
      %v568 = vsel %vm497, %v492, 0
      %v571 = vsel %vm497, %v493, 0
      %v574 = vsel %vm497, %v494, 0
      %v577 = vsel %vm497, %v495, 0
      %vm579 = vcmask 1043456
      %v581 = vsel %vm579, %v496, 0
      %583 = vmatprep.subr.bf16.mxu0 0
      %584 = vmatpush1.bf16.msra.mxu0 %v581
      %585 = vmatprep.subr.bf16.mxu0 0
      %586 = vmatpush1.bf16.msra.mxu0 0
      %587 = vmatprep.subr.bf16.mxu0 0
      %588 = vmatpush1.bf16.msra.mxu0 0
      %589 = vmatprep.subr.bf16.mxu0 0
      %590 = vmatpush1.bf16.msra.mxu0 0
      %591 = vmatprep.subr.bf16.mxu0 0
      %592 = vmatpush1.bf16.msra.mxu0 0
      %593 = vmatprep.subr.bf16.mxu0 0
      %594 = vmatpush1.bf16.msra.mxu0 0
      %595 = vmatprep.subr.bf16.mxu0 0
      %596 = vmatpush1.bf16.msra.mxu0 0
      %597 = vmatprep.subr.bf16.mxu0 0
      %598 = vmatpush1.bf16.msra.mxu0 0
      %599 = vmatprep.subr.bf16.mxu0 0
      %600 = vmatpush1.bf16.msra.mxu0 0
      %601 = vmatprep.subr.bf16.mxu0 0
      %602 = vmatpush1.bf16.msra.mxu0 0
      %603 = vmatprep.subr.bf16.mxu0 0
      %604 = vmatpush1.bf16.msra.mxu0 0
      %605 = vmatprep.subr.bf16.mxu0 0
      %606 = vmatpush1.bf16.msra.mxu0 0
      %607 = vmatprep.subr.bf16.mxu0 0
      %608 = vmatpush1.bf16.msra.mxu0 0
      %609 = vmatprep.subr.bf16.mxu0 0
      %610 = vmatpush1.bf16.msra.mxu0 0
      %611 = vmatprep.subr.bf16.mxu0 0
      %612 = vmatpush1.bf16.msra.mxu0 0
      %613 = vmatprep.subr.bf16.mxu0 0
      %614 = vmatpush1.bf16.msra.mxu0 0
      %615 = vmatprep.mubr.bf16.mxu0 0
      %616 = vmatmul.mubr.bf16.gmra.mrb[0].mxu0 %v499
      %v617 = vpop.f32.mrb[0].mxu0
      %v618 = vadd.f32 0.0, %v617
      %v619 = vpop.f32.mrb[0].mxu0
      %v620 = vpop.f32.mrb[0].mxu0
      %v621 = vadd.f32 0.0, %v620
      %v622 = vpop.f32.mrb[0].mxu0
      %623 = vmatprep.mubr.bf16.mxu0 0
      %624 = vmatmul.mubr.bf16.gmra.mrb[0].mxu0 %v502
      %v625 = vpop.f32.mrb[0].mxu0
      %v626 = vadd.f32 0.0, %v625
      %v627 = vpop.f32.mrb[0].mxu0
      %v628 = vpop.f32.mrb[0].mxu0
      %v629 = vadd.f32 0.0, %v628
      %v630 = vpop.f32.mrb[0].mxu0
      %631 = vmatprep.mubr.bf16.mxu0 0
      %632 = vmatmul.mubr.bf16.gmra.mrb[0].mxu0 %v505
      %v633 = vpop.f32.mrb[0].mxu0
      %v634 = vadd.f32 0.0, %v633
      %v635 = vpop.f32.mrb[0].mxu0
      %v636 = vpop.f32.mrb[0].mxu0
      %v637 = vadd.f32 0.0, %v636
      %v638 = vpop.f32.mrb[0].mxu0
      %639 = vmatprep.mubr.bf16.mxu0 0
      %640 = vmatmul.mubr.bf16.gmra.mrb[0].mxu0 %v508
      %v641 = vpop.f32.mrb[0].mxu0
      %v642 = vadd.f32 0.0, %v641
      %v643 = vpop.f32.mrb[0].mxu0
      %v644 = vpop.f32.mrb[0].mxu0
      %v645 = vadd.f32 0.0, %v644
      %v646 = vpop.f32.mrb[0].mxu0
      %647 = vmatprep.mubr.bf16.mxu0 0
      %648 = vmatmul.mubr.bf16.gmra.mrb[0].mxu0 %v511
      %v649 = vpop.f32.mrb[0].mxu0
      %v650 = vadd.f32 0.0, %v649
      %v651 = vpop.f32.mrb[0].mxu0
      %v652 = vpop.f32.mrb[0].mxu0
      %v653 = vadd.f32 0.0, %v652
      %v654 = vpop.f32.mrb[0].mxu0
      %655 = vmatprep.mubr.bf16.mxu0 0
      %656 = vmatmul.mubr.bf16.gmra.mrb[0].mxu0 %v514
      %v657 = vpop.f32.mrb[0].mxu0
      %v658 = vadd.f32 0.0, %v657
      %v659 = vpop.f32.mrb[0].mxu0
      %v660 = vpop.f32.mrb[0].mxu0
      %v661 = vadd.f32 0.0, %v660
      %v662 = vpop.f32.mrb[0].mxu0
      %663 = vmatprep.mubr.bf16.mxu0 0
      %664 = vmatmul.mubr.bf16.gmra.mrb[0].mxu0 %v517
      %v665 = vpop.f32.mrb[0].mxu0
      %v666 = vadd.f32 0.0, %v665
      %v667 = vpop.f32.mrb[0].mxu0
      %v668 = vpop.f32.mrb[0].mxu0
      %v669 = vadd.f32 0.0, %v668
      %v670 = vpop.f32.mrb[0].mxu0
      %671 = vmatprep.mubr.bf16.mxu0 0
      %672 = vmatmul.mubr.bf16.gmra.mrb[0].mxu0 %v520
      %v673 = vpop.f32.mrb[0].mxu0
      %v674 = vadd.f32 0.0, %v673
      %v675 = vpop.f32.mrb[0].mxu0
      %v676 = vpop.f32.mrb[0].mxu0
      %v677 = vadd.f32 0.0, %v676
      %v678 = vpop.f32.mrb[0].mxu0
      %679 = vmatprep.mubr.bf16.mxu0 0
      %680 = vmatmul.mubr.bf16.gmra.mrb[0].mxu0 %v523
      %v681 = vpop.f32.mrb[0].mxu0
      %v682 = vadd.f32 0.0, %v681
      %v683 = vpop.f32.mrb[0].mxu0
      %v684 = vpop.f32.mrb[0].mxu0
      %v685 = vadd.f32 0.0, %v684
      %v686 = vpop.f32.mrb[0].mxu0
      %687 = vmatprep.mubr.bf16.mxu0 0
      %688 = vmatmul.mubr.bf16.gmra.mrb[0].mxu0 %v526
      %v689 = vpop.f32.mrb[0].mxu0
      %v690 = vadd.f32 0.0, %v689
      %v691 = vpop.f32.mrb[0].mxu0
      %v692 = vpop.f32.mrb[0].mxu0
      %v693 = vadd.f32 0.0, %v692
      %v694 = vpop.f32.mrb[0].mxu0
      %695 = vmatprep.mubr.bf16.mxu0 0
      %696 = vmatmul.mubr.bf16.gmra.mrb[0].mxu0 %v529
      %v697 = vpop.f32.mrb[0].mxu0
      %v698 = vadd.f32 0.0, %v697
      %v699 = vpop.f32.mrb[0].mxu0
      %v700 = vpop.f32.mrb[0].mxu0
      %v701 = vadd.f32 0.0, %v700
      %v702 = vpop.f32.mrb[0].mxu0
      %703 = vmatprep.mubr.bf16.mxu0 0
      %704 = vmatmul.mubr.bf16.gmra.mrb[0].mxu0 %v532
      %v705 = vpop.f32.mrb[0].mxu0
      %v706 = vadd.f32 0.0, %v705
      %v707 = vpop.f32.mrb[0].mxu0
      %v708 = vpop.f32.mrb[0].mxu0
      %v709 = vadd.f32 0.0, %v708
      %v710 = vpop.f32.mrb[0].mxu0
      %711 = vmatprep.mubr.bf16.mxu0 0
      %712 = vmatmul.mubr.bf16.gmra.mrb[0].mxu0 %v535
      %v713 = vpop.f32.mrb[0].mxu0
      %v714 = vadd.f32 0.0, %v713
      %v715 = vpop.f32.mrb[0].mxu0
      %v716 = vpop.f32.mrb[0].mxu0
      %v717 = vadd.f32 0.0, %v716
      %v718 = vpop.f32.mrb[0].mxu0
      %719 = vmatprep.mubr.bf16.mxu0 0
      %720 = vmatmul.mubr.bf16.gmra.mrb[0].mxu0 %v538
      %v721 = vpop.f32.mrb[0].mxu0
      %v722 = vadd.f32 0.0, %v721
      %v723 = vpop.f32.mrb[0].mxu0
      %v724 = vpop.f32.mrb[0].mxu0
      %v725 = vadd.f32 0.0, %v724
      %v726 = vpop.f32.mrb[0].mxu0
      %727 = vmatprep.mubr.bf16.mxu0 0
      %728 = vmatmul.mubr.bf16.gmra.mrb[0].mxu0 %v541
      %v729 = vpop.f32.mrb[0].mxu0
      %v730 = vadd.f32 0.0, %v729
      %v731 = vpop.f32.mrb[0].mxu0
      %v732 = vpop.f32.mrb[0].mxu0
      %v733 = vadd.f32 0.0, %v732
      %v734 = vpop.f32.mrb[0].mxu0
      %735 = vmatprep.mubr.bf16.mxu0 0
      %736 = vmatmul.mubr.bf16.gmra.mrb[0].mxu0 %v544
      %v737 = vpop.f32.mrb[0].mxu0
      %v738 = vadd.f32 0.0, %v737
      %v739 = vpop.f32.mrb[0].mxu0
      %v740 = vpop.f32.mrb[0].mxu0
      %v741 = vadd.f32 0.0, %v740
      %v742 = vpop.f32.mrb[0].mxu0
      %743 = vmatprep.mubr.bf16.mxu0 0
      %744 = vmatmul.mubr.bf16.gmra.mrb[0].mxu0 %v547
      %v745 = vpop.f32.mrb[0].mxu0
      %v746 = vadd.f32 0.0, %v745
      %v747 = vpop.f32.mrb[0].mxu0
      %v748 = vpop.f32.mrb[0].mxu0
      %v749 = vadd.f32 0.0, %v748
      %v750 = vpop.f32.mrb[0].mxu0
      %751 = vmatprep.mubr.bf16.mxu0 0
      %752 = vmatmul.mubr.bf16.gmra.mrb[0].mxu0 %v550
      %v753 = vpop.f32.mrb[0].mxu0
      %v754 = vadd.f32 0.0, %v753
      %v755 = vpop.f32.mrb[0].mxu0
      %v756 = vpop.f32.mrb[0].mxu0
      %v757 = vadd.f32 0.0, %v756
      %v758 = vpop.f32.mrb[0].mxu0
      %759 = vmatprep.mubr.bf16.mxu0 0
      %760 = vmatmul.mubr.bf16.gmra.mrb[0].mxu0 %v553
      %v761 = vpop.f32.mrb[0].mxu0
      %v762 = vadd.f32 0.0, %v761
      %v763 = vpop.f32.mrb[0].mxu0
      %v764 = vpop.f32.mrb[0].mxu0
      %v765 = vadd.f32 0.0, %v764
      %v766 = vpop.f32.mrb[0].mxu0
      %767 = vmatprep.mubr.bf16.mxu0 0
      %768 = vmatmul.mubr.bf16.gmra.mrb[0].mxu0 %v556
      %v769 = vpop.f32.mrb[0].mxu0
      %v770 = vadd.f32 0.0, %v769
      %v771 = vpop.f32.mrb[0].mxu0
      %v772 = vpop.f32.mrb[0].mxu0
      %v773 = vadd.f32 0.0, %v772
      %v774 = vpop.f32.mrb[0].mxu0
      %775 = vmatprep.mubr.bf16.mxu0 0
      %776 = vmatmul.mubr.bf16.gmra.mrb[0].mxu0 %v559
      %v777 = vpop.f32.mrb[0].mxu0
      %v778 = vadd.f32 0.0, %v777
      %v779 = vpop.f32.mrb[0].mxu0
      %v780 = vpop.f32.mrb[0].mxu0
      %v781 = vadd.f32 0.0, %v780
      %v782 = vpop.f32.mrb[0].mxu0
      %783 = vmatprep.mubr.bf16.mxu0 0
      %784 = vmatmul.mubr.bf16.gmra.mrb[0].mxu0 %v562
      %v785 = vpop.f32.mrb[0].mxu0
      %v786 = vadd.f32 0.0, %v785
      %v787 = vpop.f32.mrb[0].mxu0
      %v788 = vpop.f32.mrb[0].mxu0
      %v789 = vadd.f32 0.0, %v788
      %v790 = vpop.f32.mrb[0].mxu0
      %791 = vmatprep.mubr.bf16.mxu0 0
      %792 = vmatmul.mubr.bf16.gmra.mrb[0].mxu0 %v565
      %v793 = vpop.f32.mrb[0].mxu0
      %v794 = vadd.f32 0.0, %v793
      %v795 = vpop.f32.mrb[0].mxu0
      %v796 = vpop.f32.mrb[0].mxu0
      %v797 = vadd.f32 0.0, %v796
      %v798 = vpop.f32.mrb[0].mxu0
      %799 = vmatprep.mubr.bf16.mxu0 0
      %800 = vmatmul.mubr.bf16.gmra.mrb[0].mxu0 %v568
      %v801 = vpop.f32.mrb[0].mxu0
      %v802 = vadd.f32 0.0, %v801
      %v803 = vpop.f32.mrb[0].mxu0
      %v804 = vpop.f32.mrb[0].mxu0
      %v805 = vadd.f32 0.0, %v804
      %v806 = vpop.f32.mrb[0].mxu0
      %807 = vmatprep.mubr.bf16.mxu0 0
      %808 = vmatmul.mubr.bf16.gmra.mrb[0].mxu0 %v571
      %v809 = vpop.f32.mrb[0].mxu0
      %v810 = vadd.f32 0.0, %v809
      %v811 = vpop.f32.mrb[0].mxu0
      %v812 = vpop.f32.mrb[0].mxu0
      %v813 = vadd.f32 0.0, %v812
      %v814 = vpop.f32.mrb[0].mxu0
      %815 = vmatprep.mubr.bf16.mxu0 0
      %816 = vmatmul.mubr.bf16.gmra.mrb[0].mxu0 %v574
      %v817 = vpop.f32.mrb[0].mxu0
      %v818 = vadd.f32 0.0, %v817
      %v819 = vpop.f32.mrb[0].mxu0
      %v820 = vpop.f32.mrb[0].mxu0
      %v821 = vadd.f32 0.0, %v820
      %v822 = vpop.f32.mrb[0].mxu0
      %823 = vmatprep.mubr.bf16.mxu0 0
      %824 = vmatmul.mubr.bf16.gmra.mrb[0].mxu0 %v577
      %v825 = vpop.f32.mrb[0].mxu0
      %v826 = vadd.f32 0.0, %v825
      %v827 = vpop.f32.mrb[0].mxu0
      %v828 = vpop.f32.mrb[0].mxu0
      %v829 = vadd.f32 0.0, %v828
      %v830 = vpop.f32.mrb[0].mxu0
      %831 = vdwg.mxu0
      %v832 = vld [vmem:[%s2] sm:$0x1]
      %v834 = vlaneseq
      %v835 = vshrl.u32 %v834, 7
      %v836 = vsub.s32 0, %v835
      %v837 = vrot.slane %v832, %v836
      %v839 = vmul.f32 %v618, %v837
      %v840 = vmul.f32 %v621, %v837
      %v841 = vmul.f32 %v626, %v837
      %v842 = vmul.f32 %v629, %v837
      %v843 = vmul.f32 %v634, %v837
      %v844 = vmul.f32 %v637, %v837
      %v845 = vmul.f32 %v642, %v837
      %v846 = vmul.f32 %v645, %v837
      %v847 = vmul.f32 %v650, %v837
      %v848 = vmul.f32 %v653, %v837
      %v849 = vmul.f32 %v658, %v837
      %v850 = vmul.f32 %v661, %v837
      %v851 = vmul.f32 %v666, %v837
      %v852 = vmul.f32 %v669, %v837
      %v853 = vmul.f32 %v674, %v837
      %v854 = vmul.f32 %v677, %v837
      %v855 = vmul.f32 %v682, %v837
      %v856 = vmul.f32 %v685, %v837
      %v857 = vmul.f32 %v690, %v837
      %v858 = vmul.f32 %v693, %v837
      %v859 = vmul.f32 %v698, %v837
      %v860 = vmul.f32 %v701, %v837
      %v861 = vmul.f32 %v706, %v837
      %v862 = vmul.f32 %v709, %v837
      %v863 = vmul.f32 %v714, %v837
      %v864 = vmul.f32 %v717, %v837
      %v865 = vmul.f32 %v722, %v837
      %v866 = vmul.f32 %v725, %v837
      %v867 = vmul.f32 %v730, %v837
      %v868 = vmul.f32 %v733, %v837
      %v869 = vmul.f32 %v738, %v837
      %v870 = vmul.f32 %v741, %v837
      %v871 = vmul.f32 %v746, %v837
      %v872 = vmul.f32 %v749, %v837
      %v873 = vmul.f32 %v754, %v837
      %v874 = vmul.f32 %v757, %v837
      %v875 = vmul.f32 %v762, %v837
      %v876 = vmul.f32 %v765, %v837
      %v877 = vmul.f32 %v770, %v837
      %v878 = vmul.f32 %v773, %v837
      %v879 = vmul.f32 %v778, %v837
      %v880 = vmul.f32 %v781, %v837
      %v881 = vmul.f32 %v786, %v837
      %v882 = vmul.f32 %v789, %v837
      %v883 = vmul.f32 %v794, %v837
      %v884 = vmul.f32 %v797, %v837
      %v885 = vmul.f32 %v802, %v837
      %v886 = vmul.f32 %v805, %v837
      %v887 = vmul.f32 %v810, %v837
      %v888 = vmul.f32 %v813, %v837
      %v889 = vmul.f32 %v818, %v837
      %v890 = vmul.f32 %v821, %v837
      %v891 = vmul.f32 %v826, %v837
      %v892 = vmul.f32 %v829, %v837
      %v893 = vld [vmem:[%s3] sm:$0x1]
      %v895 = vlaneseq
      %v896 = vshrl.u32 %v895, 7
      %v897 = vsub.s32 0, %v896
      %v898 = vrot.slane %v893, %v897
      %v900 = vadd.f32 %v839, %v898
      %v901 = vadd.f32 %v840, %v898
      %v902 = vadd.f32 %v841, %v898
      %v903 = vadd.f32 %v842, %v898
      %v904 = vadd.f32 %v843, %v898
      %v905 = vadd.f32 %v844, %v898
      %v906 = vadd.f32 %v845, %v898
      %v907 = vadd.f32 %v846, %v898
      %v908 = vadd.f32 %v847, %v898
      %v909 = vadd.f32 %v848, %v898
      %v910 = vadd.f32 %v849, %v898
      %v911 = vadd.f32 %v850, %v898
      %v912 = vadd.f32 %v851, %v898
      %v913 = vadd.f32 %v852, %v898
      %v914 = vadd.f32 %v853, %v898
      %v915 = vadd.f32 %v854, %v898
      %v916 = vadd.f32 %v855, %v898
      %v917 = vadd.f32 %v856, %v898
      %v918 = vadd.f32 %v857, %v898
      %v919 = vadd.f32 %v858, %v898
      %v920 = vadd.f32 %v859, %v898
      %v921 = vadd.f32 %v860, %v898
      %v922 = vadd.f32 %v861, %v898
      %v923 = vadd.f32 %v862, %v898
      %v924 = vadd.f32 %v863, %v898
      %v925 = vadd.f32 %v864, %v898
      %v926 = vadd.f32 %v865, %v898
      %v927 = vadd.f32 %v866, %v898
      %v928 = vadd.f32 %v867, %v898
      %v929 = vadd.f32 %v868, %v898
      %v930 = vadd.f32 %v869, %v898
      %v931 = vadd.f32 %v870, %v898
      %v932 = vadd.f32 %v871, %v898
      %v933 = vadd.f32 %v872, %v898
      %v934 = vadd.f32 %v873, %v898
      %v935 = vadd.f32 %v874, %v898
      %v936 = vadd.f32 %v875, %v898
      %v937 = vadd.f32 %v876, %v898
      %v938 = vadd.f32 %v877, %v898
      %v939 = vadd.f32 %v878, %v898
      %v940 = vadd.f32 %v879, %v898
      %v941 = vadd.f32 %v880, %v898
      %v942 = vadd.f32 %v881, %v898
      %v943 = vadd.f32 %v882, %v898
      %v944 = vadd.f32 %v883, %v898
      %v945 = vadd.f32 %v884, %v898
      %v946 = vadd.f32 %v885, %v898
      %v947 = vadd.f32 %v886, %v898
      %v948 = vadd.f32 %v887, %v898
      %v949 = vadd.f32 %v888, %v898
      %v950 = vadd.f32 %v889, %v898
      %v951 = vadd.f32 %v890, %v898
      %v952 = vadd.f32 %v891, %v898
      %v953 = vadd.f32 %v892, %v898
      %v954 = vmax.f32 %v900, 0.0
      %v955 = vmax.f32 %v901, 0.0
      %v956 = vmax.f32 %v902, 0.0
      %v957 = vmax.f32 %v903, 0.0
      %v958 = vmax.f32 %v904, 0.0
      %v959 = vmax.f32 %v905, 0.0
      %v960 = vmax.f32 %v906, 0.0
      %v961 = vmax.f32 %v907, 0.0
      %v962 = vmax.f32 %v908, 0.0
      %v963 = vmax.f32 %v909, 0.0
      %v964 = vmax.f32 %v910, 0.0
      %v965 = vmax.f32 %v911, 0.0
      %v966 = vmax.f32 %v912, 0.0
      %v967 = vmax.f32 %v913, 0.0
      %v968 = vmax.f32 %v914, 0.0
      %v969 = vmax.f32 %v915, 0.0
      %v970 = vmax.f32 %v916, 0.0
      %v971 = vmax.f32 %v917, 0.0
      %v972 = vmax.f32 %v918, 0.0
      %v973 = vmax.f32 %v919, 0.0
      %v974 = vmax.f32 %v920, 0.0
      %v975 = vmax.f32 %v921, 0.0
      %v976 = vmax.f32 %v922, 0.0
      %v977 = vmax.f32 %v923, 0.0
      %v978 = vmax.f32 %v924, 0.0
      %v979 = vmax.f32 %v925, 0.0
      %v980 = vmax.f32 %v926, 0.0
      %v981 = vmax.f32 %v927, 0.0
      %v982 = vmax.f32 %v928, 0.0
      %v983 = vmax.f32 %v929, 0.0
      %v984 = vmax.f32 %v930, 0.0
      %v985 = vmax.f32 %v931, 0.0
      %v986 = vmax.f32 %v932, 0.0
      %v987 = vmax.f32 %v933, 0.0
      %v988 = vmax.f32 %v934, 0.0
      %v989 = vmax.f32 %v935, 0.0
      %v990 = vmax.f32 %v936, 0.0
      %v991 = vmax.f32 %v937, 0.0
      %v992 = vmax.f32 %v938, 0.0
      %v993 = vmax.f32 %v939, 0.0
      %v994 = vmax.f32 %v940, 0.0
      %v995 = vmax.f32 %v941, 0.0
      %v996 = vmax.f32 %v942, 0.0
      %v997 = vmax.f32 %v943, 0.0
      %v998 = vmax.f32 %v944, 0.0
      %v999 = vmax.f32 %v945, 0.0
      %v1000 = vmax.f32 %v946, 0.0
      %v1001 = vmax.f32 %v947, 0.0
      %v1002 = vmax.f32 %v948, 0.0
      %v1003 = vmax.f32 %v949, 0.0
      %v1004 = vmax.f32 %v950, 0.0
      %v1005 = vmax.f32 %v951, 0.0
      %v1006 = vmax.f32 %v952, 0.0
      %v1007 = vmax.f32 %v953, 0.0
      %v1008 = vlaneseq
      %v1009 = vshrl.u32 %v1008, 7
      %v1010 = vadd.s32 %v1009, 8
      %v1011 = vadd.s32 %v1009, 16
      %vm1012 = vcmp.ge.s32.totalorder %v1009, 1
      %vm1013 = vcmp.ge.s32.totalorder %v1010, 1
      %vm1014 = vcmp.ge.s32.totalorder %v1011, 1
      %vm1015 = vmand 0, %vm1012
      %vm1016 = vmand 0, %vm1013
      %vm1017 = vmand 0, %vm1014
      %vm1018 = vmand 1, %vm1012
      %vm1019 = vmand 1, %vm1013
      %vm1020 = vmand 1, %vm1014
      %vm1021 = vcmp.lt.s32.totalorder %v1009, 17
      %vm1022 = vcmp.lt.s32.totalorder %v1010, 17
      %vm1023 = vcmp.lt.s32.totalorder %v1011, 17
      %vm1024 = vmand %vm1015, %vm1021
      %vm1025 = vmand %vm1016, %vm1022
      %vm1026 = vmand %vm1017, %vm1023
      %vm1027 = vmand %vm1018, %vm1021
      %vm1028 = vmand %vm1019, %vm1022
      %vm1029 = vmand %vm1020, %vm1023
      %v1030 = vsel %vm1024, %v954, 0.0
      %v1031 = vsel %vm1025, %v955, 0.0
      %v1032 = vsel %vm1026, %v956, 0.0
      %v1033 = vsel %vm1027, %v957, 0.0
      %v1034 = vsel %vm1028, %v958, 0.0
      %v1035 = vsel %vm1029, %v959, 0.0
      %v1036 = vsel %vm1027, %v960, 0.0
      %v1037 = vsel %vm1028, %v961, 0.0
      %v1038 = vsel %vm1029, %v962, 0.0
      %v1039 = vsel %vm1027, %v963, 0.0
      %v1040 = vsel %vm1028, %v964, 0.0
      %v1041 = vsel %vm1029, %v965, 0.0
      %v1042 = vsel %vm1027, %v966, 0.0
      %v1043 = vsel %vm1028, %v967, 0.0
      %v1044 = vsel %vm1029, %v968, 0.0
      %v1045 = vsel %vm1027, %v969, 0.0
      %v1046 = vsel %vm1028, %v970, 0.0
      %v1047 = vsel %vm1029, %v971, 0.0
      %v1048 = vsel %vm1027, %v972, 0.0
      %v1049 = vsel %vm1028, %v973, 0.0
      %v1050 = vsel %vm1029, %v974, 0.0
      %v1051 = vsel %vm1027, %v975, 0.0
      %v1052 = vsel %vm1028, %v976, 0.0
      %v1053 = vsel %vm1029, %v977, 0.0
      %v1054 = vsel %vm1027, %v978, 0.0
      %v1055 = vsel %vm1028, %v979, 0.0
      %v1056 = vsel %vm1029, %v980, 0.0
      %v1057 = vsel %vm1027, %v981, 0.0
      %v1058 = vsel %vm1028, %v982, 0.0
      %v1059 = vsel %vm1029, %v983, 0.0
      %v1060 = vsel %vm1027, %v984, 0.0
      %v1061 = vsel %vm1028, %v985, 0.0
      %v1062 = vsel %vm1029, %v986, 0.0
      %v1063 = vsel %vm1027, %v987, 0.0
      %v1064 = vsel %vm1028, %v988, 0.0
      %v1065 = vsel %vm1029, %v989, 0.0
      %v1066 = vsel %vm1027, %v990, 0.0
      %v1067 = vsel %vm1028, %v991, 0.0
      %v1068 = vsel %vm1029, %v992, 0.0
      %v1069 = vsel %vm1027, %v993, 0.0
      %v1070 = vsel %vm1028, %v994, 0.0
      %v1071 = vsel %vm1029, %v995, 0.0
      %v1072 = vsel %vm1027, %v996, 0.0
      %v1073 = vsel %vm1028, %v997, 0.0
      %v1074 = vsel %vm1029, %v998, 0.0
      %v1075 = vsel %vm1027, %v999, 0.0
      %v1076 = vsel %vm1028, %v1000, 0.0
      %v1077 = vsel %vm1029, %v1001, 0.0
      %v1078 = vsel %vm1027, %v1002, 0.0
      %v1079 = vsel %vm1028, %v1003, 0.0
      %v1080 = vsel %vm1029, %v1004, 0.0
      %v1081 = vsel %vm1024, %v1005, 0.0
      %v1082 = vsel %vm1025, %v1006, 0.0
      %v1083 = vsel %vm1026, %v1007, 0.0
      %v1084 = vpack.c.bf16 %v1031, %v1030
      %v1085 = vpack.c.bf16 %v1034, %v1033
      %v1086 = vpack.c.bf16 %v1037, %v1036
      %v1087 = vpack.c.bf16 %v1040, %v1039
      %v1088 = vpack.c.bf16 %v1043, %v1042
      %v1089 = vpack.c.bf16 %v1046, %v1045
      %v1090 = vpack.c.bf16 %v1049, %v1048
      %v1091 = vpack.c.bf16 %v1052, %v1051
      %v1092 = vpack.c.bf16 %v1055, %v1054
      %v1093 = vpack.c.bf16 %v1058, %v1057
      %v1094 = vpack.c.bf16 %v1061, %v1060
      %v1095 = vpack.c.bf16 %v1064, %v1063
      %v1096 = vpack.c.bf16 %v1067, %v1066
      %v1097 = vpack.c.bf16 %v1070, %v1069
      %v1098 = vpack.c.bf16 %v1073, %v1072
      %v1099 = vpack.c.bf16 %v1076, %v1075
      %v1100 = vld [vmem:[%s4] sm:$0xf]
      %vm1149 = vcmask 1046528
      %v1150 = vrot.slane %v1030, 1
      %v1151 = vrot.slane %v1031, 1
      %v1152 = vsel %vm1149, %v1150, %v1151
      %v1153 = vrot.slane %v1032, 1
      %v1154 = vsel %vm1149, %v1151, %v1153
      %v1155 = vrot.slane %v1033, 1
      %v1156 = vrot.slane %v1034, 1
      %v1157 = vsel %vm1149, %v1155, %v1156
      %v1158 = vrot.slane %v1035, 1
      %v1159 = vsel %vm1149, %v1156, %v1158
      %v1160 = vrot.slane %v1036, 1
      %v1161 = vrot.slane %v1037, 1
      %v1162 = vsel %vm1149, %v1160, %v1161
      %v1163 = vrot.slane %v1038, 1
      %v1164 = vsel %vm1149, %v1161, %v1163
      %v1165 = vrot.slane %v1039, 1
      %v1166 = vrot.slane %v1040, 1
      %v1167 = vsel %vm1149, %v1165, %v1166
      %v1168 = vrot.slane %v1041, 1
      %v1169 = vsel %vm1149, %v1166, %v1168
      %v1170 = vrot.slane %v1042, 1
      %v1171 = vrot.slane %v1043, 1
      %v1172 = vsel %vm1149, %v1170, %v1171
      %v1173 = vrot.slane %v1044, 1
      %v1174 = vsel %vm1149, %v1171, %v1173
      %v1175 = vrot.slane %v1045, 1
      %v1176 = vrot.slane %v1046, 1
      %v1177 = vsel %vm1149, %v1175, %v1176
      %v1178 = vrot.slane %v1047, 1
      %v1179 = vsel %vm1149, %v1176, %v1178
      %v1180 = vrot.slane %v1048, 1
      %v1181 = vrot.slane %v1049, 1
      %v1182 = vsel %vm1149, %v1180, %v1181
      %v1183 = vrot.slane %v1050, 1
      %v1184 = vsel %vm1149, %v1181, %v1183
      %v1185 = vrot.slane %v1051, 1
      %v1186 = vrot.slane %v1052, 1
      %v1187 = vsel %vm1149, %v1185, %v1186
      %v1188 = vrot.slane %v1053, 1
      %v1189 = vsel %vm1149, %v1186, %v1188
      %v1190 = vrot.slane %v1054, 1
      %v1191 = vrot.slane %v1055, 1
      %v1192 = vsel %vm1149, %v1190, %v1191
      %v1193 = vrot.slane %v1056, 1
      %v1194 = vsel %vm1149, %v1191, %v1193
      %v1195 = vrot.slane %v1057, 1
      %v1196 = vrot.slane %v1058, 1
      %v1197 = vsel %vm1149, %v1195, %v1196
      %v1198 = vrot.slane %v1059, 1
      %v1199 = vsel %vm1149, %v1196, %v1198
      %v1200 = vrot.slane %v1060, 1
      %v1201 = vrot.slane %v1061, 1
      %v1202 = vsel %vm1149, %v1200, %v1201
      %v1203 = vrot.slane %v1062, 1
      %v1204 = vsel %vm1149, %v1201, %v1203
      %v1205 = vrot.slane %v1063, 1
      %v1206 = vrot.slane %v1064, 1
      %v1207 = vsel %vm1149, %v1205, %v1206
      %v1208 = vrot.slane %v1065, 1
      %v1209 = vsel %vm1149, %v1206, %v1208
      %v1210 = vrot.slane %v1066, 1
      %v1211 = vrot.slane %v1067, 1
      %v1212 = vsel %vm1149, %v1210, %v1211
      %v1213 = vrot.slane %v1068, 1
      %v1214 = vsel %vm1149, %v1211, %v1213
      %v1215 = vrot.slane %v1069, 1
      %v1216 = vrot.slane %v1070, 1
      %v1217 = vsel %vm1149, %v1215, %v1216
      %v1218 = vrot.slane %v1071, 1
      %v1219 = vsel %vm1149, %v1216, %v1218
      %v1220 = vrot.slane %v1072, 1
      %v1221 = vrot.slane %v1073, 1
      %v1222 = vsel %vm1149, %v1220, %v1221
      %v1223 = vrot.slane %v1074, 1
      %v1224 = vsel %vm1149, %v1221, %v1223
      %v1225 = vrot.slane %v1075, 1
      %v1226 = vrot.slane %v1076, 1
      %v1227 = vsel %vm1149, %v1225, %v1226
      %v1228 = vrot.slane %v1077, 1
      %v1229 = vsel %vm1149, %v1226, %v1228
      %v1262 = vpack.c.bf16 %v1154, %v1152
      %v1263 = vpack.c.bf16 %v1159, %v1157
      %v1264 = vpack.c.bf16 %v1164, %v1162
      %v1265 = vpack.c.bf16 %v1169, %v1167
      %v1266 = vpack.c.bf16 %v1174, %v1172
      %v1267 = vpack.c.bf16 %v1179, %v1177
      %v1268 = vpack.c.bf16 %v1184, %v1182
      %v1269 = vpack.c.bf16 %v1189, %v1187
      %v1270 = vpack.c.bf16 %v1194, %v1192
      %v1271 = vpack.c.bf16 %v1199, %v1197
      %v1272 = vpack.c.bf16 %v1204, %v1202
      %v1273 = vpack.c.bf16 %v1209, %v1207
      %v1274 = vpack.c.bf16 %v1214, %v1212
      %v1275 = vpack.c.bf16 %v1219, %v1217
      %v1276 = vpack.c.bf16 %v1224, %v1222
      %v1277 = vpack.c.bf16 %v1229, %v1227
      %s1278 = scalar_lea.vmem %s4, 4
      %v1279 = vld [vmem:[%s1278] sm:$0xf]
      %v1281 = vsel %vm497, %v1262, 0
      %v1284 = vsel %vm497, %v1263, 0
      %v1287 = vsel %vm497, %v1264, 0
      %v1290 = vsel %vm497, %v1265, 0
      %v1293 = vsel %vm497, %v1266, 0
      %v1296 = vsel %vm497, %v1267, 0
      %v1299 = vsel %vm497, %v1268, 0
      %v1302 = vsel %vm497, %v1269, 0
      %v1305 = vsel %vm497, %v1270, 0
      %v1308 = vsel %vm497, %v1271, 0
      %v1311 = vsel %vm497, %v1272, 0
      %v1314 = vsel %vm497, %v1273, 0
      %v1317 = vsel %vm497, %v1274, 0
      %v1320 = vsel %vm497, %v1275, 0
      %v1323 = vsel %vm497, %v1276, 0
      %v1326 = vsel %vm497, %v1277, 0
      %v1329 = vsel %vm579, %v1279, 0
      %1331 = vmatprep.subr.bf16.mxu0 0
      %1332 = vmatpush1.bf16.msra.mxu0 %v1329
      %1333 = vmatprep.subr.bf16.mxu0 0
      %1334 = vmatpush1.bf16.msra.mxu0 0
      %1335 = vmatprep.subr.bf16.mxu0 0
      %1336 = vmatpush1.bf16.msra.mxu0 0
      %1337 = vmatprep.subr.bf16.mxu0 0
      %1338 = vmatpush1.bf16.msra.mxu0 0
      %1339 = vmatprep.subr.bf16.mxu0 0
      %1340 = vmatpush1.bf16.msra.mxu0 0
      %1341 = vmatprep.subr.bf16.mxu0 0
      %1342 = vmatpush1.bf16.msra.mxu0 0
      %1343 = vmatprep.subr.bf16.mxu0 0
      %1344 = vmatpush1.bf16.msra.mxu0 0
      %1345 = vmatprep.subr.bf16.mxu0 0
      %1346 = vmatpush1.bf16.msra.mxu0 0
      %1347 = vmatprep.subr.bf16.mxu0 0
      %1348 = vmatpush1.bf16.msra.mxu0 0
      %1349 = vmatprep.subr.bf16.mxu0 0
      %1350 = vmatpush1.bf16.msra.mxu0 0
      %1351 = vmatprep.subr.bf16.mxu0 0
      %1352 = vmatpush1.bf16.msra.mxu0 0
      %1353 = vmatprep.subr.bf16.mxu0 0
      %1354 = vmatpush1.bf16.msra.mxu0 0
      %1355 = vmatprep.subr.bf16.mxu0 0
      %1356 = vmatpush1.bf16.msra.mxu0 0
      %1357 = vmatprep.subr.bf16.mxu0 0
      %1358 = vmatpush1.bf16.msra.mxu0 0
      %1359 = vmatprep.subr.bf16.mxu0 0
      %1360 = vmatpush1.bf16.msra.mxu0 0
      %1361 = vmatprep.subr.bf16.mxu0 0
      %1362 = vmatpush1.bf16.msra.mxu0 0
      %1363 = vmatprep.mubr.bf16.mxu0 0
      %1364 = vmatmul.mubr.bf16.gmra.mrb[0].mxu0 %v1281
      %v1365 = vpop.f32.mrb[0].mxu0
      %v1366 = vadd.f32 0.0, %v1365
      %v1367 = vpop.f32.mrb[0].mxu0
      %v1368 = vpop.f32.mrb[0].mxu0
      %v1369 = vadd.f32 0.0, %v1368
      %v1370 = vpop.f32.mrb[0].mxu0
      %1371 = vmatprep.mubr.bf16.mxu0 0
      %1372 = vmatmul.mubr.bf16.gmra.mrb[0].mxu0 %v1284
      %v1373 = vpop.f32.mrb[0].mxu0
      %v1374 = vadd.f32 0.0, %v1373
      %v1375 = vpop.f32.mrb[0].mxu0
      %v1376 = vpop.f32.mrb[0].mxu0
      %v1377 = vadd.f32 0.0, %v1376
      %v1378 = vpop.f32.mrb[0].mxu0
      %1379 = vmatprep.mubr.bf16.mxu0 0
      %1380 = vmatmul.mubr.bf16.gmra.mrb[0].mxu0 %v1287
      %v1381 = vpop.f32.mrb[0].mxu0
      %v1382 = vadd.f32 0.0, %v1381
      %v1383 = vpop.f32.mrb[0].mxu0
      %v1384 = vpop.f32.mrb[0].mxu0
      %v1385 = vadd.f32 0.0, %v1384
      %v1386 = vpop.f32.mrb[0].mxu0
      %1387 = vmatprep.mubr.bf16.mxu0 0
      %1388 = vmatmul.mubr.bf16.gmra.mrb[0].mxu0 %v1290
      %v1389 = vpop.f32.mrb[0].mxu0
      %v1390 = vadd.f32 0.0, %v1389
      %v1391 = vpop.f32.mrb[0].mxu0
      %v1392 = vpop.f32.mrb[0].mxu0
      %v1393 = vadd.f32 0.0, %v1392
      %v1394 = vpop.f32.mrb[0].mxu0
      %1395 = vmatprep.mubr.bf16.mxu0 0
      %1396 = vmatmul.mubr.bf16.gmra.mrb[0].mxu0 %v1293
      %v1397 = vpop.f32.mrb[0].mxu0
      %v1398 = vadd.f32 0.0, %v1397
      %v1399 = vpop.f32.mrb[0].mxu0
      %v1400 = vpop.f32.mrb[0].mxu0
      %v1401 = vadd.f32 0.0, %v1400
      %v1402 = vpop.f32.mrb[0].mxu0
      %1403 = vmatprep.mubr.bf16.mxu0 0
      %1404 = vmatmul.mubr.bf16.gmra.mrb[0].mxu0 %v1296
      %v1405 = vpop.f32.mrb[0].mxu0
      %v1406 = vadd.f32 0.0, %v1405
      %v1407 = vpop.f32.mrb[0].mxu0
      %v1408 = vpop.f32.mrb[0].mxu0
      %v1409 = vadd.f32 0.0, %v1408
      %v1410 = vpop.f32.mrb[0].mxu0
      %1411 = vmatprep.mubr.bf16.mxu0 0
      %1412 = vmatmul.mubr.bf16.gmra.mrb[0].mxu0 %v1299
      %v1413 = vpop.f32.mrb[0].mxu0
      %v1414 = vadd.f32 0.0, %v1413
      %v1415 = vpop.f32.mrb[0].mxu0
      %v1416 = vpop.f32.mrb[0].mxu0
      %v1417 = vadd.f32 0.0, %v1416
      %v1418 = vpop.f32.mrb[0].mxu0
      %1419 = vmatprep.mubr.bf16.mxu0 0
      %1420 = vmatmul.mubr.bf16.gmra.mrb[0].mxu0 %v1302
      %v1421 = vpop.f32.mrb[0].mxu0
      %v1422 = vadd.f32 0.0, %v1421
      %v1423 = vpop.f32.mrb[0].mxu0
      %v1424 = vpop.f32.mrb[0].mxu0
      %v1425 = vadd.f32 0.0, %v1424
      %v1426 = vpop.f32.mrb[0].mxu0
      %1427 = vmatprep.mubr.bf16.mxu0 0
      %1428 = vmatmul.mubr.bf16.gmra.mrb[0].mxu0 %v1305
      %v1429 = vpop.f32.mrb[0].mxu0
      %v1430 = vadd.f32 0.0, %v1429
      %v1431 = vpop.f32.mrb[0].mxu0
      %v1432 = vpop.f32.mrb[0].mxu0
      %v1433 = vadd.f32 0.0, %v1432
      %v1434 = vpop.f32.mrb[0].mxu0
      %1435 = vmatprep.mubr.bf16.mxu0 0
      %1436 = vmatmul.mubr.bf16.gmra.mrb[0].mxu0 %v1308
      %v1437 = vpop.f32.mrb[0].mxu0
      %v1438 = vadd.f32 0.0, %v1437
      %v1439 = vpop.f32.mrb[0].mxu0
      %v1440 = vpop.f32.mrb[0].mxu0
      %v1441 = vadd.f32 0.0, %v1440
      %v1442 = vpop.f32.mrb[0].mxu0
      %1443 = vmatprep.mubr.bf16.mxu0 0
      %1444 = vmatmul.mubr.bf16.gmra.mrb[0].mxu0 %v1311
      %v1445 = vpop.f32.mrb[0].mxu0
      %v1446 = vadd.f32 0.0, %v1445
      %v1447 = vpop.f32.mrb[0].mxu0
      %v1448 = vpop.f32.mrb[0].mxu0
      %v1449 = vadd.f32 0.0, %v1448
      %v1450 = vpop.f32.mrb[0].mxu0
      %1451 = vmatprep.mubr.bf16.mxu0 0
      %1452 = vmatmul.mubr.bf16.gmra.mrb[0].mxu0 %v1314
      %v1453 = vpop.f32.mrb[0].mxu0
      %v1454 = vadd.f32 0.0, %v1453
      %v1455 = vpop.f32.mrb[0].mxu0
      %v1456 = vpop.f32.mrb[0].mxu0
      %v1457 = vadd.f32 0.0, %v1456
      %v1458 = vpop.f32.mrb[0].mxu0
      %1459 = vmatprep.mubr.bf16.mxu0 0
      %1460 = vmatmul.mubr.bf16.gmra.mrb[0].mxu0 %v1317
      %v1461 = vpop.f32.mrb[0].mxu0
      %v1462 = vadd.f32 0.0, %v1461
      %v1463 = vpop.f32.mrb[0].mxu0
      %v1464 = vpop.f32.mrb[0].mxu0
      %v1465 = vadd.f32 0.0, %v1464
      %v1466 = vpop.f32.mrb[0].mxu0
      %1467 = vmatprep.mubr.bf16.mxu0 0
      %1468 = vmatmul.mubr.bf16.gmra.mrb[0].mxu0 %v1320
      %v1469 = vpop.f32.mrb[0].mxu0
      %v1470 = vadd.f32 0.0, %v1469
      %v1471 = vpop.f32.mrb[0].mxu0
      %v1472 = vpop.f32.mrb[0].mxu0
      %v1473 = vadd.f32 0.0, %v1472
      %v1474 = vpop.f32.mrb[0].mxu0
      %1475 = vmatprep.mubr.bf16.mxu0 0
      %1476 = vmatmul.mubr.bf16.gmra.mrb[0].mxu0 %v1323
      %v1477 = vpop.f32.mrb[0].mxu0
      %v1478 = vadd.f32 0.0, %v1477
      %v1479 = vpop.f32.mrb[0].mxu0
      %v1480 = vpop.f32.mrb[0].mxu0
      %v1481 = vadd.f32 0.0, %v1480
      %v1482 = vpop.f32.mrb[0].mxu0
      %1483 = vmatprep.mubr.bf16.mxu0 0
      %1484 = vmatmul.mubr.bf16.gmra.mrb[0].mxu0 %v1326
      %v1485 = vpop.f32.mrb[0].mxu0
      %v1486 = vadd.f32 0.0, %v1485
      %v1487 = vpop.f32.mrb[0].mxu0
      %v1488 = vpop.f32.mrb[0].mxu0
      %v1489 = vadd.f32 0.0, %v1488
      %v1490 = vpop.f32.mrb[0].mxu0
      %1491 = vdwg.mxu0
      %v1493 = vsel %vm497, %v1084, 0
      %v1496 = vsel %vm497, %v1085, 0
      %v1499 = vsel %vm497, %v1086, 0
      %v1502 = vsel %vm497, %v1087, 0
      %v1505 = vsel %vm497, %v1088, 0
      %v1508 = vsel %vm497, %v1089, 0
      %v1511 = vsel %vm497, %v1090, 0
      %v1514 = vsel %vm497, %v1091, 0
      %v1517 = vsel %vm497, %v1092, 0
      %v1520 = vsel %vm497, %v1093, 0
      %v1523 = vsel %vm497, %v1094, 0
      %v1526 = vsel %vm497, %v1095, 0
      %v1529 = vsel %vm497, %v1096, 0
      %v1532 = vsel %vm497, %v1097, 0
      %v1535 = vsel %vm497, %v1098, 0
      %v1538 = vsel %vm497, %v1099, 0
      %v1541 = vsel %vm579, %v1100, 0
      %1543 = vmatprep.subr.bf16.mxu0 0
      %1544 = vmatpush1.bf16.msra.mxu0 %v1541
      %1545 = vmatprep.subr.bf16.mxu0 0
      %1546 = vmatpush1.bf16.msra.mxu0 0
      %1547 = vmatprep.subr.bf16.mxu0 0
      %1548 = vmatpush1.bf16.msra.mxu0 0
      %1549 = vmatprep.subr.bf16.mxu0 0
      %1550 = vmatpush1.bf16.msra.mxu0 0
      %1551 = vmatprep.subr.bf16.mxu0 0
      %1552 = vmatpush1.bf16.msra.mxu0 0
      %1553 = vmatprep.subr.bf16.mxu0 0
      %1554 = vmatpush1.bf16.msra.mxu0 0
      %1555 = vmatprep.subr.bf16.mxu0 0
      %1556 = vmatpush1.bf16.msra.mxu0 0
      %1557 = vmatprep.subr.bf16.mxu0 0
      %1558 = vmatpush1.bf16.msra.mxu0 0
      %1559 = vmatprep.subr.bf16.mxu0 0
      %1560 = vmatpush1.bf16.msra.mxu0 0
      %1561 = vmatprep.subr.bf16.mxu0 0
      %1562 = vmatpush1.bf16.msra.mxu0 0
      %1563 = vmatprep.subr.bf16.mxu0 0
      %1564 = vmatpush1.bf16.msra.mxu0 0
      %1565 = vmatprep.subr.bf16.mxu0 0
      %1566 = vmatpush1.bf16.msra.mxu0 0
      %1567 = vmatprep.subr.bf16.mxu0 0
      %1568 = vmatpush1.bf16.msra.mxu0 0
      %1569 = vmatprep.subr.bf16.mxu0 0
      %1570 = vmatpush1.bf16.msra.mxu0 0
      %1571 = vmatprep.subr.bf16.mxu0 0
      %1572 = vmatpush1.bf16.msra.mxu0 0
      %1573 = vmatprep.subr.bf16.mxu0 0
      %1574 = vmatpush1.bf16.msra.mxu0 0
      %1575 = vmatprep.mubr.bf16.mxu0 0
      %1576 = vmatmul.mubr.bf16.gmra.mrb[0].mxu0 %v1493
      %v1577 = vpop.f32.mrb[0].mxu0
      %v1578 = vadd.f32 %v1366, %v1577
      %v1579 = vpop.f32.mrb[0].mxu0
      %v1580 = vpop.f32.mrb[0].mxu0
      %v1581 = vadd.f32 %v1369, %v1580
      %v1582 = vpop.f32.mrb[0].mxu0
      %1583 = vmatprep.mubr.bf16.mxu0 0
      %1584 = vmatmul.mubr.bf16.gmra.mrb[0].mxu0 %v1496
      %v1585 = vpop.f32.mrb[0].mxu0
      %v1586 = vadd.f32 %v1374, %v1585
      %v1587 = vpop.f32.mrb[0].mxu0
      %v1588 = vpop.f32.mrb[0].mxu0
      %v1589 = vadd.f32 %v1377, %v1588
      %v1590 = vpop.f32.mrb[0].mxu0
      %1591 = vmatprep.mubr.bf16.mxu0 0
      %1592 = vmatmul.mubr.bf16.gmra.mrb[0].mxu0 %v1499
      %v1593 = vpop.f32.mrb[0].mxu0
      %v1594 = vadd.f32 %v1382, %v1593
      %v1595 = vpop.f32.mrb[0].mxu0
      %v1596 = vpop.f32.mrb[0].mxu0
      %v1597 = vadd.f32 %v1385, %v1596
      %v1598 = vpop.f32.mrb[0].mxu0
      %1599 = vmatprep.mubr.bf16.mxu0 0
      %1600 = vmatmul.mubr.bf16.gmra.mrb[0].mxu0 %v1502
      %v1601 = vpop.f32.mrb[0].mxu0
      %v1602 = vadd.f32 %v1390, %v1601
      %v1603 = vpop.f32.mrb[0].mxu0
      %v1604 = vpop.f32.mrb[0].mxu0
      %v1605 = vadd.f32 %v1393, %v1604
      %v1606 = vpop.f32.mrb[0].mxu0
      %1607 = vmatprep.mubr.bf16.mxu0 0
      %1608 = vmatmul.mubr.bf16.gmra.mrb[0].mxu0 %v1505
      %v1609 = vpop.f32.mrb[0].mxu0
      %v1610 = vadd.f32 %v1398, %v1609
      %v1611 = vpop.f32.mrb[0].mxu0
      %v1612 = vpop.f32.mrb[0].mxu0
      %v1613 = vadd.f32 %v1401, %v1612
      %v1614 = vpop.f32.mrb[0].mxu0
      %1615 = vmatprep.mubr.bf16.mxu0 0
      %1616 = vmatmul.mubr.bf16.gmra.mrb[0].mxu0 %v1508
      %v1617 = vpop.f32.mrb[0].mxu0
      %v1618 = vadd.f32 %v1406, %v1617
      %v1619 = vpop.f32.mrb[0].mxu0
      %v1620 = vpop.f32.mrb[0].mxu0
      %v1621 = vadd.f32 %v1409, %v1620
      %v1622 = vpop.f32.mrb[0].mxu0
      %1623 = vmatprep.mubr.bf16.mxu0 0
      %1624 = vmatmul.mubr.bf16.gmra.mrb[0].mxu0 %v1511
      %v1625 = vpop.f32.mrb[0].mxu0
      %v1626 = vadd.f32 %v1414, %v1625
      %v1627 = vpop.f32.mrb[0].mxu0
      %v1628 = vpop.f32.mrb[0].mxu0
      %v1629 = vadd.f32 %v1417, %v1628
      %v1630 = vpop.f32.mrb[0].mxu0
      %1631 = vmatprep.mubr.bf16.mxu0 0
      %1632 = vmatmul.mubr.bf16.gmra.mrb[0].mxu0 %v1514
      %v1633 = vpop.f32.mrb[0].mxu0
      %v1634 = vadd.f32 %v1422, %v1633
      %v1635 = vpop.f32.mrb[0].mxu0
      %v1636 = vpop.f32.mrb[0].mxu0
      %v1637 = vadd.f32 %v1425, %v1636
      %v1638 = vpop.f32.mrb[0].mxu0
      %1639 = vmatprep.mubr.bf16.mxu0 0
      %1640 = vmatmul.mubr.bf16.gmra.mrb[0].mxu0 %v1517
      %v1641 = vpop.f32.mrb[0].mxu0
      %v1642 = vadd.f32 %v1430, %v1641
      %v1643 = vpop.f32.mrb[0].mxu0
      %v1644 = vpop.f32.mrb[0].mxu0
      %v1645 = vadd.f32 %v1433, %v1644
      %v1646 = vpop.f32.mrb[0].mxu0
      %1647 = vmatprep.mubr.bf16.mxu0 0
      %1648 = vmatmul.mubr.bf16.gmra.mrb[0].mxu0 %v1520
      %v1649 = vpop.f32.mrb[0].mxu0
      %v1650 = vadd.f32 %v1438, %v1649
      %v1651 = vpop.f32.mrb[0].mxu0
      %v1652 = vpop.f32.mrb[0].mxu0
      %v1653 = vadd.f32 %v1441, %v1652
      %v1654 = vpop.f32.mrb[0].mxu0
      %1655 = vmatprep.mubr.bf16.mxu0 0
      %1656 = vmatmul.mubr.bf16.gmra.mrb[0].mxu0 %v1523
      %v1657 = vpop.f32.mrb[0].mxu0
      %v1658 = vadd.f32 %v1446, %v1657
      %v1659 = vpop.f32.mrb[0].mxu0
      %v1660 = vpop.f32.mrb[0].mxu0
      %v1661 = vadd.f32 %v1449, %v1660
      %v1662 = vpop.f32.mrb[0].mxu0
      %1663 = vmatprep.mubr.bf16.mxu0 0
      %1664 = vmatmul.mubr.bf16.gmra.mrb[0].mxu0 %v1526
      %v1665 = vpop.f32.mrb[0].mxu0
      %v1666 = vadd.f32 %v1454, %v1665
      %v1667 = vpop.f32.mrb[0].mxu0
      %v1668 = vpop.f32.mrb[0].mxu0
      %v1669 = vadd.f32 %v1457, %v1668
      %v1670 = vpop.f32.mrb[0].mxu0
      %1671 = vmatprep.mubr.bf16.mxu0 0
      %1672 = vmatmul.mubr.bf16.gmra.mrb[0].mxu0 %v1529
      %v1673 = vpop.f32.mrb[0].mxu0
      %v1674 = vadd.f32 %v1462, %v1673
      %v1675 = vpop.f32.mrb[0].mxu0
      %v1676 = vpop.f32.mrb[0].mxu0
      %v1677 = vadd.f32 %v1465, %v1676
      %v1678 = vpop.f32.mrb[0].mxu0
      %1679 = vmatprep.mubr.bf16.mxu0 0
      %1680 = vmatmul.mubr.bf16.gmra.mrb[0].mxu0 %v1532
      %v1681 = vpop.f32.mrb[0].mxu0
      %v1682 = vadd.f32 %v1470, %v1681
      %v1683 = vpop.f32.mrb[0].mxu0
      %v1684 = vpop.f32.mrb[0].mxu0
      %v1685 = vadd.f32 %v1473, %v1684
      %v1686 = vpop.f32.mrb[0].mxu0
      %1687 = vmatprep.mubr.bf16.mxu0 0
      %1688 = vmatmul.mubr.bf16.gmra.mrb[0].mxu0 %v1535
      %v1689 = vpop.f32.mrb[0].mxu0
      %v1690 = vadd.f32 %v1478, %v1689
      %v1691 = vpop.f32.mrb[0].mxu0
      %v1692 = vpop.f32.mrb[0].mxu0
      %v1693 = vadd.f32 %v1481, %v1692
      %v1694 = vpop.f32.mrb[0].mxu0
      %1695 = vmatprep.mubr.bf16.mxu0 0
      %1696 = vmatmul.mubr.bf16.gmra.mrb[0].mxu0 %v1538
      %v1697 = vpop.f32.mrb[0].mxu0
      %v1698 = vadd.f32 %v1486, %v1697
      %v1699 = vpop.f32.mrb[0].mxu0
      %v1700 = vpop.f32.mrb[0].mxu0
      %v1701 = vadd.f32 %v1489, %v1700
      %v1702 = vpop.f32.mrb[0].mxu0
      %1703 = vdwg.mxu0
      %vm1704 = vcmask 1045504
      %v1705 = vrot.slane %v1030, 2
      %v1706 = vrot.slane %v1031, 2
      %v1707 = vsel %vm1704, %v1705, %v1706
      %v1708 = vrot.slane %v1032, 2
      %v1709 = vsel %vm1704, %v1706, %v1708
      %v1710 = vrot.slane %v1033, 2
      %v1711 = vrot.slane %v1034, 2
      %v1712 = vsel %vm1704, %v1710, %v1711
      %v1713 = vrot.slane %v1035, 2
      %v1714 = vsel %vm1704, %v1711, %v1713
      %v1715 = vrot.slane %v1036, 2
      %v1716 = vrot.slane %v1037, 2
      %v1717 = vsel %vm1704, %v1715, %v1716
      %v1718 = vrot.slane %v1038, 2
      %v1719 = vsel %vm1704, %v1716, %v1718
      %v1720 = vrot.slane %v1039, 2
      %v1721 = vrot.slane %v1040, 2
      %v1722 = vsel %vm1704, %v1720, %v1721
      %v1723 = vrot.slane %v1041, 2
      %v1724 = vsel %vm1704, %v1721, %v1723
      %v1725 = vrot.slane %v1042, 2
      %v1726 = vrot.slane %v1043, 2
      %v1727 = vsel %vm1704, %v1725, %v1726
      %v1728 = vrot.slane %v1044, 2
      %v1729 = vsel %vm1704, %v1726, %v1728
      %v1730 = vrot.slane %v1045, 2
      %v1731 = vrot.slane %v1046, 2
      %v1732 = vsel %vm1704, %v1730, %v1731
      %v1733 = vrot.slane %v1047, 2
      %v1734 = vsel %vm1704, %v1731, %v1733
      %v1735 = vrot.slane %v1048, 2
      %v1736 = vrot.slane %v1049, 2
      %v1737 = vsel %vm1704, %v1735, %v1736
      %v1738 = vrot.slane %v1050, 2
      %v1739 = vsel %vm1704, %v1736, %v1738
      %v1740 = vrot.slane %v1051, 2
      %v1741 = vrot.slane %v1052, 2
      %v1742 = vsel %vm1704, %v1740, %v1741
      %v1743 = vrot.slane %v1053, 2
      %v1744 = vsel %vm1704, %v1741, %v1743
      %v1745 = vrot.slane %v1054, 2
      %v1746 = vrot.slane %v1055, 2
      %v1747 = vsel %vm1704, %v1745, %v1746
      %v1748 = vrot.slane %v1056, 2
      %v1749 = vsel %vm1704, %v1746, %v1748
      %v1750 = vrot.slane %v1057, 2
      %v1751 = vrot.slane %v1058, 2
      %v1752 = vsel %vm1704, %v1750, %v1751
      %v1753 = vrot.slane %v1059, 2
      %v1754 = vsel %vm1704, %v1751, %v1753
      %v1755 = vrot.slane %v1060, 2
      %v1756 = vrot.slane %v1061, 2
      %v1757 = vsel %vm1704, %v1755, %v1756
      %v1758 = vrot.slane %v1062, 2
      %v1759 = vsel %vm1704, %v1756, %v1758
      %v1760 = vrot.slane %v1063, 2
      %v1761 = vrot.slane %v1064, 2
      %v1762 = vsel %vm1704, %v1760, %v1761
      %v1763 = vrot.slane %v1065, 2
      %v1764 = vsel %vm1704, %v1761, %v1763
      %v1765 = vrot.slane %v1066, 2
      %v1766 = vrot.slane %v1067, 2
      %v1767 = vsel %vm1704, %v1765, %v1766
      %v1768 = vrot.slane %v1068, 2
      %v1769 = vsel %vm1704, %v1766, %v1768
      %v1770 = vrot.slane %v1069, 2
      %v1771 = vrot.slane %v1070, 2
      %v1772 = vsel %vm1704, %v1770, %v1771
      %v1773 = vrot.slane %v1071, 2
      %v1774 = vsel %vm1704, %v1771, %v1773
      %v1775 = vrot.slane %v1072, 2
      %v1776 = vrot.slane %v1073, 2
      %v1777 = vsel %vm1704, %v1775, %v1776
      %v1778 = vrot.slane %v1074, 2
      %v1779 = vsel %vm1704, %v1776, %v1778
      %v1780 = vrot.slane %v1075, 2
      %v1781 = vrot.slane %v1076, 2
      %v1782 = vsel %vm1704, %v1780, %v1781
      %v1783 = vrot.slane %v1077, 2
      %v1784 = vsel %vm1704, %v1781, %v1783
      %v1817 = vpack.c.bf16 %v1709, %v1707
      %v1818 = vpack.c.bf16 %v1714, %v1712
      %v1819 = vpack.c.bf16 %v1719, %v1717
      %v1820 = vpack.c.bf16 %v1724, %v1722
      %v1821 = vpack.c.bf16 %v1729, %v1727
      %v1822 = vpack.c.bf16 %v1734, %v1732
      %v1823 = vpack.c.bf16 %v1739, %v1737
      %v1824 = vpack.c.bf16 %v1744, %v1742
      %v1825 = vpack.c.bf16 %v1749, %v1747
      %v1826 = vpack.c.bf16 %v1754, %v1752
      %v1827 = vpack.c.bf16 %v1759, %v1757
      %v1828 = vpack.c.bf16 %v1764, %v1762
      %v1829 = vpack.c.bf16 %v1769, %v1767
      %v1830 = vpack.c.bf16 %v1774, %v1772
      %v1831 = vpack.c.bf16 %v1779, %v1777
      %v1832 = vpack.c.bf16 %v1784, %v1782
      %s1833 = scalar_lea.vmem %s4, 8
      %v1834 = vld [vmem:[%s1833] sm:$0xf]
      %v1836 = vsel %vm497, %v1817, 0
      %v1839 = vsel %vm497, %v1818, 0
      %v1842 = vsel %vm497, %v1819, 0
      %v1845 = vsel %vm497, %v1820, 0
      %v1848 = vsel %vm497, %v1821, 0
      %v1851 = vsel %vm497, %v1822, 0
      %v1854 = vsel %vm497, %v1823, 0
      %v1857 = vsel %vm497, %v1824, 0
      %v1860 = vsel %vm497, %v1825, 0
      %v1863 = vsel %vm497, %v1826, 0
      %v1866 = vsel %vm497, %v1827, 0
      %v1869 = vsel %vm497, %v1828, 0
      %v1872 = vsel %vm497, %v1829, 0
      %v1875 = vsel %vm497, %v1830, 0
      %v1878 = vsel %vm497, %v1831, 0
      %v1881 = vsel %vm497, %v1832, 0
      %v1884 = vsel %vm579, %v1834, 0
      %1886 = vmatprep.subr.bf16.mxu0 0
      %1887 = vmatpush1.bf16.msra.mxu0 %v1884
      %1888 = vmatprep.subr.bf16.mxu0 0
      %1889 = vmatpush1.bf16.msra.mxu0 0
      %1890 = vmatprep.subr.bf16.mxu0 0
      %1891 = vmatpush1.bf16.msra.mxu0 0
      %1892 = vmatprep.subr.bf16.mxu0 0
      %1893 = vmatpush1.bf16.msra.mxu0 0
      %1894 = vmatprep.subr.bf16.mxu0 0
      %1895 = vmatpush1.bf16.msra.mxu0 0
      %1896 = vmatprep.subr.bf16.mxu0 0
      %1897 = vmatpush1.bf16.msra.mxu0 0
      %1898 = vmatprep.subr.bf16.mxu0 0
      %1899 = vmatpush1.bf16.msra.mxu0 0
      %1900 = vmatprep.subr.bf16.mxu0 0
      %1901 = vmatpush1.bf16.msra.mxu0 0
      %1902 = vmatprep.subr.bf16.mxu0 0
      %1903 = vmatpush1.bf16.msra.mxu0 0
      %1904 = vmatprep.subr.bf16.mxu0 0
      %1905 = vmatpush1.bf16.msra.mxu0 0
      %1906 = vmatprep.subr.bf16.mxu0 0
      %1907 = vmatpush1.bf16.msra.mxu0 0
      %1908 = vmatprep.subr.bf16.mxu0 0
      %1909 = vmatpush1.bf16.msra.mxu0 0
      %1910 = vmatprep.subr.bf16.mxu0 0
      %1911 = vmatpush1.bf16.msra.mxu0 0
      %1912 = vmatprep.subr.bf16.mxu0 0
      %1913 = vmatpush1.bf16.msra.mxu0 0
      %1914 = vmatprep.subr.bf16.mxu0 0
      %1915 = vmatpush1.bf16.msra.mxu0 0
      %1916 = vmatprep.subr.bf16.mxu0 0
      %1917 = vmatpush1.bf16.msra.mxu0 0
      %1918 = vmatprep.mubr.bf16.mxu0 0
      %1919 = vmatmul.mubr.bf16.gmra.mrb[0].mxu0 %v1836
      %v1920 = vpop.f32.mrb[0].mxu0
      %v1921 = vadd.f32 0.0, %v1920
      %v1922 = vpop.f32.mrb[0].mxu0
      %v1923 = vpop.f32.mrb[0].mxu0
      %v1924 = vadd.f32 0.0, %v1923
      %v1925 = vpop.f32.mrb[0].mxu0
      %1926 = vmatprep.mubr.bf16.mxu0 0
      %1927 = vmatmul.mubr.bf16.gmra.mrb[0].mxu0 %v1839
      %v1928 = vpop.f32.mrb[0].mxu0
      %v1929 = vadd.f32 0.0, %v1928
      %v1930 = vpop.f32.mrb[0].mxu0
      %v1931 = vpop.f32.mrb[0].mxu0
      %v1932 = vadd.f32 0.0, %v1931
      %v1933 = vpop.f32.mrb[0].mxu0
      %1934 = vmatprep.mubr.bf16.mxu0 0
      %1935 = vmatmul.mubr.bf16.gmra.mrb[0].mxu0 %v1842
      %v1936 = vpop.f32.mrb[0].mxu0
      %v1937 = vadd.f32 0.0, %v1936
      %v1938 = vpop.f32.mrb[0].mxu0
      %v1939 = vpop.f32.mrb[0].mxu0
      %v1940 = vadd.f32 0.0, %v1939
      %v1941 = vpop.f32.mrb[0].mxu0
      %1942 = vmatprep.mubr.bf16.mxu0 0
      %1943 = vmatmul.mubr.bf16.gmra.mrb[0].mxu0 %v1845
      %v1944 = vpop.f32.mrb[0].mxu0
      %v1945 = vadd.f32 0.0, %v1944
      %v1946 = vpop.f32.mrb[0].mxu0
      %v1947 = vpop.f32.mrb[0].mxu0
      %v1948 = vadd.f32 0.0, %v1947
      %v1949 = vpop.f32.mrb[0].mxu0
      %1950 = vmatprep.mubr.bf16.mxu0 0
      %1951 = vmatmul.mubr.bf16.gmra.mrb[0].mxu0 %v1848
      %v1952 = vpop.f32.mrb[0].mxu0
      %v1953 = vadd.f32 0.0, %v1952
      %v1954 = vpop.f32.mrb[0].mxu0
      %v1955 = vpop.f32.mrb[0].mxu0
      %v1956 = vadd.f32 0.0, %v1955
      %v1957 = vpop.f32.mrb[0].mxu0
      %1958 = vmatprep.mubr.bf16.mxu0 0
      %1959 = vmatmul.mubr.bf16.gmra.mrb[0].mxu0 %v1851
      %v1960 = vpop.f32.mrb[0].mxu0
      %v1961 = vadd.f32 0.0, %v1960
      %v1962 = vpop.f32.mrb[0].mxu0
      %v1963 = vpop.f32.mrb[0].mxu0
      %v1964 = vadd.f32 0.0, %v1963
      %v1965 = vpop.f32.mrb[0].mxu0
      %1966 = vmatprep.mubr.bf16.mxu0 0
      %1967 = vmatmul.mubr.bf16.gmra.mrb[0].mxu0 %v1854
      %v1968 = vpop.f32.mrb[0].mxu0
      %v1969 = vadd.f32 0.0, %v1968
      %v1970 = vpop.f32.mrb[0].mxu0
      %v1971 = vpop.f32.mrb[0].mxu0
      %v1972 = vadd.f32 0.0, %v1971
      %v1973 = vpop.f32.mrb[0].mxu0
      %1974 = vmatprep.mubr.bf16.mxu0 0
      %1975 = vmatmul.mubr.bf16.gmra.mrb[0].mxu0 %v1857
      %v1976 = vpop.f32.mrb[0].mxu0
      %v1977 = vadd.f32 0.0, %v1976
      %v1978 = vpop.f32.mrb[0].mxu0
      %v1979 = vpop.f32.mrb[0].mxu0
      %v1980 = vadd.f32 0.0, %v1979
      %v1981 = vpop.f32.mrb[0].mxu0
      %1982 = vmatprep.mubr.bf16.mxu0 0
      %1983 = vmatmul.mubr.bf16.gmra.mrb[0].mxu0 %v1860
      %v1984 = vpop.f32.mrb[0].mxu0
      %v1985 = vadd.f32 0.0, %v1984
      %v1986 = vpop.f32.mrb[0].mxu0
      %v1987 = vpop.f32.mrb[0].mxu0
      %v1988 = vadd.f32 0.0, %v1987
      %v1989 = vpop.f32.mrb[0].mxu0
      %1990 = vmatprep.mubr.bf16.mxu0 0
      %1991 = vmatmul.mubr.bf16.gmra.mrb[0].mxu0 %v1863
      %v1992 = vpop.f32.mrb[0].mxu0
      %v1993 = vadd.f32 0.0, %v1992
      %v1994 = vpop.f32.mrb[0].mxu0
      %v1995 = vpop.f32.mrb[0].mxu0
      %v1996 = vadd.f32 0.0, %v1995
      %v1997 = vpop.f32.mrb[0].mxu0
      %1998 = vmatprep.mubr.bf16.mxu0 0
      %1999 = vmatmul.mubr.bf16.gmra.mrb[0].mxu0 %v1866
      %v2000 = vpop.f32.mrb[0].mxu0
      %v2001 = vadd.f32 0.0, %v2000
      %v2002 = vpop.f32.mrb[0].mxu0
      %v2003 = vpop.f32.mrb[0].mxu0
      %v2004 = vadd.f32 0.0, %v2003
      %v2005 = vpop.f32.mrb[0].mxu0
      %2006 = vmatprep.mubr.bf16.mxu0 0
      %2007 = vmatmul.mubr.bf16.gmra.mrb[0].mxu0 %v1869
      %v2008 = vpop.f32.mrb[0].mxu0
      %v2009 = vadd.f32 0.0, %v2008
      %v2010 = vpop.f32.mrb[0].mxu0
      %v2011 = vpop.f32.mrb[0].mxu0
      %v2012 = vadd.f32 0.0, %v2011
      %v2013 = vpop.f32.mrb[0].mxu0
      %2014 = vmatprep.mubr.bf16.mxu0 0
      %2015 = vmatmul.mubr.bf16.gmra.mrb[0].mxu0 %v1872
      %v2016 = vpop.f32.mrb[0].mxu0
      %v2017 = vadd.f32 0.0, %v2016
      %v2018 = vpop.f32.mrb[0].mxu0
      %v2019 = vpop.f32.mrb[0].mxu0
      %v2020 = vadd.f32 0.0, %v2019
      %v2021 = vpop.f32.mrb[0].mxu0
      %2022 = vmatprep.mubr.bf16.mxu0 0
      %2023 = vmatmul.mubr.bf16.gmra.mrb[0].mxu0 %v1875
      %v2024 = vpop.f32.mrb[0].mxu0
      %v2025 = vadd.f32 0.0, %v2024
      %v2026 = vpop.f32.mrb[0].mxu0
      %v2027 = vpop.f32.mrb[0].mxu0
      %v2028 = vadd.f32 0.0, %v2027
      %v2029 = vpop.f32.mrb[0].mxu0
      %2030 = vmatprep.mubr.bf16.mxu0 0
      %2031 = vmatmul.mubr.bf16.gmra.mrb[0].mxu0 %v1878
      %v2032 = vpop.f32.mrb[0].mxu0
      %v2033 = vadd.f32 0.0, %v2032
      %v2034 = vpop.f32.mrb[0].mxu0
      %v2035 = vpop.f32.mrb[0].mxu0
      %v2036 = vadd.f32 0.0, %v2035
      %v2037 = vpop.f32.mrb[0].mxu0
      %2038 = vmatprep.mubr.bf16.mxu0 0
      %2039 = vmatmul.mubr.bf16.gmra.mrb[0].mxu0 %v1881
      %v2040 = vpop.f32.mrb[0].mxu0
      %v2041 = vadd.f32 0.0, %v2040
      %v2042 = vpop.f32.mrb[0].mxu0
      %v2043 = vpop.f32.mrb[0].mxu0
      %v2044 = vadd.f32 0.0, %v2043
      %v2045 = vpop.f32.mrb[0].mxu0
      %2046 = vdwg.mxu0
      %v2047 = vadd.f32 %v1578, %v1921
      %v2048 = vadd.f32 %v1581, %v1924
      %v2049 = vadd.f32 %v1586, %v1929
      %v2050 = vadd.f32 %v1589, %v1932
      %v2051 = vadd.f32 %v1594, %v1937
      %v2052 = vadd.f32 %v1597, %v1940
      %v2053 = vadd.f32 %v1602, %v1945
      %v2054 = vadd.f32 %v1605, %v1948
      %v2055 = vadd.f32 %v1610, %v1953
      %v2056 = vadd.f32 %v1613, %v1956
      %v2057 = vadd.f32 %v1618, %v1961
      %v2058 = vadd.f32 %v1621, %v1964
      %v2059 = vadd.f32 %v1626, %v1969
      %v2060 = vadd.f32 %v1629, %v1972
      %v2061 = vadd.f32 %v1634, %v1977
      %v2062 = vadd.f32 %v1637, %v1980
      %v2063 = vadd.f32 %v1642, %v1985
      %v2064 = vadd.f32 %v1645, %v1988
      %v2065 = vadd.f32 %v1650, %v1993
      %v2066 = vadd.f32 %v1653, %v1996
      %v2067 = vadd.f32 %v1658, %v2001
      %v2068 = vadd.f32 %v1661, %v2004
      %v2069 = vadd.f32 %v1666, %v2009
      %v2070 = vadd.f32 %v1669, %v2012
      %v2071 = vadd.f32 %v1674, %v2017
      %v2072 = vadd.f32 %v1677, %v2020
      %v2073 = vadd.f32 %v1682, %v2025
      %v2074 = vadd.f32 %v1685, %v2028
      %v2075 = vadd.f32 %v1690, %v2033
      %v2076 = vadd.f32 %v1693, %v2036
      %v2077 = vadd.f32 %v1698, %v2041
      %v2078 = vadd.f32 %v1701, %v2044
      %v2079 = vpack.c.bf16 %v1079, %v1078
      %s2080 = scalar_lea.vmem %s4, 12
      %v2081 = vld [vmem:[%s2080] sm:$0xf]
      %v2083 = vsel %vm497, %v2079, 0
      %v2086 = vsel %vm579, %v2081, 0
      %2088 = vmatprep.subr.bf16.mxu0 0
      %2089 = vmatpush1.bf16.msra.mxu0 %v2086
      %2090 = vmatprep.subr.bf16.mxu0 0
      %2091 = vmatpush1.bf16.msra.mxu0 0
      %2092 = vmatprep.subr.bf16.mxu0 0
      %2093 = vmatpush1.bf16.msra.mxu0 0
      %2094 = vmatprep.subr.bf16.mxu0 0
      %2095 = vmatpush1.bf16.msra.mxu0 0
      %2096 = vmatprep.subr.bf16.mxu0 0
      %2097 = vmatpush1.bf16.msra.mxu0 0
      %2098 = vmatprep.subr.bf16.mxu0 0
      %2099 = vmatpush1.bf16.msra.mxu0 0
      %2100 = vmatprep.subr.bf16.mxu0 0
      %2101 = vmatpush1.bf16.msra.mxu0 0
      %2102 = vmatprep.subr.bf16.mxu0 0
      %2103 = vmatpush1.bf16.msra.mxu0 0
      %2104 = vmatprep.subr.bf16.mxu0 0
      %2105 = vmatpush1.bf16.msra.mxu0 0
      %2106 = vmatprep.subr.bf16.mxu0 0
      %2107 = vmatpush1.bf16.msra.mxu0 0
      %2108 = vmatprep.subr.bf16.mxu0 0
      %2109 = vmatpush1.bf16.msra.mxu0 0
      %2110 = vmatprep.subr.bf16.mxu0 0
      %2111 = vmatpush1.bf16.msra.mxu0 0
      %2112 = vmatprep.subr.bf16.mxu0 0
      %2113 = vmatpush1.bf16.msra.mxu0 0
      %2114 = vmatprep.subr.bf16.mxu0 0
      %2115 = vmatpush1.bf16.msra.mxu0 0
      %2116 = vmatprep.subr.bf16.mxu0 0
      %2117 = vmatpush1.bf16.msra.mxu0 0
      %2118 = vmatprep.subr.bf16.mxu0 0
      %2119 = vmatpush1.bf16.msra.mxu0 0
      %2120 = vmatprep.mubr.bf16.mxu0 0
      %2121 = vmatmul.mubr.bf16.gmra.mrb[0].mxu0 %v1496
      %v2122 = vpop.f32.mrb[0].mxu0
      %v2123 = vadd.f32 0.0, %v2122
      %v2124 = vpop.f32.mrb[0].mxu0
      %v2125 = vpop.f32.mrb[0].mxu0
      %v2126 = vadd.f32 0.0, %v2125
      %v2127 = vpop.f32.mrb[0].mxu0
      %2128 = vmatprep.mubr.bf16.mxu0 0
      %2129 = vmatmul.mubr.bf16.gmra.mrb[0].mxu0 %v1499
      %v2130 = vpop.f32.mrb[0].mxu0
      %v2131 = vadd.f32 0.0, %v2130
      %v2132 = vpop.f32.mrb[0].mxu0
      %v2133 = vpop.f32.mrb[0].mxu0
      %v2134 = vadd.f32 0.0, %v2133
      %v2135 = vpop.f32.mrb[0].mxu0
      %2136 = vmatprep.mubr.bf16.mxu0 0
      %2137 = vmatmul.mubr.bf16.gmra.mrb[0].mxu0 %v1502
      %v2138 = vpop.f32.mrb[0].mxu0
      %v2139 = vadd.f32 0.0, %v2138
      %v2140 = vpop.f32.mrb[0].mxu0
      %v2141 = vpop.f32.mrb[0].mxu0
      %v2142 = vadd.f32 0.0, %v2141
      %v2143 = vpop.f32.mrb[0].mxu0
      %2144 = vmatprep.mubr.bf16.mxu0 0
      %2145 = vmatmul.mubr.bf16.gmra.mrb[0].mxu0 %v1505
      %v2146 = vpop.f32.mrb[0].mxu0
      %v2147 = vadd.f32 0.0, %v2146
      %v2148 = vpop.f32.mrb[0].mxu0
      %v2149 = vpop.f32.mrb[0].mxu0
      %v2150 = vadd.f32 0.0, %v2149
      %v2151 = vpop.f32.mrb[0].mxu0
      %2152 = vmatprep.mubr.bf16.mxu0 0
      %2153 = vmatmul.mubr.bf16.gmra.mrb[0].mxu0 %v1508
      %v2154 = vpop.f32.mrb[0].mxu0
      %v2155 = vadd.f32 0.0, %v2154
      %v2156 = vpop.f32.mrb[0].mxu0
      %v2157 = vpop.f32.mrb[0].mxu0
      %v2158 = vadd.f32 0.0, %v2157
      %v2159 = vpop.f32.mrb[0].mxu0
      %2160 = vmatprep.mubr.bf16.mxu0 0
      %2161 = vmatmul.mubr.bf16.gmra.mrb[0].mxu0 %v1511
      %v2162 = vpop.f32.mrb[0].mxu0
      %v2163 = vadd.f32 0.0, %v2162
      %v2164 = vpop.f32.mrb[0].mxu0
      %v2165 = vpop.f32.mrb[0].mxu0
      %v2166 = vadd.f32 0.0, %v2165
      %v2167 = vpop.f32.mrb[0].mxu0
      %2168 = vmatprep.mubr.bf16.mxu0 0
      %2169 = vmatmul.mubr.bf16.gmra.mrb[0].mxu0 %v1514
      %v2170 = vpop.f32.mrb[0].mxu0
      %v2171 = vadd.f32 0.0, %v2170
      %v2172 = vpop.f32.mrb[0].mxu0
      %v2173 = vpop.f32.mrb[0].mxu0
      %v2174 = vadd.f32 0.0, %v2173
      %v2175 = vpop.f32.mrb[0].mxu0
      %2176 = vmatprep.mubr.bf16.mxu0 0
      %2177 = vmatmul.mubr.bf16.gmra.mrb[0].mxu0 %v1517
      %v2178 = vpop.f32.mrb[0].mxu0
      %v2179 = vadd.f32 0.0, %v2178
      %v2180 = vpop.f32.mrb[0].mxu0
      %v2181 = vpop.f32.mrb[0].mxu0
      %v2182 = vadd.f32 0.0, %v2181
      %v2183 = vpop.f32.mrb[0].mxu0
      %2184 = vmatprep.mubr.bf16.mxu0 0
      %2185 = vmatmul.mubr.bf16.gmra.mrb[0].mxu0 %v1520
      %v2186 = vpop.f32.mrb[0].mxu0
      %v2187 = vadd.f32 0.0, %v2186
      %v2188 = vpop.f32.mrb[0].mxu0
      %v2189 = vpop.f32.mrb[0].mxu0
      %v2190 = vadd.f32 0.0, %v2189
      %v2191 = vpop.f32.mrb[0].mxu0
      %2192 = vmatprep.mubr.bf16.mxu0 0
      %2193 = vmatmul.mubr.bf16.gmra.mrb[0].mxu0 %v1523
      %v2194 = vpop.f32.mrb[0].mxu0
      %v2195 = vadd.f32 0.0, %v2194
      %v2196 = vpop.f32.mrb[0].mxu0
      %v2197 = vpop.f32.mrb[0].mxu0
      %v2198 = vadd.f32 0.0, %v2197
      %v2199 = vpop.f32.mrb[0].mxu0
      %2200 = vmatprep.mubr.bf16.mxu0 0
      %2201 = vmatmul.mubr.bf16.gmra.mrb[0].mxu0 %v1526
      %v2202 = vpop.f32.mrb[0].mxu0
      %v2203 = vadd.f32 0.0, %v2202
      %v2204 = vpop.f32.mrb[0].mxu0
      %v2205 = vpop.f32.mrb[0].mxu0
      %v2206 = vadd.f32 0.0, %v2205
      %v2207 = vpop.f32.mrb[0].mxu0
      %2208 = vmatprep.mubr.bf16.mxu0 0
      %2209 = vmatmul.mubr.bf16.gmra.mrb[0].mxu0 %v1529
      %v2210 = vpop.f32.mrb[0].mxu0
      %v2211 = vadd.f32 0.0, %v2210
      %v2212 = vpop.f32.mrb[0].mxu0
      %v2213 = vpop.f32.mrb[0].mxu0
      %v2214 = vadd.f32 0.0, %v2213
      %v2215 = vpop.f32.mrb[0].mxu0
      %2216 = vmatprep.mubr.bf16.mxu0 0
      %2217 = vmatmul.mubr.bf16.gmra.mrb[0].mxu0 %v1532
      %v2218 = vpop.f32.mrb[0].mxu0
      %v2219 = vadd.f32 0.0, %v2218
      %v2220 = vpop.f32.mrb[0].mxu0
      %v2221 = vpop.f32.mrb[0].mxu0
      %v2222 = vadd.f32 0.0, %v2221
      %v2223 = vpop.f32.mrb[0].mxu0
      %2224 = vmatprep.mubr.bf16.mxu0 0
      %2225 = vmatmul.mubr.bf16.gmra.mrb[0].mxu0 %v1535
      %v2226 = vpop.f32.mrb[0].mxu0
      %v2227 = vadd.f32 0.0, %v2226
      %v2228 = vpop.f32.mrb[0].mxu0
      %v2229 = vpop.f32.mrb[0].mxu0
      %v2230 = vadd.f32 0.0, %v2229
      %v2231 = vpop.f32.mrb[0].mxu0
      %2232 = vmatprep.mubr.bf16.mxu0 0
      %2233 = vmatmul.mubr.bf16.gmra.mrb[0].mxu0 %v1538
      %v2234 = vpop.f32.mrb[0].mxu0
      %v2235 = vadd.f32 0.0, %v2234
      %v2236 = vpop.f32.mrb[0].mxu0
      %v2237 = vpop.f32.mrb[0].mxu0
      %v2238 = vadd.f32 0.0, %v2237
      %v2239 = vpop.f32.mrb[0].mxu0
      %2240 = vmatprep.mubr.bf16.mxu0 0
      %2241 = vmatmul.mubr.bf16.gmra.mrb[0].mxu0 %v2083
      %v2242 = vpop.f32.mrb[0].mxu0
      %v2243 = vadd.f32 0.0, %v2242
      %v2244 = vpop.f32.mrb[0].mxu0
      %v2245 = vpop.f32.mrb[0].mxu0
      %v2246 = vadd.f32 0.0, %v2245
      %v2247 = vpop.f32.mrb[0].mxu0
      %2248 = vdwg.mxu0
      %v2249 = vadd.f32 %v2047, %v2123
      %v2250 = vadd.f32 %v2048, %v2126
      %v2251 = vadd.f32 %v2049, %v2131
      %v2252 = vadd.f32 %v2050, %v2134
      %v2253 = vadd.f32 %v2051, %v2139
      %v2254 = vadd.f32 %v2052, %v2142
      %v2255 = vadd.f32 %v2053, %v2147
      %v2256 = vadd.f32 %v2054, %v2150
      %v2257 = vadd.f32 %v2055, %v2155
      %v2258 = vadd.f32 %v2056, %v2158
      %v2259 = vadd.f32 %v2057, %v2163
      %v2260 = vadd.f32 %v2058, %v2166
      %v2261 = vadd.f32 %v2059, %v2171
      %v2262 = vadd.f32 %v2060, %v2174
      %v2263 = vadd.f32 %v2061, %v2179
      %v2264 = vadd.f32 %v2062, %v2182
      %v2265 = vadd.f32 %v2063, %v2187
      %v2266 = vadd.f32 %v2064, %v2190
      %v2267 = vadd.f32 %v2065, %v2195
      %v2268 = vadd.f32 %v2066, %v2198
      %v2269 = vadd.f32 %v2067, %v2203
      %v2270 = vadd.f32 %v2068, %v2206
      %v2271 = vadd.f32 %v2069, %v2211
      %v2272 = vadd.f32 %v2070, %v2214
      %v2273 = vadd.f32 %v2071, %v2219
      %v2274 = vadd.f32 %v2072, %v2222
      %v2275 = vadd.f32 %v2073, %v2227
      %v2276 = vadd.f32 %v2074, %v2230
      %v2277 = vadd.f32 %v2075, %v2235
      %v2278 = vadd.f32 %v2076, %v2238
      %v2279 = vadd.f32 %v2077, %v2243
      %v2280 = vadd.f32 %v2078, %v2246
      %v2284 = vrot.slane %v1078, 1
      %v2285 = vrot.slane %v1079, 1
      %v2286 = vsel %vm1149, %v2284, %v2285
      %v2287 = vrot.slane %v1080, 1
      %v2288 = vsel %vm1149, %v2285, %v2287
      %v2291 = vpack.c.bf16 %v2288, %v2286
      %s2292 = scalar_lea.vmem %s4, 16
      %v2293 = vld [vmem:[%s2292] sm:$0xf]
      %v2295 = vsel %vm497, %v2291, 0
      %v2298 = vsel %vm579, %v2293, 0
      %2300 = vmatprep.subr.bf16.mxu0 0
      %2301 = vmatpush1.bf16.msra.mxu0 %v2298
      %2302 = vmatprep.subr.bf16.mxu0 0
      %2303 = vmatpush1.bf16.msra.mxu0 0
      %2304 = vmatprep.subr.bf16.mxu0 0
      %2305 = vmatpush1.bf16.msra.mxu0 0
      %2306 = vmatprep.subr.bf16.mxu0 0
      %2307 = vmatpush1.bf16.msra.mxu0 0
      %2308 = vmatprep.subr.bf16.mxu0 0
      %2309 = vmatpush1.bf16.msra.mxu0 0
      %2310 = vmatprep.subr.bf16.mxu0 0
      %2311 = vmatpush1.bf16.msra.mxu0 0
      %2312 = vmatprep.subr.bf16.mxu0 0
      %2313 = vmatpush1.bf16.msra.mxu0 0
      %2314 = vmatprep.subr.bf16.mxu0 0
      %2315 = vmatpush1.bf16.msra.mxu0 0
      %2316 = vmatprep.subr.bf16.mxu0 0
      %2317 = vmatpush1.bf16.msra.mxu0 0
      %2318 = vmatprep.subr.bf16.mxu0 0
      %2319 = vmatpush1.bf16.msra.mxu0 0
      %2320 = vmatprep.subr.bf16.mxu0 0
      %2321 = vmatpush1.bf16.msra.mxu0 0
      %2322 = vmatprep.subr.bf16.mxu0 0
      %2323 = vmatpush1.bf16.msra.mxu0 0
      %2324 = vmatprep.subr.bf16.mxu0 0
      %2325 = vmatpush1.bf16.msra.mxu0 0
      %2326 = vmatprep.subr.bf16.mxu0 0
      %2327 = vmatpush1.bf16.msra.mxu0 0
      %2328 = vmatprep.subr.bf16.mxu0 0
      %2329 = vmatpush1.bf16.msra.mxu0 0
      %2330 = vmatprep.subr.bf16.mxu0 0
      %2331 = vmatpush1.bf16.msra.mxu0 0
      %2332 = vmatprep.mubr.bf16.mxu0 0
      %2333 = vmatmul.mubr.bf16.gmra.mrb[0].mxu0 %v1284
      %v2334 = vpop.f32.mrb[0].mxu0
      %v2335 = vadd.f32 0.0, %v2334
      %v2336 = vpop.f32.mrb[0].mxu0
      %v2337 = vpop.f32.mrb[0].mxu0
      %v2338 = vadd.f32 0.0, %v2337
      %v2339 = vpop.f32.mrb[0].mxu0
      %2340 = vmatprep.mubr.bf16.mxu0 0
      %2341 = vmatmul.mubr.bf16.gmra.mrb[0].mxu0 %v1287
      %v2342 = vpop.f32.mrb[0].mxu0
      %v2343 = vadd.f32 0.0, %v2342
      %v2344 = vpop.f32.mrb[0].mxu0
      %v2345 = vpop.f32.mrb[0].mxu0
      %v2346 = vadd.f32 0.0, %v2345
      %v2347 = vpop.f32.mrb[0].mxu0
      %2348 = vmatprep.mubr.bf16.mxu0 0
      %2349 = vmatmul.mubr.bf16.gmra.mrb[0].mxu0 %v1290
      %v2350 = vpop.f32.mrb[0].mxu0
      %v2351 = vadd.f32 0.0, %v2350
      %v2352 = vpop.f32.mrb[0].mxu0
      %v2353 = vpop.f32.mrb[0].mxu0
      %v2354 = vadd.f32 0.0, %v2353
      %v2355 = vpop.f32.mrb[0].mxu0
      %2356 = vmatprep.mubr.bf16.mxu0 0
      %2357 = vmatmul.mubr.bf16.gmra.mrb[0].mxu0 %v1293
      %v2358 = vpop.f32.mrb[0].mxu0
      %v2359 = vadd.f32 0.0, %v2358
      %v2360 = vpop.f32.mrb[0].mxu0
      %v2361 = vpop.f32.mrb[0].mxu0
      %v2362 = vadd.f32 0.0, %v2361
      %v2363 = vpop.f32.mrb[0].mxu0
      %2364 = vmatprep.mubr.bf16.mxu0 0
      %2365 = vmatmul.mubr.bf16.gmra.mrb[0].mxu0 %v1296
      %v2366 = vpop.f32.mrb[0].mxu0
      %v2367 = vadd.f32 0.0, %v2366
      %v2368 = vpop.f32.mrb[0].mxu0
      %v2369 = vpop.f32.mrb[0].mxu0
      %v2370 = vadd.f32 0.0, %v2369
      %v2371 = vpop.f32.mrb[0].mxu0
      %2372 = vmatprep.mubr.bf16.mxu0 0
      %2373 = vmatmul.mubr.bf16.gmra.mrb[0].mxu0 %v1299
      %v2374 = vpop.f32.mrb[0].mxu0
      %v2375 = vadd.f32 0.0, %v2374
      %v2376 = vpop.f32.mrb[0].mxu0
      %v2377 = vpop.f32.mrb[0].mxu0
      %v2378 = vadd.f32 0.0, %v2377
      %v2379 = vpop.f32.mrb[0].mxu0
      %2380 = vmatprep.mubr.bf16.mxu0 0
      %2381 = vmatmul.mubr.bf16.gmra.mrb[0].mxu0 %v1302
      %v2382 = vpop.f32.mrb[0].mxu0
      %v2383 = vadd.f32 0.0, %v2382
      %v2384 = vpop.f32.mrb[0].mxu0
      %v2385 = vpop.f32.mrb[0].mxu0
      %v2386 = vadd.f32 0.0, %v2385
      %v2387 = vpop.f32.mrb[0].mxu0
      %2388 = vmatprep.mubr.bf16.mxu0 0
      %2389 = vmatmul.mubr.bf16.gmra.mrb[0].mxu0 %v1305
      %v2390 = vpop.f32.mrb[0].mxu0
      %v2391 = vadd.f32 0.0, %v2390
      %v2392 = vpop.f32.mrb[0].mxu0
      %v2393 = vpop.f32.mrb[0].mxu0
      %v2394 = vadd.f32 0.0, %v2393
      %v2395 = vpop.f32.mrb[0].mxu0
      %2396 = vmatprep.mubr.bf16.mxu0 0
      %2397 = vmatmul.mubr.bf16.gmra.mrb[0].mxu0 %v1308
      %v2398 = vpop.f32.mrb[0].mxu0
      %v2399 = vadd.f32 0.0, %v2398
      %v2400 = vpop.f32.mrb[0].mxu0
      %v2401 = vpop.f32.mrb[0].mxu0
      %v2402 = vadd.f32 0.0, %v2401
      %v2403 = vpop.f32.mrb[0].mxu0
      %2404 = vmatprep.mubr.bf16.mxu0 0
      %2405 = vmatmul.mubr.bf16.gmra.mrb[0].mxu0 %v1311
      %v2406 = vpop.f32.mrb[0].mxu0
      %v2407 = vadd.f32 0.0, %v2406
      %v2408 = vpop.f32.mrb[0].mxu0
      %v2409 = vpop.f32.mrb[0].mxu0
      %v2410 = vadd.f32 0.0, %v2409
      %v2411 = vpop.f32.mrb[0].mxu0
      %2412 = vmatprep.mubr.bf16.mxu0 0
      %2413 = vmatmul.mubr.bf16.gmra.mrb[0].mxu0 %v1314
      %v2414 = vpop.f32.mrb[0].mxu0
      %v2415 = vadd.f32 0.0, %v2414
      %v2416 = vpop.f32.mrb[0].mxu0
      %v2417 = vpop.f32.mrb[0].mxu0
      %v2418 = vadd.f32 0.0, %v2417
      %v2419 = vpop.f32.mrb[0].mxu0
      %2420 = vmatprep.mubr.bf16.mxu0 0
      %2421 = vmatmul.mubr.bf16.gmra.mrb[0].mxu0 %v1317
      %v2422 = vpop.f32.mrb[0].mxu0
      %v2423 = vadd.f32 0.0, %v2422
      %v2424 = vpop.f32.mrb[0].mxu0
      %v2425 = vpop.f32.mrb[0].mxu0
      %v2426 = vadd.f32 0.0, %v2425
      %v2427 = vpop.f32.mrb[0].mxu0
      %2428 = vmatprep.mubr.bf16.mxu0 0
      %2429 = vmatmul.mubr.bf16.gmra.mrb[0].mxu0 %v1320
      %v2430 = vpop.f32.mrb[0].mxu0
      %v2431 = vadd.f32 0.0, %v2430
      %v2432 = vpop.f32.mrb[0].mxu0
      %v2433 = vpop.f32.mrb[0].mxu0
      %v2434 = vadd.f32 0.0, %v2433
      %v2435 = vpop.f32.mrb[0].mxu0
      %2436 = vmatprep.mubr.bf16.mxu0 0
      %2437 = vmatmul.mubr.bf16.gmra.mrb[0].mxu0 %v1323
      %v2438 = vpop.f32.mrb[0].mxu0
      %v2439 = vadd.f32 0.0, %v2438
      %v2440 = vpop.f32.mrb[0].mxu0
      %v2441 = vpop.f32.mrb[0].mxu0
      %v2442 = vadd.f32 0.0, %v2441
      %v2443 = vpop.f32.mrb[0].mxu0
      %2444 = vmatprep.mubr.bf16.mxu0 0
      %2445 = vmatmul.mubr.bf16.gmra.mrb[0].mxu0 %v1326
      %v2446 = vpop.f32.mrb[0].mxu0
      %v2447 = vadd.f32 0.0, %v2446
      %v2448 = vpop.f32.mrb[0].mxu0
      %v2449 = vpop.f32.mrb[0].mxu0
      %v2450 = vadd.f32 0.0, %v2449
      %v2451 = vpop.f32.mrb[0].mxu0
      %2452 = vmatprep.mubr.bf16.mxu0 0
      %2453 = vmatmul.mubr.bf16.gmra.mrb[0].mxu0 %v2295
      %v2454 = vpop.f32.mrb[0].mxu0
      %v2455 = vadd.f32 0.0, %v2454
      %v2456 = vpop.f32.mrb[0].mxu0
      %v2457 = vpop.f32.mrb[0].mxu0
      %v2458 = vadd.f32 0.0, %v2457
      %v2459 = vpop.f32.mrb[0].mxu0
      %2460 = vdwg.mxu0
      %v2461 = vadd.f32 %v2249, %v2335
      %v2462 = vadd.f32 %v2250, %v2338
      %v2463 = vadd.f32 %v2251, %v2343
      %v2464 = vadd.f32 %v2252, %v2346
      %v2465 = vadd.f32 %v2253, %v2351
      %v2466 = vadd.f32 %v2254, %v2354
      %v2467 = vadd.f32 %v2255, %v2359
      %v2468 = vadd.f32 %v2256, %v2362
      %v2469 = vadd.f32 %v2257, %v2367
      %v2470 = vadd.f32 %v2258, %v2370
      %v2471 = vadd.f32 %v2259, %v2375
      %v2472 = vadd.f32 %v2260, %v2378
      %v2473 = vadd.f32 %v2261, %v2383
      %v2474 = vadd.f32 %v2262, %v2386
      %v2475 = vadd.f32 %v2263, %v2391
      %v2476 = vadd.f32 %v2264, %v2394
      %v2477 = vadd.f32 %v2265, %v2399
      %v2478 = vadd.f32 %v2266, %v2402
      %v2479 = vadd.f32 %v2267, %v2407
      %v2480 = vadd.f32 %v2268, %v2410
      %v2481 = vadd.f32 %v2269, %v2415
      %v2482 = vadd.f32 %v2270, %v2418
      %v2483 = vadd.f32 %v2271, %v2423
      %v2484 = vadd.f32 %v2272, %v2426
      %v2485 = vadd.f32 %v2273, %v2431
      %v2486 = vadd.f32 %v2274, %v2434
      %v2487 = vadd.f32 %v2275, %v2439
      %v2488 = vadd.f32 %v2276, %v2442
      %v2489 = vadd.f32 %v2277, %v2447
      %v2490 = vadd.f32 %v2278, %v2450
      %v2491 = vadd.f32 %v2279, %v2455
      %v2492 = vadd.f32 %v2280, %v2458
      %v2493 = vrot.slane %v1078, 2
      %v2494 = vrot.slane %v1079, 2
      %v2495 = vsel %vm1704, %v2493, %v2494
      %v2496 = vrot.slane %v1080, 2
      %v2497 = vsel %vm1704, %v2494, %v2496
      %v2500 = vpack.c.bf16 %v2497, %v2495
      %s2501 = scalar_lea.vmem %s4, 20
      %v2502 = vld [vmem:[%s2501] sm:$0xf]
      %v2504 = vsel %vm497, %v2500, 0
      %v2507 = vsel %vm579, %v2502, 0
      %2509 = vmatprep.subr.bf16.mxu0 0
      %2510 = vmatpush1.bf16.msra.mxu0 %v2507
      %2511 = vmatprep.subr.bf16.mxu0 0
      %2512 = vmatpush1.bf16.msra.mxu0 0
      %2513 = vmatprep.subr.bf16.mxu0 0
      %2514 = vmatpush1.bf16.msra.mxu0 0
      %2515 = vmatprep.subr.bf16.mxu0 0
      %2516 = vmatpush1.bf16.msra.mxu0 0
      %2517 = vmatprep.subr.bf16.mxu0 0
      %2518 = vmatpush1.bf16.msra.mxu0 0
      %2519 = vmatprep.subr.bf16.mxu0 0
      %2520 = vmatpush1.bf16.msra.mxu0 0
      %2521 = vmatprep.subr.bf16.mxu0 0
      %2522 = vmatpush1.bf16.msra.mxu0 0
      %2523 = vmatprep.subr.bf16.mxu0 0
      %2524 = vmatpush1.bf16.msra.mxu0 0
      %2525 = vmatprep.subr.bf16.mxu0 0
      %2526 = vmatpush1.bf16.msra.mxu0 0
      %2527 = vmatprep.subr.bf16.mxu0 0
      %2528 = vmatpush1.bf16.msra.mxu0 0
      %2529 = vmatprep.subr.bf16.mxu0 0
      %2530 = vmatpush1.bf16.msra.mxu0 0
      %2531 = vmatprep.subr.bf16.mxu0 0
      %2532 = vmatpush1.bf16.msra.mxu0 0
      %2533 = vmatprep.subr.bf16.mxu0 0
      %2534 = vmatpush1.bf16.msra.mxu0 0
      %2535 = vmatprep.subr.bf16.mxu0 0
      %2536 = vmatpush1.bf16.msra.mxu0 0
      %2537 = vmatprep.subr.bf16.mxu0 0
      %2538 = vmatpush1.bf16.msra.mxu0 0
      %2539 = vmatprep.subr.bf16.mxu0 0
      %2540 = vmatpush1.bf16.msra.mxu0 0
      %2541 = vmatprep.mubr.bf16.mxu0 0
      %2542 = vmatmul.mubr.bf16.gmra.mrb[0].mxu0 %v1839
      %v2543 = vpop.f32.mrb[0].mxu0
      %v2544 = vadd.f32 0.0, %v2543
      %v2545 = vpop.f32.mrb[0].mxu0
      %v2546 = vpop.f32.mrb[0].mxu0
      %v2547 = vadd.f32 0.0, %v2546
      %v2548 = vpop.f32.mrb[0].mxu0
      %2549 = vmatprep.mubr.bf16.mxu0 0
      %2550 = vmatmul.mubr.bf16.gmra.mrb[0].mxu0 %v1842
      %v2551 = vpop.f32.mrb[0].mxu0
      %v2552 = vadd.f32 0.0, %v2551
      %v2553 = vpop.f32.mrb[0].mxu0
      %v2554 = vpop.f32.mrb[0].mxu0
      %v2555 = vadd.f32 0.0, %v2554
      %v2556 = vpop.f32.mrb[0].mxu0
      %2557 = vmatprep.mubr.bf16.mxu0 0
      %2558 = vmatmul.mubr.bf16.gmra.mrb[0].mxu0 %v1845
      %v2559 = vpop.f32.mrb[0].mxu0
      %v2560 = vadd.f32 0.0, %v2559
      %v2561 = vpop.f32.mrb[0].mxu0
      %v2562 = vpop.f32.mrb[0].mxu0
      %v2563 = vadd.f32 0.0, %v2562
      %v2564 = vpop.f32.mrb[0].mxu0
      %2565 = vmatprep.mubr.bf16.mxu0 0
      %2566 = vmatmul.mubr.bf16.gmra.mrb[0].mxu0 %v1848
      %v2567 = vpop.f32.mrb[0].mxu0
      %v2568 = vadd.f32 0.0, %v2567
      %v2569 = vpop.f32.mrb[0].mxu0
      %v2570 = vpop.f32.mrb[0].mxu0
      %v2571 = vadd.f32 0.0, %v2570
      %v2572 = vpop.f32.mrb[0].mxu0
      %2573 = vmatprep.mubr.bf16.mxu0 0
      %2574 = vmatmul.mubr.bf16.gmra.mrb[0].mxu0 %v1851
      %v2575 = vpop.f32.mrb[0].mxu0
      %v2576 = vadd.f32 0.0, %v2575
      %v2577 = vpop.f32.mrb[0].mxu0
      %v2578 = vpop.f32.mrb[0].mxu0
      %v2579 = vadd.f32 0.0, %v2578
      %v2580 = vpop.f32.mrb[0].mxu0
      %2581 = vmatprep.mubr.bf16.mxu0 0
      %2582 = vmatmul.mubr.bf16.gmra.mrb[0].mxu0 %v1854
      %v2583 = vpop.f32.mrb[0].mxu0
      %v2584 = vadd.f32 0.0, %v2583
      %v2585 = vpop.f32.mrb[0].mxu0
      %v2586 = vpop.f32.mrb[0].mxu0
      %v2587 = vadd.f32 0.0, %v2586
      %v2588 = vpop.f32.mrb[0].mxu0
      %2589 = vmatprep.mubr.bf16.mxu0 0
      %2590 = vmatmul.mubr.bf16.gmra.mrb[0].mxu0 %v1857
      %v2591 = vpop.f32.mrb[0].mxu0
      %v2592 = vadd.f32 0.0, %v2591
      %v2593 = vpop.f32.mrb[0].mxu0
      %v2594 = vpop.f32.mrb[0].mxu0
      %v2595 = vadd.f32 0.0, %v2594
      %v2596 = vpop.f32.mrb[0].mxu0
      %2597 = vmatprep.mubr.bf16.mxu0 0
      %2598 = vmatmul.mubr.bf16.gmra.mrb[0].mxu0 %v1860
      %v2599 = vpop.f32.mrb[0].mxu0
      %v2600 = vadd.f32 0.0, %v2599
      %v2601 = vpop.f32.mrb[0].mxu0
      %v2602 = vpop.f32.mrb[0].mxu0
      %v2603 = vadd.f32 0.0, %v2602
      %v2604 = vpop.f32.mrb[0].mxu0
      %2605 = vmatprep.mubr.bf16.mxu0 0
      %2606 = vmatmul.mubr.bf16.gmra.mrb[0].mxu0 %v1863
      %v2607 = vpop.f32.mrb[0].mxu0
      %v2608 = vadd.f32 0.0, %v2607
      %v2609 = vpop.f32.mrb[0].mxu0
      %v2610 = vpop.f32.mrb[0].mxu0
      %v2611 = vadd.f32 0.0, %v2610
      %v2612 = vpop.f32.mrb[0].mxu0
      %2613 = vmatprep.mubr.bf16.mxu0 0
      %2614 = vmatmul.mubr.bf16.gmra.mrb[0].mxu0 %v1866
      %v2615 = vpop.f32.mrb[0].mxu0
      %v2616 = vadd.f32 0.0, %v2615
      %v2617 = vpop.f32.mrb[0].mxu0
      %v2618 = vpop.f32.mrb[0].mxu0
      %v2619 = vadd.f32 0.0, %v2618
      %v2620 = vpop.f32.mrb[0].mxu0
      %2621 = vmatprep.mubr.bf16.mxu0 0
      %2622 = vmatmul.mubr.bf16.gmra.mrb[0].mxu0 %v1869
      %v2623 = vpop.f32.mrb[0].mxu0
      %v2624 = vadd.f32 0.0, %v2623
      %v2625 = vpop.f32.mrb[0].mxu0
      %v2626 = vpop.f32.mrb[0].mxu0
      %v2627 = vadd.f32 0.0, %v2626
      %v2628 = vpop.f32.mrb[0].mxu0
      %2629 = vmatprep.mubr.bf16.mxu0 0
      %2630 = vmatmul.mubr.bf16.gmra.mrb[0].mxu0 %v1872
      %v2631 = vpop.f32.mrb[0].mxu0
      %v2632 = vadd.f32 0.0, %v2631
      %v2633 = vpop.f32.mrb[0].mxu0
      %v2634 = vpop.f32.mrb[0].mxu0
      %v2635 = vadd.f32 0.0, %v2634
      %v2636 = vpop.f32.mrb[0].mxu0
      %2637 = vmatprep.mubr.bf16.mxu0 0
      %2638 = vmatmul.mubr.bf16.gmra.mrb[0].mxu0 %v1875
      %v2639 = vpop.f32.mrb[0].mxu0
      %v2640 = vadd.f32 0.0, %v2639
      %v2641 = vpop.f32.mrb[0].mxu0
      %v2642 = vpop.f32.mrb[0].mxu0
      %v2643 = vadd.f32 0.0, %v2642
      %v2644 = vpop.f32.mrb[0].mxu0
      %2645 = vmatprep.mubr.bf16.mxu0 0
      %2646 = vmatmul.mubr.bf16.gmra.mrb[0].mxu0 %v1878
      %v2647 = vpop.f32.mrb[0].mxu0
      %v2648 = vadd.f32 0.0, %v2647
      %v2649 = vpop.f32.mrb[0].mxu0
      %v2650 = vpop.f32.mrb[0].mxu0
      %v2651 = vadd.f32 0.0, %v2650
      %v2652 = vpop.f32.mrb[0].mxu0
      %2653 = vmatprep.mubr.bf16.mxu0 0
      %2654 = vmatmul.mubr.bf16.gmra.mrb[0].mxu0 %v1881
      %v2655 = vpop.f32.mrb[0].mxu0
      %v2656 = vadd.f32 0.0, %v2655
      %v2657 = vpop.f32.mrb[0].mxu0
      %v2658 = vpop.f32.mrb[0].mxu0
      %v2659 = vadd.f32 0.0, %v2658
      %v2660 = vpop.f32.mrb[0].mxu0
      %2661 = vmatprep.mubr.bf16.mxu0 0
      %2662 = vmatmul.mubr.bf16.gmra.mrb[0].mxu0 %v2504
      %v2663 = vpop.f32.mrb[0].mxu0
      %v2664 = vadd.f32 0.0, %v2663
      %v2665 = vpop.f32.mrb[0].mxu0
      %v2666 = vpop.f32.mrb[0].mxu0
      %v2667 = vadd.f32 0.0, %v2666
      %v2668 = vpop.f32.mrb[0].mxu0
      %2669 = vdwg.mxu0
      %v2670 = vadd.f32 %v2461, %v2544
      %v2671 = vadd.f32 %v2462, %v2547
      %v2672 = vadd.f32 %v2463, %v2552
      %v2673 = vadd.f32 %v2464, %v2555
      %v2674 = vadd.f32 %v2465, %v2560
      %v2675 = vadd.f32 %v2466, %v2563
      %v2676 = vadd.f32 %v2467, %v2568
      %v2677 = vadd.f32 %v2468, %v2571
      %v2678 = vadd.f32 %v2469, %v2576
      %v2679 = vadd.f32 %v2470, %v2579
      %v2680 = vadd.f32 %v2471, %v2584
      %v2681 = vadd.f32 %v2472, %v2587
      %v2682 = vadd.f32 %v2473, %v2592
      %v2683 = vadd.f32 %v2474, %v2595
      %v2684 = vadd.f32 %v2475, %v2600
      %v2685 = vadd.f32 %v2476, %v2603
      %v2686 = vadd.f32 %v2477, %v2608
      %v2687 = vadd.f32 %v2478, %v2611
      %v2688 = vadd.f32 %v2479, %v2616
      %v2689 = vadd.f32 %v2480, %v2619
      %v2690 = vadd.f32 %v2481, %v2624
      %v2691 = vadd.f32 %v2482, %v2627
      %v2692 = vadd.f32 %v2483, %v2632
      %v2693 = vadd.f32 %v2484, %v2635
      %v2694 = vadd.f32 %v2485, %v2640
      %v2695 = vadd.f32 %v2486, %v2643
      %v2696 = vadd.f32 %v2487, %v2648
      %v2697 = vadd.f32 %v2488, %v2651
      %v2698 = vadd.f32 %v2489, %v2656
      %v2699 = vadd.f32 %v2490, %v2659
      %v2700 = vadd.f32 %v2491, %v2664
      %v2701 = vadd.f32 %v2492, %v2667
      %v2702 = vpack.c.bf16 %v1082, %v1081
      %s2703 = scalar_lea.vmem %s4, 24
      %v2704 = vld [vmem:[%s2703] sm:$0xf]
      %v2706 = vsel %vm497, %v2702, 0
      %v2709 = vsel %vm579, %v2704, 0
      %2711 = vmatprep.subr.bf16.mxu0 0
      %2712 = vmatpush1.bf16.msra.mxu0 %v2709
      %2713 = vmatprep.subr.bf16.mxu0 0
      %2714 = vmatpush1.bf16.msra.mxu0 0
      %2715 = vmatprep.subr.bf16.mxu0 0
      %2716 = vmatpush1.bf16.msra.mxu0 0
      %2717 = vmatprep.subr.bf16.mxu0 0
      %2718 = vmatpush1.bf16.msra.mxu0 0
      %2719 = vmatprep.subr.bf16.mxu0 0
      %2720 = vmatpush1.bf16.msra.mxu0 0
      %2721 = vmatprep.subr.bf16.mxu0 0
      %2722 = vmatpush1.bf16.msra.mxu0 0
      %2723 = vmatprep.subr.bf16.mxu0 0
      %2724 = vmatpush1.bf16.msra.mxu0 0
      %2725 = vmatprep.subr.bf16.mxu0 0
      %2726 = vmatpush1.bf16.msra.mxu0 0
      %2727 = vmatprep.subr.bf16.mxu0 0
      %2728 = vmatpush1.bf16.msra.mxu0 0
      %2729 = vmatprep.subr.bf16.mxu0 0
      %2730 = vmatpush1.bf16.msra.mxu0 0
      %2731 = vmatprep.subr.bf16.mxu0 0
      %2732 = vmatpush1.bf16.msra.mxu0 0
      %2733 = vmatprep.subr.bf16.mxu0 0
      %2734 = vmatpush1.bf16.msra.mxu0 0
      %2735 = vmatprep.subr.bf16.mxu0 0
      %2736 = vmatpush1.bf16.msra.mxu0 0
      %2737 = vmatprep.subr.bf16.mxu0 0
      %2738 = vmatpush1.bf16.msra.mxu0 0
      %2739 = vmatprep.subr.bf16.mxu0 0
      %2740 = vmatpush1.bf16.msra.mxu0 0
      %2741 = vmatprep.subr.bf16.mxu0 0
      %2742 = vmatpush1.bf16.msra.mxu0 0
      %2743 = vmatprep.mubr.bf16.mxu0 0
      %2744 = vmatmul.mubr.bf16.gmra.mrb[0].mxu0 %v1499
      %v2745 = vpop.f32.mrb[0].mxu0
      %v2746 = vadd.f32 0.0, %v2745
      %v2747 = vpop.f32.mrb[0].mxu0
      %v2748 = vpop.f32.mrb[0].mxu0
      %v2749 = vadd.f32 0.0, %v2748
      %v2750 = vpop.f32.mrb[0].mxu0
      %2751 = vmatprep.mubr.bf16.mxu0 0
      %2752 = vmatmul.mubr.bf16.gmra.mrb[0].mxu0 %v1502
      %v2753 = vpop.f32.mrb[0].mxu0
      %v2754 = vadd.f32 0.0, %v2753
      %v2755 = vpop.f32.mrb[0].mxu0
      %v2756 = vpop.f32.mrb[0].mxu0
      %v2757 = vadd.f32 0.0, %v2756
      %v2758 = vpop.f32.mrb[0].mxu0
      %2759 = vmatprep.mubr.bf16.mxu0 0
      %2760 = vmatmul.mubr.bf16.gmra.mrb[0].mxu0 %v1505
      %v2761 = vpop.f32.mrb[0].mxu0
      %v2762 = vadd.f32 0.0, %v2761
      %v2763 = vpop.f32.mrb[0].mxu0
      %v2764 = vpop.f32.mrb[0].mxu0
      %v2765 = vadd.f32 0.0, %v2764
      %v2766 = vpop.f32.mrb[0].mxu0
      %2767 = vmatprep.mubr.bf16.mxu0 0
      %2768 = vmatmul.mubr.bf16.gmra.mrb[0].mxu0 %v1508
      %v2769 = vpop.f32.mrb[0].mxu0
      %v2770 = vadd.f32 0.0, %v2769
      %v2771 = vpop.f32.mrb[0].mxu0
      %v2772 = vpop.f32.mrb[0].mxu0
      %v2773 = vadd.f32 0.0, %v2772
      %v2774 = vpop.f32.mrb[0].mxu0
      %2775 = vmatprep.mubr.bf16.mxu0 0
      %2776 = vmatmul.mubr.bf16.gmra.mrb[0].mxu0 %v1511
      %v2777 = vpop.f32.mrb[0].mxu0
      %v2778 = vadd.f32 0.0, %v2777
      %v2779 = vpop.f32.mrb[0].mxu0
      %v2780 = vpop.f32.mrb[0].mxu0
      %v2781 = vadd.f32 0.0, %v2780
      %v2782 = vpop.f32.mrb[0].mxu0
      %2783 = vmatprep.mubr.bf16.mxu0 0
      %2784 = vmatmul.mubr.bf16.gmra.mrb[0].mxu0 %v1514
      %v2785 = vpop.f32.mrb[0].mxu0
      %v2786 = vadd.f32 0.0, %v2785
      %v2787 = vpop.f32.mrb[0].mxu0
      %v2788 = vpop.f32.mrb[0].mxu0
      %v2789 = vadd.f32 0.0, %v2788
      %v2790 = vpop.f32.mrb[0].mxu0
      %2791 = vmatprep.mubr.bf16.mxu0 0
      %2792 = vmatmul.mubr.bf16.gmra.mrb[0].mxu0 %v1517
      %v2793 = vpop.f32.mrb[0].mxu0
      %v2794 = vadd.f32 0.0, %v2793
      %v2795 = vpop.f32.mrb[0].mxu0
      %v2796 = vpop.f32.mrb[0].mxu0
      %v2797 = vadd.f32 0.0, %v2796
      %v2798 = vpop.f32.mrb[0].mxu0
      %2799 = vmatprep.mubr.bf16.mxu0 0
      %2800 = vmatmul.mubr.bf16.gmra.mrb[0].mxu0 %v1520
      %v2801 = vpop.f32.mrb[0].mxu0
      %v2802 = vadd.f32 0.0, %v2801
      %v2803 = vpop.f32.mrb[0].mxu0
      %v2804 = vpop.f32.mrb[0].mxu0
      %v2805 = vadd.f32 0.0, %v2804
      %v2806 = vpop.f32.mrb[0].mxu0
      %2807 = vmatprep.mubr.bf16.mxu0 0
      %2808 = vmatmul.mubr.bf16.gmra.mrb[0].mxu0 %v1523
      %v2809 = vpop.f32.mrb[0].mxu0
      %v2810 = vadd.f32 0.0, %v2809
      %v2811 = vpop.f32.mrb[0].mxu0
      %v2812 = vpop.f32.mrb[0].mxu0
      %v2813 = vadd.f32 0.0, %v2812
      %v2814 = vpop.f32.mrb[0].mxu0
      %2815 = vmatprep.mubr.bf16.mxu0 0
      %2816 = vmatmul.mubr.bf16.gmra.mrb[0].mxu0 %v1526
      %v2817 = vpop.f32.mrb[0].mxu0
      %v2818 = vadd.f32 0.0, %v2817
      %v2819 = vpop.f32.mrb[0].mxu0
      %v2820 = vpop.f32.mrb[0].mxu0
      %v2821 = vadd.f32 0.0, %v2820
      %v2822 = vpop.f32.mrb[0].mxu0
      %2823 = vmatprep.mubr.bf16.mxu0 0
      %2824 = vmatmul.mubr.bf16.gmra.mrb[0].mxu0 %v1529
      %v2825 = vpop.f32.mrb[0].mxu0
      %v2826 = vadd.f32 0.0, %v2825
      %v2827 = vpop.f32.mrb[0].mxu0
      %v2828 = vpop.f32.mrb[0].mxu0
      %v2829 = vadd.f32 0.0, %v2828
      %v2830 = vpop.f32.mrb[0].mxu0
      %2831 = vmatprep.mubr.bf16.mxu0 0
      %2832 = vmatmul.mubr.bf16.gmra.mrb[0].mxu0 %v1532
      %v2833 = vpop.f32.mrb[0].mxu0
      %v2834 = vadd.f32 0.0, %v2833
      %v2835 = vpop.f32.mrb[0].mxu0
      %v2836 = vpop.f32.mrb[0].mxu0
      %v2837 = vadd.f32 0.0, %v2836
      %v2838 = vpop.f32.mrb[0].mxu0
      %2839 = vmatprep.mubr.bf16.mxu0 0
      %2840 = vmatmul.mubr.bf16.gmra.mrb[0].mxu0 %v1535
      %v2841 = vpop.f32.mrb[0].mxu0
      %v2842 = vadd.f32 0.0, %v2841
      %v2843 = vpop.f32.mrb[0].mxu0
      %v2844 = vpop.f32.mrb[0].mxu0
      %v2845 = vadd.f32 0.0, %v2844
      %v2846 = vpop.f32.mrb[0].mxu0
      %2847 = vmatprep.mubr.bf16.mxu0 0
      %2848 = vmatmul.mubr.bf16.gmra.mrb[0].mxu0 %v1538
      %v2849 = vpop.f32.mrb[0].mxu0
      %v2850 = vadd.f32 0.0, %v2849
      %v2851 = vpop.f32.mrb[0].mxu0
      %v2852 = vpop.f32.mrb[0].mxu0
      %v2853 = vadd.f32 0.0, %v2852
      %v2854 = vpop.f32.mrb[0].mxu0
      %2855 = vmatprep.mubr.bf16.mxu0 0
      %2856 = vmatmul.mubr.bf16.gmra.mrb[0].mxu0 %v2083
      %v2857 = vpop.f32.mrb[0].mxu0
      %v2858 = vadd.f32 0.0, %v2857
      %v2859 = vpop.f32.mrb[0].mxu0
      %v2860 = vpop.f32.mrb[0].mxu0
      %v2861 = vadd.f32 0.0, %v2860
      %v2862 = vpop.f32.mrb[0].mxu0
      %2863 = vmatprep.mubr.bf16.mxu0 0
      %2864 = vmatmul.mubr.bf16.gmra.mrb[0].mxu0 %v2706
      %v2865 = vpop.f32.mrb[0].mxu0
      %v2866 = vadd.f32 0.0, %v2865
      %v2867 = vpop.f32.mrb[0].mxu0
      %v2868 = vpop.f32.mrb[0].mxu0
      %v2869 = vadd.f32 0.0, %v2868
      %v2870 = vpop.f32.mrb[0].mxu0
      %2871 = vdwg.mxu0
      %v2872 = vadd.f32 %v2670, %v2746
      %v2873 = vadd.f32 %v2671, %v2749
      %v2874 = vadd.f32 %v2672, %v2754
      %v2875 = vadd.f32 %v2673, %v2757
      %v2876 = vadd.f32 %v2674, %v2762
      %v2877 = vadd.f32 %v2675, %v2765
      %v2878 = vadd.f32 %v2676, %v2770
      %v2879 = vadd.f32 %v2677, %v2773
      %v2880 = vadd.f32 %v2678, %v2778
      %v2881 = vadd.f32 %v2679, %v2781
      %v2882 = vadd.f32 %v2680, %v2786
      %v2883 = vadd.f32 %v2681, %v2789
      %v2884 = vadd.f32 %v2682, %v2794
      %v2885 = vadd.f32 %v2683, %v2797
      %v2886 = vadd.f32 %v2684, %v2802
      %v2887 = vadd.f32 %v2685, %v2805
      %v2888 = vadd.f32 %v2686, %v2810
      %v2889 = vadd.f32 %v2687, %v2813
      %v2890 = vadd.f32 %v2688, %v2818
      %v2891 = vadd.f32 %v2689, %v2821
      %v2892 = vadd.f32 %v2690, %v2826
      %v2893 = vadd.f32 %v2691, %v2829
      %v2894 = vadd.f32 %v2692, %v2834
      %v2895 = vadd.f32 %v2693, %v2837
      %v2896 = vadd.f32 %v2694, %v2842
      %v2897 = vadd.f32 %v2695, %v2845
      %v2898 = vadd.f32 %v2696, %v2850
      %v2899 = vadd.f32 %v2697, %v2853
      %v2900 = vadd.f32 %v2698, %v2858
      %v2901 = vadd.f32 %v2699, %v2861
      %v2902 = vadd.f32 %v2700, %v2866
      %v2903 = vadd.f32 %v2701, %v2869
      %v2907 = vrot.slane %v1081, 1
      %v2908 = vrot.slane %v1082, 1
      %v2909 = vsel %vm1149, %v2907, %v2908
      %v2910 = vrot.slane %v1083, 1
      %v2911 = vsel %vm1149, %v2908, %v2910
      %v2914 = vpack.c.bf16 %v2911, %v2909
      %s2915 = scalar_lea.vmem %s4, 28
      %v2916 = vld [vmem:[%s2915] sm:$0xf]
      %v2918 = vsel %vm497, %v2914, 0
      %v2921 = vsel %vm579, %v2916, 0
      %2923 = vmatprep.subr.bf16.mxu0 0
      %2924 = vmatpush1.bf16.msra.mxu0 %v2921
      %2925 = vmatprep.subr.bf16.mxu0 0
      %2926 = vmatpush1.bf16.msra.mxu0 0
      %2927 = vmatprep.subr.bf16.mxu0 0
      %2928 = vmatpush1.bf16.msra.mxu0 0
      %2929 = vmatprep.subr.bf16.mxu0 0
      %2930 = vmatpush1.bf16.msra.mxu0 0
      %2931 = vmatprep.subr.bf16.mxu0 0
      %2932 = vmatpush1.bf16.msra.mxu0 0
      %2933 = vmatprep.subr.bf16.mxu0 0
      %2934 = vmatpush1.bf16.msra.mxu0 0
      %2935 = vmatprep.subr.bf16.mxu0 0
      %2936 = vmatpush1.bf16.msra.mxu0 0
      %2937 = vmatprep.subr.bf16.mxu0 0
      %2938 = vmatpush1.bf16.msra.mxu0 0
      %2939 = vmatprep.subr.bf16.mxu0 0
      %2940 = vmatpush1.bf16.msra.mxu0 0
      %2941 = vmatprep.subr.bf16.mxu0 0
      %2942 = vmatpush1.bf16.msra.mxu0 0
      %2943 = vmatprep.subr.bf16.mxu0 0
      %2944 = vmatpush1.bf16.msra.mxu0 0
      %2945 = vmatprep.subr.bf16.mxu0 0
      %2946 = vmatpush1.bf16.msra.mxu0 0
      %2947 = vmatprep.subr.bf16.mxu0 0
      %2948 = vmatpush1.bf16.msra.mxu0 0
      %2949 = vmatprep.subr.bf16.mxu0 0
      %2950 = vmatpush1.bf16.msra.mxu0 0
      %2951 = vmatprep.subr.bf16.mxu0 0
      %2952 = vmatpush1.bf16.msra.mxu0 0
      %2953 = vmatprep.subr.bf16.mxu0 0
      %2954 = vmatpush1.bf16.msra.mxu0 0
      %2955 = vmatprep.mubr.bf16.mxu0 0
      %2956 = vmatmul.mubr.bf16.gmra.mrb[0].mxu0 %v1287
      %v2957 = vpop.f32.mrb[0].mxu0
      %v2958 = vadd.f32 0.0, %v2957
      %v2959 = vpop.f32.mrb[0].mxu0
      %v2960 = vpop.f32.mrb[0].mxu0
      %v2961 = vadd.f32 0.0, %v2960
      %v2962 = vpop.f32.mrb[0].mxu0
      %2963 = vmatprep.mubr.bf16.mxu0 0
      %2964 = vmatmul.mubr.bf16.gmra.mrb[0].mxu0 %v1290
      %v2965 = vpop.f32.mrb[0].mxu0
      %v2966 = vadd.f32 0.0, %v2965
      %v2967 = vpop.f32.mrb[0].mxu0
      %v2968 = vpop.f32.mrb[0].mxu0
      %v2969 = vadd.f32 0.0, %v2968
      %v2970 = vpop.f32.mrb[0].mxu0
      %2971 = vmatprep.mubr.bf16.mxu0 0
      %2972 = vmatmul.mubr.bf16.gmra.mrb[0].mxu0 %v1293
      %v2973 = vpop.f32.mrb[0].mxu0
      %v2974 = vadd.f32 0.0, %v2973
      %v2975 = vpop.f32.mrb[0].mxu0
      %v2976 = vpop.f32.mrb[0].mxu0
      %v2977 = vadd.f32 0.0, %v2976
      %v2978 = vpop.f32.mrb[0].mxu0
      %2979 = vmatprep.mubr.bf16.mxu0 0
      %2980 = vmatmul.mubr.bf16.gmra.mrb[0].mxu0 %v1296
      %v2981 = vpop.f32.mrb[0].mxu0
      %v2982 = vadd.f32 0.0, %v2981
      %v2983 = vpop.f32.mrb[0].mxu0
      %v2984 = vpop.f32.mrb[0].mxu0
      %v2985 = vadd.f32 0.0, %v2984
      %v2986 = vpop.f32.mrb[0].mxu0
      %2987 = vmatprep.mubr.bf16.mxu0 0
      %2988 = vmatmul.mubr.bf16.gmra.mrb[0].mxu0 %v1299
      %v2989 = vpop.f32.mrb[0].mxu0
      %v2990 = vadd.f32 0.0, %v2989
      %v2991 = vpop.f32.mrb[0].mxu0
      %v2992 = vpop.f32.mrb[0].mxu0
      %v2993 = vadd.f32 0.0, %v2992
      %v2994 = vpop.f32.mrb[0].mxu0
      %2995 = vmatprep.mubr.bf16.mxu0 0
      %2996 = vmatmul.mubr.bf16.gmra.mrb[0].mxu0 %v1302
      %v2997 = vpop.f32.mrb[0].mxu0
      %v2998 = vadd.f32 0.0, %v2997
      %v2999 = vpop.f32.mrb[0].mxu0
      %v3000 = vpop.f32.mrb[0].mxu0
      %v3001 = vadd.f32 0.0, %v3000
      %v3002 = vpop.f32.mrb[0].mxu0
      %3003 = vmatprep.mubr.bf16.mxu0 0
      %3004 = vmatmul.mubr.bf16.gmra.mrb[0].mxu0 %v1305
      %v3005 = vpop.f32.mrb[0].mxu0
      %v3006 = vadd.f32 0.0, %v3005
      %v3007 = vpop.f32.mrb[0].mxu0
      %v3008 = vpop.f32.mrb[0].mxu0
      %v3009 = vadd.f32 0.0, %v3008
      %v3010 = vpop.f32.mrb[0].mxu0
      %3011 = vmatprep.mubr.bf16.mxu0 0
      %3012 = vmatmul.mubr.bf16.gmra.mrb[0].mxu0 %v1308
      %v3013 = vpop.f32.mrb[0].mxu0
      %v3014 = vadd.f32 0.0, %v3013
      %v3015 = vpop.f32.mrb[0].mxu0
      %v3016 = vpop.f32.mrb[0].mxu0
      %v3017 = vadd.f32 0.0, %v3016
      %v3018 = vpop.f32.mrb[0].mxu0
      %3019 = vmatprep.mubr.bf16.mxu0 0
      %3020 = vmatmul.mubr.bf16.gmra.mrb[0].mxu0 %v1311
      %v3021 = vpop.f32.mrb[0].mxu0
      %v3022 = vadd.f32 0.0, %v3021
      %v3023 = vpop.f32.mrb[0].mxu0
      %v3024 = vpop.f32.mrb[0].mxu0
      %v3025 = vadd.f32 0.0, %v3024
      %v3026 = vpop.f32.mrb[0].mxu0
      %3027 = vmatprep.mubr.bf16.mxu0 0
      %3028 = vmatmul.mubr.bf16.gmra.mrb[0].mxu0 %v1314
      %v3029 = vpop.f32.mrb[0].mxu0
      %v3030 = vadd.f32 0.0, %v3029
      %v3031 = vpop.f32.mrb[0].mxu0
      %v3032 = vpop.f32.mrb[0].mxu0
      %v3033 = vadd.f32 0.0, %v3032
      %v3034 = vpop.f32.mrb[0].mxu0
      %3035 = vmatprep.mubr.bf16.mxu0 0
      %3036 = vmatmul.mubr.bf16.gmra.mrb[0].mxu0 %v1317
      %v3037 = vpop.f32.mrb[0].mxu0
      %v3038 = vadd.f32 0.0, %v3037
      %v3039 = vpop.f32.mrb[0].mxu0
      %v3040 = vpop.f32.mrb[0].mxu0
      %v3041 = vadd.f32 0.0, %v3040
      %v3042 = vpop.f32.mrb[0].mxu0
      %3043 = vmatprep.mubr.bf16.mxu0 0
      %3044 = vmatmul.mubr.bf16.gmra.mrb[0].mxu0 %v1320
      %v3045 = vpop.f32.mrb[0].mxu0
      %v3046 = vadd.f32 0.0, %v3045
      %v3047 = vpop.f32.mrb[0].mxu0
      %v3048 = vpop.f32.mrb[0].mxu0
      %v3049 = vadd.f32 0.0, %v3048
      %v3050 = vpop.f32.mrb[0].mxu0
      %3051 = vmatprep.mubr.bf16.mxu0 0
      %3052 = vmatmul.mubr.bf16.gmra.mrb[0].mxu0 %v1323
      %v3053 = vpop.f32.mrb[0].mxu0
      %v3054 = vadd.f32 0.0, %v3053
      %v3055 = vpop.f32.mrb[0].mxu0
      %v3056 = vpop.f32.mrb[0].mxu0
      %v3057 = vadd.f32 0.0, %v3056
      %v3058 = vpop.f32.mrb[0].mxu0
      %3059 = vmatprep.mubr.bf16.mxu0 0
      %3060 = vmatmul.mubr.bf16.gmra.mrb[0].mxu0 %v1326
      %v3061 = vpop.f32.mrb[0].mxu0
      %v3062 = vadd.f32 0.0, %v3061
      %v3063 = vpop.f32.mrb[0].mxu0
      %v3064 = vpop.f32.mrb[0].mxu0
      %v3065 = vadd.f32 0.0, %v3064
      %v3066 = vpop.f32.mrb[0].mxu0
      %3067 = vmatprep.mubr.bf16.mxu0 0
      %3068 = vmatmul.mubr.bf16.gmra.mrb[0].mxu0 %v2295
      %v3069 = vpop.f32.mrb[0].mxu0
      %v3070 = vadd.f32 0.0, %v3069
      %v3071 = vpop.f32.mrb[0].mxu0
      %v3072 = vpop.f32.mrb[0].mxu0
      %v3073 = vadd.f32 0.0, %v3072
      %v3074 = vpop.f32.mrb[0].mxu0
      %3075 = vmatprep.mubr.bf16.mxu0 0
      %3076 = vmatmul.mubr.bf16.gmra.mrb[0].mxu0 %v2918
      %v3077 = vpop.f32.mrb[0].mxu0
      %v3078 = vadd.f32 0.0, %v3077
      %v3079 = vpop.f32.mrb[0].mxu0
      %v3080 = vpop.f32.mrb[0].mxu0
      %v3081 = vadd.f32 0.0, %v3080
      %v3082 = vpop.f32.mrb[0].mxu0
      %3083 = vdwg.mxu0
      %v3084 = vadd.f32 %v2872, %v2958
      %v3085 = vadd.f32 %v2873, %v2961
      %v3086 = vadd.f32 %v2874, %v2966
      %v3087 = vadd.f32 %v2875, %v2969
      %v3088 = vadd.f32 %v2876, %v2974
      %v3089 = vadd.f32 %v2877, %v2977
      %v3090 = vadd.f32 %v2878, %v2982
      %v3091 = vadd.f32 %v2879, %v2985
      %v3092 = vadd.f32 %v2880, %v2990
      %v3093 = vadd.f32 %v2881, %v2993
      %v3094 = vadd.f32 %v2882, %v2998
      %v3095 = vadd.f32 %v2883, %v3001
      %v3096 = vadd.f32 %v2884, %v3006
      %v3097 = vadd.f32 %v2885, %v3009
      %v3098 = vadd.f32 %v2886, %v3014
      %v3099 = vadd.f32 %v2887, %v3017
      %v3100 = vadd.f32 %v2888, %v3022
      %v3101 = vadd.f32 %v2889, %v3025
      %v3102 = vadd.f32 %v2890, %v3030
      %v3103 = vadd.f32 %v2891, %v3033
      %v3104 = vadd.f32 %v2892, %v3038
      %v3105 = vadd.f32 %v2893, %v3041
      %v3106 = vadd.f32 %v2894, %v3046
      %v3107 = vadd.f32 %v2895, %v3049
      %v3108 = vadd.f32 %v2896, %v3054
      %v3109 = vadd.f32 %v2897, %v3057
      %v3110 = vadd.f32 %v2898, %v3062
      %v3111 = vadd.f32 %v2899, %v3065
      %v3112 = vadd.f32 %v2900, %v3070
      %v3113 = vadd.f32 %v2901, %v3073
      %v3114 = vadd.f32 %v2902, %v3078
      %v3115 = vadd.f32 %v2903, %v3081
      %v3116 = vrot.slane %v1081, 2
      %v3117 = vrot.slane %v1082, 2
      %v3118 = vsel %vm1704, %v3116, %v3117
      %v3119 = vrot.slane %v1083, 2
      %v3120 = vsel %vm1704, %v3117, %v3119
      %v3123 = vpack.c.bf16 %v3120, %v3118
      %s3124 = scalar_lea.vmem %s4, 32
      %v3125 = vld [vmem:[%s3124] sm:$0xf]
      %v3127 = vsel %vm497, %v3123, 0
      %v3130 = vsel %vm579, %v3125, 0
      %3132 = vmatprep.subr.bf16.mxu0 0
      %3133 = vmatpush1.bf16.msra.mxu0 %v3130
      %3134 = vmatprep.subr.bf16.mxu0 0
      %3135 = vmatpush1.bf16.msra.mxu0 0
      %3136 = vmatprep.subr.bf16.mxu0 0
      %3137 = vmatpush1.bf16.msra.mxu0 0
      %3138 = vmatprep.subr.bf16.mxu0 0
      %3139 = vmatpush1.bf16.msra.mxu0 0
      %3140 = vmatprep.subr.bf16.mxu0 0
      %3141 = vmatpush1.bf16.msra.mxu0 0
      %3142 = vmatprep.subr.bf16.mxu0 0
      %3143 = vmatpush1.bf16.msra.mxu0 0
      %3144 = vmatprep.subr.bf16.mxu0 0
      %3145 = vmatpush1.bf16.msra.mxu0 0
      %3146 = vmatprep.subr.bf16.mxu0 0
      %3147 = vmatpush1.bf16.msra.mxu0 0
      %3148 = vmatprep.subr.bf16.mxu0 0
      %3149 = vmatpush1.bf16.msra.mxu0 0
      %3150 = vmatprep.subr.bf16.mxu0 0
      %3151 = vmatpush1.bf16.msra.mxu0 0
      %3152 = vmatprep.subr.bf16.mxu0 0
      %3153 = vmatpush1.bf16.msra.mxu0 0
      %3154 = vmatprep.subr.bf16.mxu0 0
      %3155 = vmatpush1.bf16.msra.mxu0 0
      %3156 = vmatprep.subr.bf16.mxu0 0
      %3157 = vmatpush1.bf16.msra.mxu0 0
      %3158 = vmatprep.subr.bf16.mxu0 0
      %3159 = vmatpush1.bf16.msra.mxu0 0
      %3160 = vmatprep.subr.bf16.mxu0 0
      %3161 = vmatpush1.bf16.msra.mxu0 0
      %3162 = vmatprep.subr.bf16.mxu0 0
      %3163 = vmatpush1.bf16.msra.mxu0 0
      %3164 = vmatprep.mubr.bf16.mxu0 0
      %3165 = vmatmul.mubr.bf16.gmra.mrb[0].mxu0 %v1842
      %v3166 = vpop.f32.mrb[0].mxu0
      %v3167 = vadd.f32 0.0, %v3166
      %v3168 = vpop.f32.mrb[0].mxu0
      %v3169 = vpop.f32.mrb[0].mxu0
      %v3170 = vadd.f32 0.0, %v3169
      %v3171 = vpop.f32.mrb[0].mxu0
      %3172 = vmatprep.mubr.bf16.mxu0 0
      %3173 = vmatmul.mubr.bf16.gmra.mrb[0].mxu0 %v1845
      %v3174 = vpop.f32.mrb[0].mxu0
      %v3175 = vadd.f32 0.0, %v3174
      %v3176 = vpop.f32.mrb[0].mxu0
      %v3177 = vpop.f32.mrb[0].mxu0
      %v3178 = vadd.f32 0.0, %v3177
      %v3179 = vpop.f32.mrb[0].mxu0
      %3180 = vmatprep.mubr.bf16.mxu0 0
      %3181 = vmatmul.mubr.bf16.gmra.mrb[0].mxu0 %v1848
      %v3182 = vpop.f32.mrb[0].mxu0
      %v3183 = vadd.f32 0.0, %v3182
      %v3184 = vpop.f32.mrb[0].mxu0
      %v3185 = vpop.f32.mrb[0].mxu0
      %v3186 = vadd.f32 0.0, %v3185
      %v3187 = vpop.f32.mrb[0].mxu0
      %3188 = vmatprep.mubr.bf16.mxu0 0
      %3189 = vmatmul.mubr.bf16.gmra.mrb[0].mxu0 %v1851
      %v3190 = vpop.f32.mrb[0].mxu0
      %v3191 = vadd.f32 0.0, %v3190
      %v3192 = vpop.f32.mrb[0].mxu0
      %v3193 = vpop.f32.mrb[0].mxu0
      %v3194 = vadd.f32 0.0, %v3193
      %v3195 = vpop.f32.mrb[0].mxu0
      %3196 = vmatprep.mubr.bf16.mxu0 0
      %3197 = vmatmul.mubr.bf16.gmra.mrb[0].mxu0 %v1854
      %v3198 = vpop.f32.mrb[0].mxu0
      %v3199 = vadd.f32 0.0, %v3198
      %v3200 = vpop.f32.mrb[0].mxu0
      %v3201 = vpop.f32.mrb[0].mxu0
      %v3202 = vadd.f32 0.0, %v3201
      %v3203 = vpop.f32.mrb[0].mxu0
      %3204 = vmatprep.mubr.bf16.mxu0 0
      %3205 = vmatmul.mubr.bf16.gmra.mrb[0].mxu0 %v1857
      %v3206 = vpop.f32.mrb[0].mxu0
      %v3207 = vadd.f32 0.0, %v3206
      %v3208 = vpop.f32.mrb[0].mxu0
      %v3209 = vpop.f32.mrb[0].mxu0
      %v3210 = vadd.f32 0.0, %v3209
      %v3211 = vpop.f32.mrb[0].mxu0
      %3212 = vmatprep.mubr.bf16.mxu0 0
      %3213 = vmatmul.mubr.bf16.gmra.mrb[0].mxu0 %v1860
      %v3214 = vpop.f32.mrb[0].mxu0
      %v3215 = vadd.f32 0.0, %v3214
      %v3216 = vpop.f32.mrb[0].mxu0
      %v3217 = vpop.f32.mrb[0].mxu0
      %v3218 = vadd.f32 0.0, %v3217
      %v3219 = vpop.f32.mrb[0].mxu0
      %3220 = vmatprep.mubr.bf16.mxu0 0
      %3221 = vmatmul.mubr.bf16.gmra.mrb[0].mxu0 %v1863
      %v3222 = vpop.f32.mrb[0].mxu0
      %v3223 = vadd.f32 0.0, %v3222
      %v3224 = vpop.f32.mrb[0].mxu0
      %v3225 = vpop.f32.mrb[0].mxu0
      %v3226 = vadd.f32 0.0, %v3225
      %v3227 = vpop.f32.mrb[0].mxu0
      %3228 = vmatprep.mubr.bf16.mxu0 0
      %3229 = vmatmul.mubr.bf16.gmra.mrb[0].mxu0 %v1866
      %v3230 = vpop.f32.mrb[0].mxu0
      %v3231 = vadd.f32 0.0, %v3230
      %v3232 = vpop.f32.mrb[0].mxu0
      %v3233 = vpop.f32.mrb[0].mxu0
      %v3234 = vadd.f32 0.0, %v3233
      %v3235 = vpop.f32.mrb[0].mxu0
      %3236 = vmatprep.mubr.bf16.mxu0 0
      %3237 = vmatmul.mubr.bf16.gmra.mrb[0].mxu0 %v1869
      %v3238 = vpop.f32.mrb[0].mxu0
      %v3239 = vadd.f32 0.0, %v3238
      %v3240 = vpop.f32.mrb[0].mxu0
      %v3241 = vpop.f32.mrb[0].mxu0
      %v3242 = vadd.f32 0.0, %v3241
      %v3243 = vpop.f32.mrb[0].mxu0
      %3244 = vmatprep.mubr.bf16.mxu0 0
      %3245 = vmatmul.mubr.bf16.gmra.mrb[0].mxu0 %v1872
      %v3246 = vpop.f32.mrb[0].mxu0
      %v3247 = vadd.f32 0.0, %v3246
      %v3248 = vpop.f32.mrb[0].mxu0
      %v3249 = vpop.f32.mrb[0].mxu0
      %v3250 = vadd.f32 0.0, %v3249
      %v3251 = vpop.f32.mrb[0].mxu0
      %3252 = vmatprep.mubr.bf16.mxu0 0
      %3253 = vmatmul.mubr.bf16.gmra.mrb[0].mxu0 %v1875
      %v3254 = vpop.f32.mrb[0].mxu0
      %v3255 = vadd.f32 0.0, %v3254
      %v3256 = vpop.f32.mrb[0].mxu0
      %v3257 = vpop.f32.mrb[0].mxu0
      %v3258 = vadd.f32 0.0, %v3257
      %v3259 = vpop.f32.mrb[0].mxu0
      %3260 = vmatprep.mubr.bf16.mxu0 0
      %3261 = vmatmul.mubr.bf16.gmra.mrb[0].mxu0 %v1878
      %v3262 = vpop.f32.mrb[0].mxu0
      %v3263 = vadd.f32 0.0, %v3262
      %v3264 = vpop.f32.mrb[0].mxu0
      %v3265 = vpop.f32.mrb[0].mxu0
      %v3266 = vadd.f32 0.0, %v3265
      %v3267 = vpop.f32.mrb[0].mxu0
      %3268 = vmatprep.mubr.bf16.mxu0 0
      %3269 = vmatmul.mubr.bf16.gmra.mrb[0].mxu0 %v1881
      %v3270 = vpop.f32.mrb[0].mxu0
      %v3271 = vadd.f32 0.0, %v3270
      %v3272 = vpop.f32.mrb[0].mxu0
      %v3273 = vpop.f32.mrb[0].mxu0
      %v3274 = vadd.f32 0.0, %v3273
      %v3275 = vpop.f32.mrb[0].mxu0
      %3276 = vmatprep.mubr.bf16.mxu0 0
      %3277 = vmatmul.mubr.bf16.gmra.mrb[0].mxu0 %v2504
      %v3278 = vpop.f32.mrb[0].mxu0
      %v3279 = vadd.f32 0.0, %v3278
      %v3280 = vpop.f32.mrb[0].mxu0
      %v3281 = vpop.f32.mrb[0].mxu0
      %v3282 = vadd.f32 0.0, %v3281
      %v3283 = vpop.f32.mrb[0].mxu0
      %3284 = vmatprep.mubr.bf16.mxu0 0
      %3285 = vmatmul.mubr.bf16.gmra.mrb[0].mxu0 %v3127
      %v3286 = vpop.f32.mrb[0].mxu0
      %v3287 = vadd.f32 0.0, %v3286
      %v3288 = vpop.f32.mrb[0].mxu0
      %v3289 = vpop.f32.mrb[0].mxu0
      %v3290 = vadd.f32 0.0, %v3289
      %v3291 = vpop.f32.mrb[0].mxu0
      %3292 = vdwg.mxu0
      %v3293 = vadd.f32 %v3084, %v3167
      %v3294 = vadd.f32 %v3085, %v3170
      %v3295 = vadd.f32 %v3086, %v3175
      %v3296 = vadd.f32 %v3087, %v3178
      %v3297 = vadd.f32 %v3088, %v3183
      %v3298 = vadd.f32 %v3089, %v3186
      %v3299 = vadd.f32 %v3090, %v3191
      %v3300 = vadd.f32 %v3091, %v3194
      %v3301 = vadd.f32 %v3092, %v3199
      %v3302 = vadd.f32 %v3093, %v3202
      %v3303 = vadd.f32 %v3094, %v3207
      %v3304 = vadd.f32 %v3095, %v3210
      %v3305 = vadd.f32 %v3096, %v3215
      %v3306 = vadd.f32 %v3097, %v3218
      %v3307 = vadd.f32 %v3098, %v3223
      %v3308 = vadd.f32 %v3099, %v3226
      %v3309 = vadd.f32 %v3100, %v3231
      %v3310 = vadd.f32 %v3101, %v3234
      %v3311 = vadd.f32 %v3102, %v3239
      %v3312 = vadd.f32 %v3103, %v3242
      %v3313 = vadd.f32 %v3104, %v3247
      %v3314 = vadd.f32 %v3105, %v3250
      %v3315 = vadd.f32 %v3106, %v3255
      %v3316 = vadd.f32 %v3107, %v3258
      %v3317 = vadd.f32 %v3108, %v3263
      %v3318 = vadd.f32 %v3109, %v3266
      %v3319 = vadd.f32 %v3110, %v3271
      %v3320 = vadd.f32 %v3111, %v3274
      %v3321 = vadd.f32 %v3112, %v3279
      %v3322 = vadd.f32 %v3113, %v3282
      %v3323 = vadd.f32 %v3114, %v3287
      %v3324 = vadd.f32 %v3115, %v3290
      %v3325 = vld [vmem:[%s5] sm:$0x1]
      %v3327 = vlaneseq
      %v3328 = vshrl.u32 %v3327, 7
      %v3329 = vsub.s32 0, %v3328
      %v3330 = vrot.slane %v3325, %v3329
      %v3332 = vmul.f32 %v3293, %v3330
      %v3333 = vmul.f32 %v3294, %v3330
      %v3334 = vmul.f32 %v3295, %v3330
      %v3335 = vmul.f32 %v3296, %v3330
      %v3336 = vmul.f32 %v3297, %v3330
      %v3337 = vmul.f32 %v3298, %v3330
      %v3338 = vmul.f32 %v3299, %v3330
      %v3339 = vmul.f32 %v3300, %v3330
      %v3340 = vmul.f32 %v3301, %v3330
      %v3341 = vmul.f32 %v3302, %v3330
      %v3342 = vmul.f32 %v3303, %v3330
      %v3343 = vmul.f32 %v3304, %v3330
      %v3344 = vmul.f32 %v3305, %v3330
      %v3345 = vmul.f32 %v3306, %v3330
      %v3346 = vmul.f32 %v3307, %v3330
      %v3347 = vmul.f32 %v3308, %v3330
      %v3348 = vmul.f32 %v3309, %v3330
      %v3349 = vmul.f32 %v3310, %v3330
      %v3350 = vmul.f32 %v3311, %v3330
      %v3351 = vmul.f32 %v3312, %v3330
      %v3352 = vmul.f32 %v3313, %v3330
      %v3353 = vmul.f32 %v3314, %v3330
      %v3354 = vmul.f32 %v3315, %v3330
      %v3355 = vmul.f32 %v3316, %v3330
      %v3356 = vmul.f32 %v3317, %v3330
      %v3357 = vmul.f32 %v3318, %v3330
      %v3358 = vmul.f32 %v3319, %v3330
      %v3359 = vmul.f32 %v3320, %v3330
      %v3360 = vmul.f32 %v3321, %v3330
      %v3361 = vmul.f32 %v3322, %v3330
      %v3362 = vmul.f32 %v3323, %v3330
      %v3363 = vmul.f32 %v3324, %v3330
      %v3364 = vld [vmem:[%s6] sm:$0x1]
      %v3366 = vlaneseq
      %v3367 = vshrl.u32 %v3366, 7
      %v3368 = vsub.s32 0, %v3367
      %v3369 = vrot.slane %v3364, %v3368
      %v3371 = vadd.f32 %v3332, %v3369
      %v3372 = vadd.f32 %v3333, %v3369
      %v3373 = vadd.f32 %v3334, %v3369
      %v3374 = vadd.f32 %v3335, %v3369
      %v3375 = vadd.f32 %v3336, %v3369
      %v3376 = vadd.f32 %v3337, %v3369
      %v3377 = vadd.f32 %v3338, %v3369
      %v3378 = vadd.f32 %v3339, %v3369
      %v3379 = vadd.f32 %v3340, %v3369
      %v3380 = vadd.f32 %v3341, %v3369
      %v3381 = vadd.f32 %v3342, %v3369
      %v3382 = vadd.f32 %v3343, %v3369
      %v3383 = vadd.f32 %v3344, %v3369
      %v3384 = vadd.f32 %v3345, %v3369
      %v3385 = vadd.f32 %v3346, %v3369
      %v3386 = vadd.f32 %v3347, %v3369
      %v3387 = vadd.f32 %v3348, %v3369
      %v3388 = vadd.f32 %v3349, %v3369
      %v3389 = vadd.f32 %v3350, %v3369
      %v3390 = vadd.f32 %v3351, %v3369
      %v3391 = vadd.f32 %v3352, %v3369
      %v3392 = vadd.f32 %v3353, %v3369
      %v3393 = vadd.f32 %v3354, %v3369
      %v3394 = vadd.f32 %v3355, %v3369
      %v3395 = vadd.f32 %v3356, %v3369
      %v3396 = vadd.f32 %v3357, %v3369
      %v3397 = vadd.f32 %v3358, %v3369
      %v3398 = vadd.f32 %v3359, %v3369
      %v3399 = vadd.f32 %v3360, %v3369
      %v3400 = vadd.f32 %v3361, %v3369
      %v3401 = vadd.f32 %v3362, %v3369
      %v3402 = vadd.f32 %v3363, %v3369
      %v3403 = vmax.f32 %v3371, 0.0
      %v3404 = vmax.f32 %v3372, 0.0
      %v3405 = vmax.f32 %v3373, 0.0
      %v3406 = vmax.f32 %v3374, 0.0
      %v3407 = vmax.f32 %v3375, 0.0
      %v3408 = vmax.f32 %v3376, 0.0
      %v3409 = vmax.f32 %v3377, 0.0
      %v3410 = vmax.f32 %v3378, 0.0
      %v3411 = vmax.f32 %v3379, 0.0
      %v3412 = vmax.f32 %v3380, 0.0
      %v3413 = vmax.f32 %v3381, 0.0
      %v3414 = vmax.f32 %v3382, 0.0
      %v3415 = vmax.f32 %v3383, 0.0
      %v3416 = vmax.f32 %v3384, 0.0
      %v3417 = vmax.f32 %v3385, 0.0
      %v3418 = vmax.f32 %v3386, 0.0
      %v3419 = vmax.f32 %v3387, 0.0
      %v3420 = vmax.f32 %v3388, 0.0
      %v3421 = vmax.f32 %v3389, 0.0
      %v3422 = vmax.f32 %v3390, 0.0
      %v3423 = vmax.f32 %v3391, 0.0
      %v3424 = vmax.f32 %v3392, 0.0
      %v3425 = vmax.f32 %v3393, 0.0
      %v3426 = vmax.f32 %v3394, 0.0
      %v3427 = vmax.f32 %v3395, 0.0
      %v3428 = vmax.f32 %v3396, 0.0
      %v3429 = vmax.f32 %v3397, 0.0
      %v3430 = vmax.f32 %v3398, 0.0
      %v3431 = vmax.f32 %v3399, 0.0
      %v3432 = vmax.f32 %v3400, 0.0
      %v3433 = vmax.f32 %v3401, 0.0
      %v3434 = vmax.f32 %v3402, 0.0
      %v3435 = vpack.c.bf16 %v3404, %v3403
      %v3436 = vpack.c.bf16 %v3406, %v3405
      %v3437 = vpack.c.bf16 %v3408, %v3407
      %v3438 = vpack.c.bf16 %v3410, %v3409
      %v3439 = vpack.c.bf16 %v3412, %v3411
      %v3440 = vpack.c.bf16 %v3414, %v3413
      %v3441 = vpack.c.bf16 %v3416, %v3415
      %v3442 = vpack.c.bf16 %v3418, %v3417
      %v3443 = vpack.c.bf16 %v3420, %v3419
      %v3444 = vpack.c.bf16 %v3422, %v3421
      %v3445 = vpack.c.bf16 %v3424, %v3423
      %v3446 = vpack.c.bf16 %v3426, %v3425
      %v3447 = vpack.c.bf16 %v3428, %v3427
      %v3448 = vpack.c.bf16 %v3430, %v3429
      %v3449 = vpack.c.bf16 %v3432, %v3431
      %v3450 = vpack.c.bf16 %v3434, %v3433
      %v3451 = vld [vmem:[%s7] sm:$0xf]
      %v3453 = vsel %vm497, %v3435, 0
      %v3456 = vsel %vm497, %v3436, 0
      %v3459 = vsel %vm497, %v3437, 0
      %v3462 = vsel %vm497, %v3438, 0
      %v3465 = vsel %vm497, %v3439, 0
      %v3468 = vsel %vm497, %v3440, 0
      %v3471 = vsel %vm497, %v3441, 0
      %v3474 = vsel %vm497, %v3442, 0
      %v3477 = vsel %vm497, %v3443, 0
      %v3480 = vsel %vm497, %v3444, 0
      %v3483 = vsel %vm497, %v3445, 0
      %v3486 = vsel %vm497, %v3446, 0
      %v3489 = vsel %vm497, %v3447, 0
      %v3492 = vsel %vm497, %v3448, 0
      %v3495 = vsel %vm497, %v3449, 0
      %v3498 = vsel %vm497, %v3450, 0
      %v3501 = vsel %vm579, %v3451, 0
      %3503 = vmatprep.subr.bf16.mxu0 0
      %3504 = vmatpush1.bf16.msra.mxu0 %v3501
      %3505 = vmatprep.subr.bf16.mxu0 0
      %3506 = vmatpush1.bf16.msra.mxu0 0
      %3507 = vmatprep.subr.bf16.mxu0 0
      %3508 = vmatpush1.bf16.msra.mxu0 0
      %3509 = vmatprep.subr.bf16.mxu0 0
      %3510 = vmatpush1.bf16.msra.mxu0 0
      %3511 = vmatprep.subr.bf16.mxu0 0
      %3512 = vmatpush1.bf16.msra.mxu0 0
      %3513 = vmatprep.subr.bf16.mxu0 0
      %3514 = vmatpush1.bf16.msra.mxu0 0
      %3515 = vmatprep.subr.bf16.mxu0 0
      %3516 = vmatpush1.bf16.msra.mxu0 0
      %3517 = vmatprep.subr.bf16.mxu0 0
      %3518 = vmatpush1.bf16.msra.mxu0 0
      %3519 = vmatprep.subr.bf16.mxu0 0
      %3520 = vmatpush1.bf16.msra.mxu0 0
      %3521 = vmatprep.subr.bf16.mxu0 0
      %3522 = vmatpush1.bf16.msra.mxu0 0
      %3523 = vmatprep.subr.bf16.mxu0 0
      %3524 = vmatpush1.bf16.msra.mxu0 0
      %3525 = vmatprep.subr.bf16.mxu0 0
      %3526 = vmatpush1.bf16.msra.mxu0 0
      %3527 = vmatprep.subr.bf16.mxu0 0
      %3528 = vmatpush1.bf16.msra.mxu0 0
      %3529 = vmatprep.subr.bf16.mxu0 0
      %3530 = vmatpush1.bf16.msra.mxu0 0
      %3531 = vmatprep.subr.bf16.mxu0 0
      %3532 = vmatpush1.bf16.msra.mxu0 0
      %3533 = vmatprep.subr.bf16.mxu0 0
      %3534 = vmatpush1.bf16.msra.mxu0 0
      %3535 = vmatprep.mubr.bf16.mxu0 0
      %3536 = vmatmul.mubr.bf16.gmra.mrb[0].mxu0 %v3453
      %v3537 = vpop.f32.mrb[0].mxu0
      %v3538 = vadd.f32 0.0, %v3537
      %v3539 = vpop.f32.mrb[0].mxu0
      %v3540 = vpop.f32.mrb[0].mxu0
      %v3541 = vadd.f32 0.0, %v3540
      %v3542 = vpop.f32.mrb[0].mxu0
      %3543 = vmatprep.mubr.bf16.mxu0 0
      %3544 = vmatmul.mubr.bf16.gmra.mrb[0].mxu0 %v3456
      %v3545 = vpop.f32.mrb[0].mxu0
      %v3546 = vadd.f32 0.0, %v3545
      %v3547 = vpop.f32.mrb[0].mxu0
      %v3548 = vpop.f32.mrb[0].mxu0
      %v3549 = vadd.f32 0.0, %v3548
      %v3550 = vpop.f32.mrb[0].mxu0
      %3551 = vmatprep.mubr.bf16.mxu0 0
      %3552 = vmatmul.mubr.bf16.gmra.mrb[0].mxu0 %v3459
      %v3553 = vpop.f32.mrb[0].mxu0
      %v3554 = vadd.f32 0.0, %v3553
      %v3555 = vpop.f32.mrb[0].mxu0
      %v3556 = vpop.f32.mrb[0].mxu0
      %v3557 = vadd.f32 0.0, %v3556
      %v3558 = vpop.f32.mrb[0].mxu0
      %3559 = vmatprep.mubr.bf16.mxu0 0
      %3560 = vmatmul.mubr.bf16.gmra.mrb[0].mxu0 %v3462
      %v3561 = vpop.f32.mrb[0].mxu0
      %v3562 = vadd.f32 0.0, %v3561
      %v3563 = vpop.f32.mrb[0].mxu0
      %v3564 = vpop.f32.mrb[0].mxu0
      %v3565 = vadd.f32 0.0, %v3564
      %v3566 = vpop.f32.mrb[0].mxu0
      %3567 = vmatprep.mubr.bf16.mxu0 0
      %3568 = vmatmul.mubr.bf16.gmra.mrb[0].mxu0 %v3465
      %v3569 = vpop.f32.mrb[0].mxu0
      %v3570 = vadd.f32 0.0, %v3569
      %v3571 = vpop.f32.mrb[0].mxu0
      %v3572 = vpop.f32.mrb[0].mxu0
      %v3573 = vadd.f32 0.0, %v3572
      %v3574 = vpop.f32.mrb[0].mxu0
      %3575 = vmatprep.mubr.bf16.mxu0 0
      %3576 = vmatmul.mubr.bf16.gmra.mrb[0].mxu0 %v3468
      %v3577 = vpop.f32.mrb[0].mxu0
      %v3578 = vadd.f32 0.0, %v3577
      %v3579 = vpop.f32.mrb[0].mxu0
      %v3580 = vpop.f32.mrb[0].mxu0
      %v3581 = vadd.f32 0.0, %v3580
      %v3582 = vpop.f32.mrb[0].mxu0
      %3583 = vmatprep.mubr.bf16.mxu0 0
      %3584 = vmatmul.mubr.bf16.gmra.mrb[0].mxu0 %v3471
      %v3585 = vpop.f32.mrb[0].mxu0
      %v3586 = vadd.f32 0.0, %v3585
      %v3587 = vpop.f32.mrb[0].mxu0
      %v3588 = vpop.f32.mrb[0].mxu0
      %v3589 = vadd.f32 0.0, %v3588
      %v3590 = vpop.f32.mrb[0].mxu0
      %3591 = vmatprep.mubr.bf16.mxu0 0
      %3592 = vmatmul.mubr.bf16.gmra.mrb[0].mxu0 %v3474
      %v3593 = vpop.f32.mrb[0].mxu0
      %v3594 = vadd.f32 0.0, %v3593
      %v3595 = vpop.f32.mrb[0].mxu0
      %v3596 = vpop.f32.mrb[0].mxu0
      %v3597 = vadd.f32 0.0, %v3596
      %v3598 = vpop.f32.mrb[0].mxu0
      %3599 = vmatprep.mubr.bf16.mxu0 0
      %3600 = vmatmul.mubr.bf16.gmra.mrb[0].mxu0 %v3477
      %v3601 = vpop.f32.mrb[0].mxu0
      %v3602 = vadd.f32 0.0, %v3601
      %v3603 = vpop.f32.mrb[0].mxu0
      %v3604 = vpop.f32.mrb[0].mxu0
      %v3605 = vadd.f32 0.0, %v3604
      %v3606 = vpop.f32.mrb[0].mxu0
      %3607 = vmatprep.mubr.bf16.mxu0 0
      %3608 = vmatmul.mubr.bf16.gmra.mrb[0].mxu0 %v3480
      %v3609 = vpop.f32.mrb[0].mxu0
      %v3610 = vadd.f32 0.0, %v3609
      %v3611 = vpop.f32.mrb[0].mxu0
      %v3612 = vpop.f32.mrb[0].mxu0
      %v3613 = vadd.f32 0.0, %v3612
      %v3614 = vpop.f32.mrb[0].mxu0
      %3615 = vmatprep.mubr.bf16.mxu0 0
      %3616 = vmatmul.mubr.bf16.gmra.mrb[0].mxu0 %v3483
      %v3617 = vpop.f32.mrb[0].mxu0
      %v3618 = vadd.f32 0.0, %v3617
      %v3619 = vpop.f32.mrb[0].mxu0
      %v3620 = vpop.f32.mrb[0].mxu0
      %v3621 = vadd.f32 0.0, %v3620
      %v3622 = vpop.f32.mrb[0].mxu0
      %3623 = vmatprep.mubr.bf16.mxu0 0
      %3624 = vmatmul.mubr.bf16.gmra.mrb[0].mxu0 %v3486
      %v3625 = vpop.f32.mrb[0].mxu0
      %v3626 = vadd.f32 0.0, %v3625
      %v3627 = vpop.f32.mrb[0].mxu0
      %v3628 = vpop.f32.mrb[0].mxu0
      %v3629 = vadd.f32 0.0, %v3628
      %v3630 = vpop.f32.mrb[0].mxu0
      %3631 = vmatprep.mubr.bf16.mxu0 0
      %3632 = vmatmul.mubr.bf16.gmra.mrb[0].mxu0 %v3489
      %v3633 = vpop.f32.mrb[0].mxu0
      %v3634 = vadd.f32 0.0, %v3633
      %v3635 = vpop.f32.mrb[0].mxu0
      %v3636 = vpop.f32.mrb[0].mxu0
      %v3637 = vadd.f32 0.0, %v3636
      %v3638 = vpop.f32.mrb[0].mxu0
      %3639 = vmatprep.mubr.bf16.mxu0 0
      %3640 = vmatmul.mubr.bf16.gmra.mrb[0].mxu0 %v3492
      %v3641 = vpop.f32.mrb[0].mxu0
      %v3642 = vadd.f32 0.0, %v3641
      %v3643 = vpop.f32.mrb[0].mxu0
      %v3644 = vpop.f32.mrb[0].mxu0
      %v3645 = vadd.f32 0.0, %v3644
      %v3646 = vpop.f32.mrb[0].mxu0
      %3647 = vmatprep.mubr.bf16.mxu0 0
      %3648 = vmatmul.mubr.bf16.gmra.mrb[0].mxu0 %v3495
      %v3649 = vpop.f32.mrb[0].mxu0
      %v3650 = vadd.f32 0.0, %v3649
      %v3651 = vpop.f32.mrb[0].mxu0
      %v3652 = vpop.f32.mrb[0].mxu0
      %v3653 = vadd.f32 0.0, %v3652
      %v3654 = vpop.f32.mrb[0].mxu0
      %3655 = vmatprep.mubr.bf16.mxu0 0
      %3656 = vmatmul.mubr.bf16.gmra.mrb[0].mxu0 %v3498
      %v3657 = vpop.f32.mrb[0].mxu0
      %v3658 = vadd.f32 0.0, %v3657
      %v3659 = vpop.f32.mrb[0].mxu0
      %v3660 = vpop.f32.mrb[0].mxu0
      %v3661 = vadd.f32 0.0, %v3660
      %v3662 = vpop.f32.mrb[0].mxu0
      %3663 = vdwg.mxu0
      %v3664 = vld [vmem:[%s8] sm:$0x1]
      %v3666 = vlaneseq
      %v3667 = vshrl.u32 %v3666, 7
      %v3668 = vsub.s32 0, %v3667
      %v3669 = vrot.slane %v3664, %v3668
      %v3671 = vmul.f32 %v3538, %v3669
      %v3672 = vmul.f32 %v3541, %v3669
      %v3673 = vmul.f32 %v3546, %v3669
      %v3674 = vmul.f32 %v3549, %v3669
      %v3675 = vmul.f32 %v3554, %v3669
      %v3676 = vmul.f32 %v3557, %v3669
      %v3677 = vmul.f32 %v3562, %v3669
      %v3678 = vmul.f32 %v3565, %v3669
      %v3679 = vmul.f32 %v3570, %v3669
      %v3680 = vmul.f32 %v3573, %v3669
      %v3681 = vmul.f32 %v3578, %v3669
      %v3682 = vmul.f32 %v3581, %v3669
      %v3683 = vmul.f32 %v3586, %v3669
      %v3684 = vmul.f32 %v3589, %v3669
      %v3685 = vmul.f32 %v3594, %v3669
      %v3686 = vmul.f32 %v3597, %v3669
      %v3687 = vmul.f32 %v3602, %v3669
      %v3688 = vmul.f32 %v3605, %v3669
      %v3689 = vmul.f32 %v3610, %v3669
      %v3690 = vmul.f32 %v3613, %v3669
      %v3691 = vmul.f32 %v3618, %v3669
      %v3692 = vmul.f32 %v3621, %v3669
      %v3693 = vmul.f32 %v3626, %v3669
      %v3694 = vmul.f32 %v3629, %v3669
      %v3695 = vmul.f32 %v3634, %v3669
      %v3696 = vmul.f32 %v3637, %v3669
      %v3697 = vmul.f32 %v3642, %v3669
      %v3698 = vmul.f32 %v3645, %v3669
      %v3699 = vmul.f32 %v3650, %v3669
      %v3700 = vmul.f32 %v3653, %v3669
      %v3701 = vmul.f32 %v3658, %v3669
      %v3702 = vmul.f32 %v3661, %v3669
      %v3703 = vld [vmem:[%s9] sm:$0x1]
      %v3705 = vlaneseq
      %v3706 = vshrl.u32 %v3705, 7
      %v3707 = vsub.s32 0, %v3706
      %v3708 = vrot.slane %v3703, %v3707
      %v3710 = vadd.f32 %v3671, %v3708
      %v3711 = vadd.f32 %v3672, %v3708
      %v3712 = vadd.f32 %v3673, %v3708
      %v3713 = vadd.f32 %v3674, %v3708
      %v3714 = vadd.f32 %v3675, %v3708
      %v3715 = vadd.f32 %v3676, %v3708
      %v3716 = vadd.f32 %v3677, %v3708
      %v3717 = vadd.f32 %v3678, %v3708
      %v3718 = vadd.f32 %v3679, %v3708
      %v3719 = vadd.f32 %v3680, %v3708
      %v3720 = vadd.f32 %v3681, %v3708
      %v3721 = vadd.f32 %v3682, %v3708
      %v3722 = vadd.f32 %v3683, %v3708
      %v3723 = vadd.f32 %v3684, %v3708
      %v3724 = vadd.f32 %v3685, %v3708
      %v3725 = vadd.f32 %v3686, %v3708
      %v3726 = vadd.f32 %v3687, %v3708
      %v3727 = vadd.f32 %v3688, %v3708
      %v3728 = vadd.f32 %v3689, %v3708
      %v3729 = vadd.f32 %v3690, %v3708
      %v3730 = vadd.f32 %v3691, %v3708
      %v3731 = vadd.f32 %v3692, %v3708
      %v3732 = vadd.f32 %v3693, %v3708
      %v3733 = vadd.f32 %v3694, %v3708
      %v3734 = vadd.f32 %v3695, %v3708
      %v3735 = vadd.f32 %v3696, %v3708
      %v3736 = vadd.f32 %v3697, %v3708
      %v3737 = vadd.f32 %v3698, %v3708
      %v3738 = vadd.f32 %v3699, %v3708
      %v3739 = vadd.f32 %v3700, %v3708
      %v3740 = vadd.f32 %v3701, %v3708
      %v3741 = vadd.f32 %v3702, %v3708
      %v3790 = vrot.slane %v418, 1
      %v3791 = vrot.slane %v419, 1
      %v3792 = vsel %vm1149, %v3790, %v3791
      %v3793 = vrot.slane %v420, 1
      %v3794 = vsel %vm1149, %v3791, %v3793
      %v3795 = vrot.slane %v421, 1
      %v3796 = vrot.slane %v422, 1
      %v3797 = vsel %vm1149, %v3795, %v3796
      %v3798 = vrot.slane %v423, 1
      %v3799 = vsel %vm1149, %v3796, %v3798
      %v3800 = vrot.slane %v424, 1
      %v3801 = vrot.slane %v425, 1
      %v3802 = vsel %vm1149, %v3800, %v3801
      %v3803 = vrot.slane %v426, 1
      %v3804 = vsel %vm1149, %v3801, %v3803
      %v3805 = vrot.slane %v427, 1
      %v3806 = vrot.slane %v428, 1
      %v3807 = vsel %vm1149, %v3805, %v3806
      %v3808 = vrot.slane %v429, 1
      %v3809 = vsel %vm1149, %v3806, %v3808
      %v3810 = vrot.slane %v430, 1
      %v3811 = vrot.slane %v431, 1
      %v3812 = vsel %vm1149, %v3810, %v3811
      %v3813 = vrot.slane %v432, 1
      %v3814 = vsel %vm1149, %v3811, %v3813
      %v3815 = vrot.slane %v433, 1
      %v3816 = vrot.slane %v434, 1
      %v3817 = vsel %vm1149, %v3815, %v3816
      %v3818 = vrot.slane %v435, 1
      %v3819 = vsel %vm1149, %v3816, %v3818
      %v3820 = vrot.slane %v436, 1
      %v3821 = vrot.slane %v437, 1
      %v3822 = vsel %vm1149, %v3820, %v3821
      %v3823 = vrot.slane %v438, 1
      %v3824 = vsel %vm1149, %v3821, %v3823
      %v3825 = vrot.slane %v439, 1
      %v3826 = vrot.slane %v440, 1
      %v3827 = vsel %vm1149, %v3825, %v3826
      %v3828 = vrot.slane %v441, 1
      %v3829 = vsel %vm1149, %v3826, %v3828
      %v3830 = vrot.slane %v442, 1
      %v3831 = vrot.slane %v443, 1
      %v3832 = vsel %vm1149, %v3830, %v3831
      %v3833 = vrot.slane %v444, 1
      %v3834 = vsel %vm1149, %v3831, %v3833
      %v3835 = vrot.slane %v445, 1
      %v3836 = vrot.slane %v446, 1
      %v3837 = vsel %vm1149, %v3835, %v3836
      %v3838 = vrot.slane %v447, 1
      %v3839 = vsel %vm1149, %v3836, %v3838
      %v3840 = vrot.slane %v448, 1
      %v3841 = vrot.slane %v449, 1
      %v3842 = vsel %vm1149, %v3840, %v3841
      %v3843 = vrot.slane %v450, 1
      %v3844 = vsel %vm1149, %v3841, %v3843
      %v3845 = vrot.slane %v451, 1
      %v3846 = vrot.slane %v452, 1
      %v3847 = vsel %vm1149, %v3845, %v3846
      %v3848 = vrot.slane %v453, 1
      %v3849 = vsel %vm1149, %v3846, %v3848
      %v3850 = vrot.slane %v454, 1
      %v3851 = vrot.slane %v455, 1
      %v3852 = vsel %vm1149, %v3850, %v3851
      %v3853 = vrot.slane %v456, 1
      %v3854 = vsel %vm1149, %v3851, %v3853
      %v3855 = vrot.slane %v457, 1
      %v3856 = vrot.slane %v458, 1
      %v3857 = vsel %vm1149, %v3855, %v3856
      %v3858 = vrot.slane %v459, 1
      %v3859 = vsel %vm1149, %v3856, %v3858
      %v3860 = vrot.slane %v460, 1
      %v3861 = vrot.slane %v461, 1
      %v3862 = vsel %vm1149, %v3860, %v3861
      %v3863 = vrot.slane %v462, 1
      %v3864 = vsel %vm1149, %v3861, %v3863
      %v3865 = vrot.slane %v463, 1
      %v3866 = vrot.slane %v464, 1
      %v3867 = vsel %vm1149, %v3865, %v3866
      %v3868 = vrot.slane %v465, 1
      %v3869 = vsel %vm1149, %v3866, %v3868
      %v3902 = vadd.f32 %v3710, %v3792
      %v3903 = vadd.f32 %v3711, %v3794
      %v3904 = vadd.f32 %v3712, %v3797
      %v3905 = vadd.f32 %v3713, %v3799
      %v3906 = vadd.f32 %v3714, %v3802
      %v3907 = vadd.f32 %v3715, %v3804
      %v3908 = vadd.f32 %v3716, %v3807
      %v3909 = vadd.f32 %v3717, %v3809
      %v3910 = vadd.f32 %v3718, %v3812
      %v3911 = vadd.f32 %v3719, %v3814
      %v3912 = vadd.f32 %v3720, %v3817
      %v3913 = vadd.f32 %v3721, %v3819
      %v3914 = vadd.f32 %v3722, %v3822
      %v3915 = vadd.f32 %v3723, %v3824
      %v3916 = vadd.f32 %v3724, %v3827
      %v3917 = vadd.f32 %v3725, %v3829
      %v3918 = vadd.f32 %v3726, %v3832
      %v3919 = vadd.f32 %v3727, %v3834
      %v3920 = vadd.f32 %v3728, %v3837
      %v3921 = vadd.f32 %v3729, %v3839
      %v3922 = vadd.f32 %v3730, %v3842
      %v3923 = vadd.f32 %v3731, %v3844
      %v3924 = vadd.f32 %v3732, %v3847
      %v3925 = vadd.f32 %v3733, %v3849
      %v3926 = vadd.f32 %v3734, %v3852
      %v3927 = vadd.f32 %v3735, %v3854
      %v3928 = vadd.f32 %v3736, %v3857
      %v3929 = vadd.f32 %v3737, %v3859
      %v3930 = vadd.f32 %v3738, %v3862
      %v3931 = vadd.f32 %v3739, %v3864
      %v3932 = vadd.f32 %v3740, %v3867
      %v3933 = vadd.f32 %v3741, %v3869
      %v3934 = vmax.f32 %v3902, 0.0
      %v3935 = vmax.f32 %v3903, 0.0
      %v3936 = vmax.f32 %v3904, 0.0
      %v3937 = vmax.f32 %v3905, 0.0
      %v3938 = vmax.f32 %v3906, 0.0
      %v3939 = vmax.f32 %v3907, 0.0
      %v3940 = vmax.f32 %v3908, 0.0
      %v3941 = vmax.f32 %v3909, 0.0
      %v3942 = vmax.f32 %v3910, 0.0
      %v3943 = vmax.f32 %v3911, 0.0
      %v3944 = vmax.f32 %v3912, 0.0
      %v3945 = vmax.f32 %v3913, 0.0
      %v3946 = vmax.f32 %v3914, 0.0
      %v3947 = vmax.f32 %v3915, 0.0
      %v3948 = vmax.f32 %v3916, 0.0
      %v3949 = vmax.f32 %v3917, 0.0
      %v3950 = vmax.f32 %v3918, 0.0
      %v3951 = vmax.f32 %v3919, 0.0
      %v3952 = vmax.f32 %v3920, 0.0
      %v3953 = vmax.f32 %v3921, 0.0
      %v3954 = vmax.f32 %v3922, 0.0
      %v3955 = vmax.f32 %v3923, 0.0
      %v3956 = vmax.f32 %v3924, 0.0
      %v3957 = vmax.f32 %v3925, 0.0
      %v3958 = vmax.f32 %v3926, 0.0
      %v3959 = vmax.f32 %v3927, 0.0
      %v3960 = vmax.f32 %v3928, 0.0
      %v3961 = vmax.f32 %v3929, 0.0
      %v3962 = vmax.f32 %v3930, 0.0
      %v3963 = vmax.f32 %v3931, 0.0
      %v3964 = vmax.f32 %v3932, 0.0
      %v3965 = vmax.f32 %v3933, 0.0
      %3966 = vst.msk [vmem:[%s359] sm:$0xff] %vm497, %v3934
      %3967 = vst.msk [vmem:[%s359 + $0x8] sm:$0xff] %vm497, %v3935
      %3968 = vst.msk [vmem:[%s359 + $0x10] sm:$0xff] %vm497, %v3936
      %3969 = vst.msk [vmem:[%s359 + $0x18] sm:$0xff] %vm497, %v3937
      %3970 = vst.msk [vmem:[%s359 + $0x20] sm:$0xff] %vm497, %v3938
      %3971 = vst.msk [vmem:[%s359 + $0x28] sm:$0xff] %vm497, %v3939
      %3972 = vst.msk [vmem:[%s359 + $0x30] sm:$0xff] %vm497, %v3940
      %3973 = vst.msk [vmem:[%s359 + $0x38] sm:$0xff] %vm497, %v3941
      %3974 = vst.msk [vmem:[%s359 + $0x40] sm:$0xff] %vm497, %v3942
      %3975 = vst.msk [vmem:[%s359 + $0x48] sm:$0xff] %vm497, %v3943
      %3976 = vst.msk [vmem:[%s359 + $0x50] sm:$0xff] %vm497, %v3944
      %3977 = vst.msk [vmem:[%s359 + $0x58] sm:$0xff] %vm497, %v3945
      %3978 = vst.msk [vmem:[%s359 + $0x60] sm:$0xff] %vm497, %v3946
      %3979 = vst.msk [vmem:[%s359 + $0x68] sm:$0xff] %vm497, %v3947
      %3980 = vst.msk [vmem:[%s359 + $0x70] sm:$0xff] %vm497, %v3948
      %3981 = vst.msk [vmem:[%s359 + $0x78] sm:$0xff] %vm497, %v3949
      %3982 = vst.msk [vmem:[%s359 + $0x80] sm:$0xff] %vm497, %v3950
      %3983 = vst.msk [vmem:[%s359 + $0x88] sm:$0xff] %vm497, %v3951
      %3984 = vst.msk [vmem:[%s359 + $0x90] sm:$0xff] %vm497, %v3952
      %3985 = vst.msk [vmem:[%s359 + $0x98] sm:$0xff] %vm497, %v3953
      %3986 = vst.msk [vmem:[%s359 + $0xa0] sm:$0xff] %vm497, %v3954
      %3987 = vst.msk [vmem:[%s359 + $0xa8] sm:$0xff] %vm497, %v3955
      %3988 = vst.msk [vmem:[%s359 + $0xb0] sm:$0xff] %vm497, %v3956
      %3989 = vst.msk [vmem:[%s359 + $0xb8] sm:$0xff] %vm497, %v3957
      %3990 = vst.msk [vmem:[%s359 + $0xc0] sm:$0xff] %vm497, %v3958
      %3991 = vst.msk [vmem:[%s359 + $0xc8] sm:$0xff] %vm497, %v3959
      %3992 = vst.msk [vmem:[%s359 + $0xd0] sm:$0xff] %vm497, %v3960
      %3993 = vst.msk [vmem:[%s359 + $0xd8] sm:$0xff] %vm497, %v3961
      %3994 = vst.msk [vmem:[%s359 + $0xe0] sm:$0xff] %vm497, %v3962
      %3995 = vst.msk [vmem:[%s359 + $0xe8] sm:$0xff] %vm497, %v3963
      %3996 = vst.msk [vmem:[%s359 + $0xf0] sm:$0xff] %vm497, %v3964
      %3997 = vst.msk [vmem:[%s359 + $0xf8] sm:$0xff] %vm497, %v3965
      %p3998 = scmp.lt.s32.totalorder %s21, 1
      %s3999 = scalar_select %p3998, %s21, 1
      %s4000 = smul.addr %s3999, 32
      %s4001 = smul.addr %s4000, 8
      %s4002 = scalar_lea.vmem %s10, %s4001
      // Predicated region
      $region61: #{tpu_custom_call.1} parent=59 // pred_check
        %p4003 = pneg %p254
      $region62: #{tpu_custom_call.1} parent=59 // pred_check_branch
        %4005 = sbr.rel (%p4003) target = $region64
      $region63: #{tpu_custom_call.1} parent=59 // pred_region
        _
      $region64: #{tpu_custom_call.1} parent=59 // pred_fallthru
        _
    $region60: #{tpu_custom_call.1} parent=5 // pred_fallthru
      _
    %p4006 = scmp.le.s32.totalorder 2, %s16
    // Predicated region
    $region65: #{tpu_custom_call.1} parent=5 // pred_check
      %p4007 = pneg %p4006
    $region66: #{tpu_custom_call.1} parent=5 // pred_check_branch
      %4009 = sbr.rel (%p4007) target = $region68
    $region67: #{tpu_custom_call.1} parent=5 // pred_region
      %s4010 = ssub.s32 %s16, 2
      // Predicated region
      $region69: #{tpu_custom_call.1} parent=67 // pred_check
        %p4011 = pneg %p260
      $region70: #{tpu_custom_call.1} parent=67 // pred_check_branch
        %4013 = sbr.rel (%p4011) target = $region72
      $region71: #{tpu_custom_call.1} parent=67 // pred_region
        %p4014 = scmp.lt.s32.totalorder %s22, 1
        %s4015 = scalar_select %p4014, %s22, 1
        %s4016 = smul.addr %s4015, 32
        %s4017 = smul.addr %s4016, 8
        %s4018 = scalar_lea.vmem %s10, %s4017
      $region72: #{tpu_custom_call.1} parent=67 // pred_fallthru
        _
    $region68: #{tpu_custom_call.1} parent=5 // pred_fallthru
      _
  $region6: #{tpu_custom_call.1} parent=0 // loop_footer
    %s20 = sadd.s32 1, %s16
  $region7: #{tpu_custom_call.1} parent=0 // loop_footer_branch
    %15 = sbr.rel target = $region3
  $region8: #{tpu_custom_call.1} parent=0 // loop_exit
    _

</llo_original>
